<compile_context>
chip_gen: v7x
topology: tpu7x:2x2x1
jax: 0.10.0
libtpu: 0.0.40
codegen_flags: <defaults>
</compile_context>

<pallas_src>
import jax
import jax.numpy as jnp
from jax import lax
from jax.experimental import pallas as pl
from jax.experimental.pallas import tpu as pltpu

_LANES = 128  # TPU lane width; conv2 out-channels are padded up to this.


def _zero_halo(ref):
    """Zero only the 1-pixel border of a (P, Q, C) halo'd scratch.

    The interior is fully rewritten every grid step, so clearing the thin
    border strips is sufficient (and much cheaper than a full-scratch zero).
    """
    P, Q, C = ref.shape
    ref[0:1, :, :] = jnp.zeros((1, Q, C), ref.dtype)
    ref[P - 1:P, :, :] = jnp.zeros((1, Q, C), ref.dtype)
    ref[:, 0:1, :] = jnp.zeros((P, 1, C), ref.dtype)
    ref[:, Q - 1:Q, :] = jnp.zeros((P, 1, C), ref.dtype)


def _im2col_3x3(ref, H, W):
    """Fold the nine 3x3 taps of a halo'd (H+2, W+2, C) scratch into the
    contraction dimension: returns a (H*W, 9*C) matrix (tap-major columns)."""
    C = ref.shape[-1]
    parts = [ref[dy:dy + H, dx:dx + W, :] for dy in range(3) for dx in range(3)]
    return jnp.concatenate(parts, axis=-1).reshape(H * W, 9 * C)


def _regression_head_kernel(x_ref, w1_ref, b1_ref, w2_ref, b2_ref, o_ref,
                            xpad_ref, hpad_ref):
    # x_ref   : (1, H, W, Cin)   bf16 NHWC input tile (one batch element)
    # w1_ref  : (9*Cin, F)       bf16 conv1 weights, taps folded into K
    # b1_ref  : (1, F)           f32
    # w2_ref  : (9*F, Cpad)      bf16 conv2 weights, taps folded into K,
    #                            out-channels zero-padded to the lane width
    # b2_ref  : (1, Cpad)        f32
    # o_ref   : (1, H*W, Cpad)   f32 lane-dense output tile
    # xpad_ref: (H+2, W+2, Cin)  bf16 halo'd input scratch
    # hpad_ref: (H+2, W+2, F)    bf16 halo'd hidden-activation scratch
    H, W = x_ref.shape[1], x_ref.shape[2]

    _zero_halo(xpad_ref)
    _zero_halo(hpad_ref)

    # Stage the unpadded input into the halo'd scratch (padding handled here,
    # not via a jnp.pad materialization in the wrapper).
    xpad_ref[1:1 + H, 1:1 + W, :] = x_ref[0]

    # ---- conv1 + bias + ReLU: single MXU matmul, K = 9*Cin, f32 accumulate --
    cols1 = _im2col_3x3(xpad_ref, H, W)
    h = jnp.dot(cols1, w1_ref[...], preferred_element_type=jnp.float32)
    h = jnp.maximum(h + b1_ref[...], 0.0)

    # Hidden activations back to bf16, staged into the halo'd scratch so conv2
    # sees its pad=1 neighborhood.
    F = hpad_ref.shape[-1]
    hpad_ref[1:1 + H, 1:1 + W, :] = h.astype(jnp.bfloat16).reshape(H, W, F)

    # ---- conv2 + bias: single MXU matmul, K = 9*F, lane-dense output --------
    cols2 = _im2col_3x3(hpad_ref, H, W)
    out = jnp.dot(cols2, w2_ref[...], preferred_element_type=jnp.float32)
    o_ref[0] = out + b2_ref[...]


@jax.jit
def regression_model(x_nchw, w1, b1, w2, b2):
    """Forward pass of RegressionModel.

    x_nchw: (B, Cin, H, W) f32.  w1: (3,3,Cin,F) HWIO.  w2: (3,3,F,A*4) HWIO.
    Returns (B, H*W*A, 4) f32 — identical layout to the PyTorch module's
    permute(0,2,3,1).view(B, -1, 4).
    """
    B, Cin, H, W = x_nchw.shape
    F = w1.shape[3]
    Cout = w2.shape[3]
    assert Cout % 4 == 0 and Cout <= _LANES
    Cpad = _LANES

    # NCHW -> NHWC; bf16 operands for the MXU (accumulation stays f32).
    x = jnp.transpose(x_nchw, (0, 2, 3, 1)).astype(jnp.bfloat16)

    # Fold the 3x3 taps into the contraction dim; pad conv2's out-channels to a
    # full lane so the kernel's output stores are unmasked.
    w1_k = w1.astype(jnp.bfloat16).reshape(9 * Cin, F)
    w2_k = jnp.pad(w2.astype(jnp.bfloat16),
                   ((0, 0), (0, 0), (0, 0), (0, Cpad - Cout))).reshape(9 * F, Cpad)
    b1_k = b1.astype(jnp.float32).reshape(1, F)
    b2_k = jnp.pad(b2.astype(jnp.float32), (0, Cpad - Cout)).reshape(1, Cpad)

    out_flat = pl.pallas_call(
        _regression_head_kernel,
        out_shape=jax.ShapeDtypeStruct((B, H * W, Cpad), jnp.float32),
        grid_spec=pltpu.PrefetchScalarGridSpec(
            num_scalar_prefetch=0,
            grid=(B,),
            in_specs=[
                pl.BlockSpec((1, H, W, Cin), lambda b: (b, 0, 0, 0)),
                pl.BlockSpec((9 * Cin, F), lambda b: (0, 0)),
                pl.BlockSpec((1, F), lambda b: (0, 0)),
                pl.BlockSpec((9 * F, Cpad), lambda b: (0, 0)),
                pl.BlockSpec((1, Cpad), lambda b: (0, 0)),
            ],
            out_specs=pl.BlockSpec((1, H * W, Cpad), lambda b: (b, 0, 0)),
            scratch_shapes=[
                pltpu.VMEM((H + 2, W + 2, Cin), jnp.bfloat16),
                pltpu.VMEM((H + 2, W + 2, F), jnp.bfloat16),
            ],
        ),
        compiler_params=pltpu.CompilerParams(
            dimension_semantics=("parallel",)),
    )(x, w1_k, b1_k, w2_k, b2_k)

    # Drop the lane padding; NHWC reshape(B, -1, 4) == PyTorch permute + view.
    return out_flat[:, :, :Cout].reshape(B, H * W * (Cout // 4), 4)


def _reference(x_nchw, w1, b1, w2, b2):
    """Pure-JAX reference (lax.conv) with the same bf16-operand / f32-accumulate
    quantization as the kernel, mirroring the PyTorch forward."""
    x = jnp.transpose(x_nchw, (0, 2, 3, 1)).astype(jnp.bfloat16)
    dn1 = lax.conv_dimension_numbers(x.shape, w1.shape, ("NHWC", "HWIO", "NHWC"))
    h = lax.conv_general_dilated(x, w1.astype(jnp.bfloat16), (1, 1), "SAME",
                                 dimension_numbers=dn1,
                                 preferred_element_type=jnp.float32) + b1
    h = jnp.maximum(h, 0.0).astype(jnp.bfloat16)
    dn2 = lax.conv_dimension_numbers(h.shape, w2.shape, ("NHWC", "HWIO", "NHWC"))
    o = lax.conv_general_dilated(h, w2.astype(jnp.bfloat16), (1, 1), "SAME",
                                 dimension_numbers=dn2,
                                 preferred_element_type=jnp.float32) + b2
    B = x.shape[0]
    return o.reshape(B, -1, 4)


if __name__ == "__main__":
    # Small shapes consistent with the module: RegressionModel(num_features_in=4,
    # num_anchors=9, feature_size=32) applied to a (2, 4, 16, 16) feature map.
    B, Cin, H, W = 2, 4, 16, 16
    feature_size = 32
    num_anchors = 9
    Cout = num_anchors * 4

    key = jax.random.PRNGKey(0)
    kx, kw1, kb1, kw2, kb2 = jax.random.split(key, 5)

    x = jax.random.normal(kx, (B, Cin, H, W), jnp.float32)
    # Deterministic synthetic parameters (HWIO layout for the NHWC kernel).
    w1 = 0.1 * jax.random.normal(kw1, (3, 3, Cin, feature_size), jnp.float32)
    b1 = 0.1 * jax.random.normal(kb1, (feature_size,), jnp.float32)
    w2 = 0.1 * jax.random.normal(kw2, (3, 3, feature_size, Cout), jnp.float32)
    b2 = 0.1 * jax.random.normal(kb2, (Cout,), jnp.float32)

    out = jax.block_until_ready(regression_model(x, w1, b1, w2, b2))
    ref = jax.block_until_ready(_reference(x, w1, b1, w2, b2))

    assert out.shape == (B, H * W * num_anchors, 4), out.shape
    max_err = float(jnp.max(jnp.abs(out - ref)))
    assert max_err < 1e-2, max_err

    print("KERNEL_OK")
</pallas_src>

<mosaic_0001>
module attributes {stable_mosaic.version = 11 : i64} {
  func.func @_regression_head_kernel(%arg0: i32, %arg1: memref<1x16x16x4xbf16, #tpu.memory_space<vmem>>, %arg2: memref<36x32xbf16, #tpu.memory_space<vmem>>, %arg3: memref<1x32xf32, #tpu.memory_space<vmem>>, %arg4: memref<288x128xbf16, #tpu.memory_space<vmem>>, %arg5: memref<1x128xf32, #tpu.memory_space<vmem>>, %arg6: memref<1x256x128xf32, #tpu.memory_space<vmem>>, %arg7: memref<18x18x4xbf16, #tpu.memory_space<vmem>>, %arg8: memref<18x18x32xbf16, #tpu.memory_space<vmem>>) attributes {dimension_semantics = [#tpu.dimension_semantics<parallel>], iteration_bounds = array<i64: 2>, scalar_prefetch = 0 : i64, scratch_operands = 2 : i64, tpu.core_type = #tpu.core_type<tc>, window_params = [{transform_indices = @transform_0, window_bounds = array<i64: 1, 16, 16, 4>}, {pipeline_mode = #tpu.pipeline_mode<synchronous>, transform_indices = @transform_1, window_bounds = array<i64: 36, 32>}, {pipeline_mode = #tpu.pipeline_mode<synchronous>, transform_indices = @transform_2, window_bounds = array<i64: 1, 32>}, {pipeline_mode = #tpu.pipeline_mode<synchronous>, transform_indices = @transform_3, window_bounds = array<i64: 288, 128>}, {pipeline_mode = #tpu.pipeline_mode<synchronous>, transform_indices = @transform_4, window_bounds = array<i64: 1, 128>}, {transform_indices = @transform_5, window_bounds = array<i64: 1, 256, 128>}]} {
    %cst = arith.constant 0.000000e+00 : bf16
    %0 = vector.broadcast %cst : bf16 to vector<1x18x4xbf16>
    %c0 = arith.constant 0 : index
    %c0_0 = arith.constant 0 : index
    %c0_1 = arith.constant 0 : index
    %1 = vector.load %arg7[%c0, %c0_0, %c0_1] : memref<18x18x4xbf16, #tpu.memory_space<vmem>>, vector<1x18x4xbf16>
    tpu.vector_store %arg7[%c0, %c0_0, %c0_1], %0 {strides = array<i32>} : memref<18x18x4xbf16, #tpu.memory_space<vmem>>, vector<1x18x4xbf16>,
    %cst_2 = arith.constant 0.000000e+00 : bf16
    %2 = vector.broadcast %cst_2 : bf16 to vector<1x18x4xbf16>
    %c17 = arith.constant 17 : index
    %c0_3 = arith.constant 0 : index
    %c0_4 = arith.constant 0 : index
    %3 = vector.load %arg7[%c17, %c0_3, %c0_4] : memref<18x18x4xbf16, #tpu.memory_space<vmem>>, vector<1x18x4xbf16>
    tpu.vector_store %arg7[%c17, %c0_3, %c0_4], %2 {strides = array<i32>} : memref<18x18x4xbf16, #tpu.memory_space<vmem>>, vector<1x18x4xbf16>,
    %cst_5 = arith.constant 0.000000e+00 : bf16
    %4 = vector.broadcast %cst_5 : bf16 to vector<18x1x4xbf16>
    %c0_6 = arith.constant 0 : index
    %c0_7 = arith.constant 0 : index
    %c0_8 = arith.constant 0 : index
    %5 = vector.load %arg7[%c0_6, %c0_7, %c0_8] : memref<18x18x4xbf16, #tpu.memory_space<vmem>>, vector<18x1x4xbf16>
    tpu.vector_store %arg7[%c0_6, %c0_7, %c0_8], %4 {strides = array<i32>} : memref<18x18x4xbf16, #tpu.memory_space<vmem>>, vector<18x1x4xbf16>,
    %cst_9 = arith.constant 0.000000e+00 : bf16
    %6 = vector.broadcast %cst_9 : bf16 to vector<18x1x4xbf16>
    %c0_10 = arith.constant 0 : index
    %c17_11 = arith.constant 17 : index
    %c0_12 = arith.constant 0 : index
    %7 = vector.load %arg7[%c0_10, %c17_11, %c0_12] : memref<18x18x4xbf16, #tpu.memory_space<vmem>>, vector<18x1x4xbf16>
    tpu.vector_store %arg7[%c0_10, %c17_11, %c0_12], %6 {strides = array<i32>} : memref<18x18x4xbf16, #tpu.memory_space<vmem>>, vector<18x1x4xbf16>,
    %cst_13 = arith.constant 0.000000e+00 : bf16
    %8 = vector.broadcast %cst_13 : bf16 to vector<1x18x32xbf16>
    %c0_14 = arith.constant 0 : index
    %c0_15 = arith.constant 0 : index
    %c0_16 = arith.constant 0 : index
    %9 = vector.load %arg8[%c0_14, %c0_15, %c0_16] : memref<18x18x32xbf16, #tpu.memory_space<vmem>>, vector<1x18x32xbf16>
    tpu.vector_store %arg8[%c0_14, %c0_15, %c0_16], %8 {strides = array<i32>} : memref<18x18x32xbf16, #tpu.memory_space<vmem>>, vector<1x18x32xbf16>,
    %cst_17 = arith.constant 0.000000e+00 : bf16
    %10 = vector.broadcast %cst_17 : bf16 to vector<1x18x32xbf16>
    %c17_18 = arith.constant 17 : index
    %c0_19 = arith.constant 0 : index
    %c0_20 = arith.constant 0 : index
    %11 = vector.load %arg8[%c17_18, %c0_19, %c0_20] : memref<18x18x32xbf16, #tpu.memory_space<vmem>>, vector<1x18x32xbf16>
    tpu.vector_store %arg8[%c17_18, %c0_19, %c0_20], %10 {strides = array<i32>} : memref<18x18x32xbf16, #tpu.memory_space<vmem>>, vector<1x18x32xbf16>,
    %cst_21 = arith.constant 0.000000e+00 : bf16
    %12 = vector.broadcast %cst_21 : bf16 to vector<18x1x32xbf16>
    %c0_22 = arith.constant 0 : index
    %c0_23 = arith.constant 0 : index
    %c0_24 = arith.constant 0 : index
    %13 = vector.load %arg8[%c0_22, %c0_23, %c0_24] : memref<18x18x32xbf16, #tpu.memory_space<vmem>>, vector<18x1x32xbf16>
    tpu.vector_store %arg8[%c0_22, %c0_23, %c0_24], %12 {strides = array<i32>} : memref<18x18x32xbf16, #tpu.memory_space<vmem>>, vector<18x1x32xbf16>,
    %cst_25 = arith.constant 0.000000e+00 : bf16
    %14 = vector.broadcast %cst_25 : bf16 to vector<18x1x32xbf16>
    %c0_26 = arith.constant 0 : index
    %c17_27 = arith.constant 17 : index
    %c0_28 = arith.constant 0 : index
    %15 = vector.load %arg8[%c0_26, %c17_27, %c0_28] : memref<18x18x32xbf16, #tpu.memory_space<vmem>>, vector<18x1x32xbf16>
    tpu.vector_store %arg8[%c0_26, %c17_27, %c0_28], %14 {strides = array<i32>} : memref<18x18x32xbf16, #tpu.memory_space<vmem>>, vector<18x1x32xbf16>,
    %c0_29 = arith.constant 0 : index
    %c0_30 = arith.constant 0 : index
    %c0_31 = arith.constant 0 : index
    %c0_32 = arith.constant 0 : index
    %16 = vector.load %arg1[%c0_29, %c0_30, %c0_31, %c0_32] : memref<1x16x16x4xbf16, #tpu.memory_space<vmem>>, vector<1x16x16x4xbf16>
    %17 = vector.shape_cast %16 : vector<1x16x16x4xbf16> to vector<16x16x4xbf16>
    %c1 = arith.constant 1 : index
    %c1_33 = arith.constant 1 : index
    %c0_34 = arith.constant 0 : index
    %18 = vector.load %arg7[%c1, %c1_33, %c0_34] : memref<18x18x4xbf16, #tpu.memory_space<vmem>>, vector<16x16x4xbf16>
    tpu.vector_store %arg7[%c1, %c1_33, %c0_34], %17 {strides = array<i32>} : memref<18x18x4xbf16, #tpu.memory_space<vmem>>, vector<16x16x4xbf16>,
    %c0_35 = arith.constant 0 : index
    %c0_36 = arith.constant 0 : index
    %c0_37 = arith.constant 0 : index
    %19 = vector.load %arg7[%c0_35, %c0_36, %c0_37] : memref<18x18x4xbf16, #tpu.memory_space<vmem>>, vector<16x16x4xbf16>
    %c0_38 = arith.constant 0 : index
    %c1_39 = arith.constant 1 : index
    %c0_40 = arith.constant 0 : index
    %20 = vector.load %arg7[%c0_38, %c1_39, %c0_40] : memref<18x18x4xbf16, #tpu.memory_space<vmem>>, vector<16x16x4xbf16>
    %c0_41 = arith.constant 0 : index
    %c2 = arith.constant 2 : index
    %c0_42 = arith.constant 0 : index
    %21 = vector.load %arg7[%c0_41, %c2, %c0_42] : memref<18x18x4xbf16, #tpu.memory_space<vmem>>, vector<16x16x4xbf16>
    %c1_43 = arith.constant 1 : index
    %c0_44 = arith.constant 0 : index
    %c0_45 = arith.constant 0 : index
    %22 = vector.load %arg7[%c1_43, %c0_44, %c0_45] : memref<18x18x4xbf16, #tpu.memory_space<vmem>>, vector<16x16x4xbf16>
    %c1_46 = arith.constant 1 : index
    %c1_47 = arith.constant 1 : index
    %c0_48 = arith.constant 0 : index
    %23 = vector.load %arg7[%c1_46, %c1_47, %c0_48] : memref<18x18x4xbf16, #tpu.memory_space<vmem>>, vector<16x16x4xbf16>
    %c1_49 = arith.constant 1 : index
    %c2_50 = arith.constant 2 : index
    %c0_51 = arith.constant 0 : index
    %24 = vector.load %arg7[%c1_49, %c2_50, %c0_51] : memref<18x18x4xbf16, #tpu.memory_space<vmem>>, vector<16x16x4xbf16>
    %c2_52 = arith.constant 2 : index
    %c0_53 = arith.constant 0 : index
    %c0_54 = arith.constant 0 : index
    %25 = vector.load %arg7[%c2_52, %c0_53, %c0_54] : memref<18x18x4xbf16, #tpu.memory_space<vmem>>, vector<16x16x4xbf16>
    %c2_55 = arith.constant 2 : index
    %c1_56 = arith.constant 1 : index
    %c0_57 = arith.constant 0 : index
    %26 = vector.load %arg7[%c2_55, %c1_56, %c0_57] : memref<18x18x4xbf16, #tpu.memory_space<vmem>>, vector<16x16x4xbf16>
    %c2_58 = arith.constant 2 : index
    %c2_59 = arith.constant 2 : index
    %c0_60 = arith.constant 0 : index
    %27 = vector.load %arg7[%c2_58, %c2_59, %c0_60] : memref<18x18x4xbf16, #tpu.memory_space<vmem>>, vector<16x16x4xbf16>
    %28 = tpu.concatenate %19, %20, %21, %22, %23, %24, %25, %26, %27 in 2 : vector<16x16x4xbf16>, vector<16x16x4xbf16>, vector<16x16x4xbf16>, vector<16x16x4xbf16>, vector<16x16x4xbf16>, vector<16x16x4xbf16>, vector<16x16x4xbf16>, vector<16x16x4xbf16>, vector<16x16x4xbf16> -> vector<16x16x36xbf16>
    %29 = vector.shape_cast %28 : vector<16x16x36xbf16> to vector<256x36xbf16>
    %c0_61 = arith.constant 0 : index
    %c0_62 = arith.constant 0 : index
    %30 = vector.load %arg2[%c0_61, %c0_62] : memref<36x32xbf16, #tpu.memory_space<vmem>>, vector<36x32xbf16>
    %cst_63 = arith.constant dense<0.000000e+00> : vector<256x32xf32>
    %31 = tpu.matmul %29, %30, %cst_63 {dimension_numbers = #tpu.dot_dimension_numbers<[1], [0], [0], [1], [0, 0, 1, 1], [], []>} : vector<256x36xbf16>, vector<36x32xbf16>, vector<256x32xf32> -> vector<256x32xf32>
    %c0_64 = arith.constant 0 : index
    %c0_65 = arith.constant 0 : index
    %32 = vector.load %arg3[%c0_64, %c0_65] : memref<1x32xf32, #tpu.memory_space<vmem>>, vector<1x32xf32>
    %33 = vector.broadcast %32 : vector<1x32xf32> to vector<256x32xf32>
    %34 = arith.addf %31, %33 : vector<256x32xf32>
    %cst_66 = arith.constant 0.000000e+00 : f32
    %35 = vector.broadcast %cst_66 : f32 to vector<256x32xf32>
    %36 = arith.maximumf %34, %35 : vector<256x32xf32>
    %37 = arith.truncf %36 : vector<256x32xf32> to vector<256x32xbf16>
    %38 = vector.shape_cast %37 : vector<256x32xbf16> to vector<16x16x32xbf16>
    %c1_67 = arith.constant 1 : index
    %c1_68 = arith.constant 1 : index
    %c0_69 = arith.constant 0 : index
    %39 = vector.load %arg8[%c1_67, %c1_68, %c0_69] : memref<18x18x32xbf16, #tpu.memory_space<vmem>>, vector<16x16x32xbf16>
    tpu.vector_store %arg8[%c1_67, %c1_68, %c0_69], %38 {strides = array<i32>} : memref<18x18x32xbf16, #tpu.memory_space<vmem>>, vector<16x16x32xbf16>,
    %c0_70 = arith.constant 0 : index
    %c0_71 = arith.constant 0 : index
    %c0_72 = arith.constant 0 : index
    %40 = vector.load %arg8[%c0_70, %c0_71, %c0_72] : memref<18x18x32xbf16, #tpu.memory_space<vmem>>, vector<16x16x32xbf16>
    %c0_73 = arith.constant 0 : index
    %c1_74 = arith.constant 1 : index
    %c0_75 = arith.constant 0 : index
    %41 = vector.load %arg8[%c0_73, %c1_74, %c0_75] : memref<18x18x32xbf16, #tpu.memory_space<vmem>>, vector<16x16x32xbf16>
    %c0_76 = arith.constant 0 : index
    %c2_77 = arith.constant 2 : index
    %c0_78 = arith.constant 0 : index
    %42 = vector.load %arg8[%c0_76, %c2_77, %c0_78] : memref<18x18x32xbf16, #tpu.memory_space<vmem>>, vector<16x16x32xbf16>
    %c1_79 = arith.constant 1 : index
    %c0_80 = arith.constant 0 : index
    %c0_81 = arith.constant 0 : index
    %43 = vector.load %arg8[%c1_79, %c0_80, %c0_81] : memref<18x18x32xbf16, #tpu.memory_space<vmem>>, vector<16x16x32xbf16>
    %c1_82 = arith.constant 1 : index
    %c1_83 = arith.constant 1 : index
    %c0_84 = arith.constant 0 : index
    %44 = vector.load %arg8[%c1_82, %c1_83, %c0_84] : memref<18x18x32xbf16, #tpu.memory_space<vmem>>, vector<16x16x32xbf16>
    %c1_85 = arith.constant 1 : index
    %c2_86 = arith.constant 2 : index
    %c0_87 = arith.constant 0 : index
    %45 = vector.load %arg8[%c1_85, %c2_86, %c0_87] : memref<18x18x32xbf16, #tpu.memory_space<vmem>>, vector<16x16x32xbf16>
    %c2_88 = arith.constant 2 : index
    %c0_89 = arith.constant 0 : index
    %c0_90 = arith.constant 0 : index
    %46 = vector.load %arg8[%c2_88, %c0_89, %c0_90] : memref<18x18x32xbf16, #tpu.memory_space<vmem>>, vector<16x16x32xbf16>
    %c2_91 = arith.constant 2 : index
    %c1_92 = arith.constant 1 : index
    %c0_93 = arith.constant 0 : index
    %47 = vector.load %arg8[%c2_91, %c1_92, %c0_93] : memref<18x18x32xbf16, #tpu.memory_space<vmem>>, vector<16x16x32xbf16>
    %c2_94 = arith.constant 2 : index
    %c2_95 = arith.constant 2 : index
    %c0_96 = arith.constant 0 : index
    %48 = vector.load %arg8[%c2_94, %c2_95, %c0_96] : memref<18x18x32xbf16, #tpu.memory_space<vmem>>, vector<16x16x32xbf16>
    %49 = tpu.concatenate %40, %41, %42, %43, %44, %45, %46, %47, %48 in 2 : vector<16x16x32xbf16>, vector<16x16x32xbf16>, vector<16x16x32xbf16>, vector<16x16x32xbf16>, vector<16x16x32xbf16>, vector<16x16x32xbf16>, vector<16x16x32xbf16>, vector<16x16x32xbf16>, vector<16x16x32xbf16> -> vector<16x16x288xbf16>
    %50 = vector.shape_cast %49 : vector<16x16x288xbf16> to vector<256x288xbf16>
    %c0_97 = arith.constant 0 : index
    %c0_98 = arith.constant 0 : index
    %51 = vector.load %arg4[%c0_97, %c0_98] : memref<288x128xbf16, #tpu.memory_space<vmem>>, vector<288x128xbf16>
    %cst_99 = arith.constant dense<0.000000e+00> : vector<256x128xf32>
    %52 = tpu.matmul %50, %51, %cst_99 {dimension_numbers = #tpu.dot_dimension_numbers<[1], [0], [0], [1], [0, 0, 1, 1], [], []>} : vector<256x288xbf16>, vector<288x128xbf16>, vector<256x128xf32> -> vector<256x128xf32>
    %c0_100 = arith.constant 0 : index
    %c0_101 = arith.constant 0 : index
    %53 = vector.load %arg5[%c0_100, %c0_101] : memref<1x128xf32, #tpu.memory_space<vmem>>, vector<1x128xf32>
    %54 = vector.broadcast %53 : vector<1x128xf32> to vector<256x128xf32>
    %55 = arith.addf %52, %54 : vector<256x128xf32>
    %c0_102 = arith.constant 0 : index
    %c0_103 = arith.constant 0 : index
    %c0_104 = arith.constant 0 : index
    %56 = vector.load %arg6[%c0_102, %c0_103, %c0_104] : memref<1x256x128xf32, #tpu.memory_space<vmem>>, vector<1x256x128xf32>
    %57 = vector.shape_cast %56 : vector<1x256x128xf32> to vector<256x128xf32>
    %58 = vector.shape_cast %55 : vector<256x128xf32> to vector<1x256x128xf32>
    tpu.vector_store %arg6[%c0_102, %c0_103, %c0_104], %58 {strides = array<i32>} : memref<1x256x128xf32, #tpu.memory_space<vmem>>, vector<1x256x128xf32>,
    return
  }
  func.func @transform_0(%arg0: i32) -> (i32, i32, i32, i32) {
    %c0_i32 = arith.constant 0 : i32
    %c0_i32_0 = arith.constant 0 : i32
    %c0_i32_1 = arith.constant 0 : i32
    %c0_i32_2 = arith.constant 0 : i32
    return %arg0, %c0_i32, %c0_i32_0, %c0_i32_1 : i32, i32, i32, i32
  }
  func.func @transform_1(%arg0: i32) -> (i32, i32) {
    %c0_i32 = arith.constant 0 : i32
    %c0_i32_0 = arith.constant 0 : i32
    %c0_i32_1 = arith.constant 0 : i32
    return %c0_i32, %c0_i32_0 : i32, i32
  }
  func.func @transform_2(%arg0: i32) -> (i32, i32) {
    %c0_i32 = arith.constant 0 : i32
    %c0_i32_0 = arith.constant 0 : i32
    %c0_i32_1 = arith.constant 0 : i32
    return %c0_i32, %c0_i32_0 : i32, i32
  }
  func.func @transform_3(%arg0: i32) -> (i32, i32) {
    %c0_i32 = arith.constant 0 : i32
    %c0_i32_0 = arith.constant 0 : i32
    %c0_i32_1 = arith.constant 0 : i32
    return %c0_i32, %c0_i32_0 : i32, i32
  }
  func.func @transform_4(%arg0: i32) -> (i32, i32) {
    %c0_i32 = arith.constant 0 : i32
    %c0_i32_0 = arith.constant 0 : i32
    %c0_i32_1 = arith.constant 0 : i32
    return %c0_i32, %c0_i32_0 : i32, i32
  }
  func.func @transform_5(%arg0: i32) -> (i32, i32, i32) {
    %c0_i32 = arith.constant 0 : i32
    %c0_i32_0 = arith.constant 0 : i32
    %c0_i32_1 = arith.constant 0 : i32
    return %arg0, %c0_i32, %c0_i32_0 : i32, i32, i32
  }
}

</mosaic_0001>

<llo_original>
// kernel: regression_model.1
$region0: #{regression_model.1}
  #allocation0 [shape = 'u32[]', space=smem, size = 0x4, offset = 0x4, fixed_abs, tag = 'smem constant byte address 0x4 - core index']
  #allocation1 [shape = 'u32[144,128]{1,0:T(1,128)}', space=vmem, size = 0x12000, scoped, tag = 'internal scratch']
  #allocation2 [shape = 'bf16[18,18,4]{2,1,0:T(8,128)(2,1)}', space=vmem, size = 0x1b000, scoped, tag = 'scratch operand']
  #allocation3 [shape = 'bf16[18,18,32]{2,1,0:T(8,128)(2,1)}', space=vmem, size = 0x1b000, scoped, tag = 'scratch operand']
  %s0 = inlined_call_operand.vmem [shape: bf16[2,16,16,4], index: 0, kind: input, shape index: {}]
  %s1 = inlined_call_operand.vmem [shape: bf16[36,32], index: 1, kind: input, shape index: {}]
  %s2 = inlined_call_operand.hbm [shape: f32[1,32], index: 2, kind: input, shape index: {}]
  %s3 = inlined_call_operand.vmem [shape: bf16[288,128], index: 3, kind: input, shape index: {}]
  %s4 = inlined_call_operand.vmem [shape: f32[1,128], index: 4, kind: input, shape index: {}]
  %s5 = inlined_call_operand.vmem [shape: f32[2,256,128], index: 5, kind: output, shape index: {}]
  %s6 = sld [smem:[#allocation0]]
  $region57: #{regression_model.1} parent=0
    _
  %s8 = ssub.s32 1, %s6
  %s9 = scalar_select 0, %s8, %s6
  $region1: #{regression_model.1} parent=0
    #allocation4 [shape = 'u8[512]{0}', space=vmem, size = 0x400, scoped, tag = 'input window, operand 2, single buffered']
    #allocation5 [shape = 's32[2]{0}', space=sflag, size = 0x8, scoped, tag = 'scoped memory for regression_model.1']
    %10 = vsyncpa [#allocation5], 0
    loop: start=0, step=1, limit=4
    $region2: #{regression_model.1} parent=1 // loop_pre_header
      _
    $region3: #{regression_model.1} parent=1 // loop_header
      %s12 = sphi 0, %s16
      %p13 = scmp.ge.s32.totalorder %s12, 4
      %s22 = sphi 0, %s24
      %s25 = sphi 0, %s22
      %s26 = sphi 0, %s25
      %s42 = sphi 0, %s26
      %s46 = sphi 0, %s46
      %s48 = sphi 0, %s46
      %s49 = sphi 0, %s48
      %s63 = sphi 0, %s49
      %s67 = sphi 0, %s67
      %s69 = sphi 0, %s67
      %s70 = sphi 0, %s69
      %s84 = sphi 0, %s70
      %s88 = sphi 0, %s88
      %s90 = sphi 0, %s88
      %s91 = sphi 0, %s90
      %s105 = sphi 0, %s91
      %s109 = sphi 0, %s109
      %s111 = sphi 0, %s109
      %s112 = sphi 0, %s111
      %s126 = sphi 0, %s112
      %s132 = sphi 0, %s134
      %s135 = sphi 0, %s132
      %s136 = sphi 0, %s135
      %s152 = sphi 0, %s136
    $region4: #{regression_model.1} parent=1 // loop_header_branch
      %15 = sbr.rel (%p13) target = $region8
    $region5: #{regression_model.1} parent=1 // loop_body
      %s17 = ssub.s32 %s12, 1
      %s18 = ssub.s32 %s12, 2
      %s19 = sadd.s32 %s12, 1
      %s20 = ssub.s32 %s12, %s19
      %p21 = scmp.eq.s32.totalorder %s20, 0
      %s23 = sadd.s32 %s22, 1
      %s24 = scalar_select %p21, %s22, %s23
      %p27 = pneg %p21
      %p28 = scmp.eq.s32.totalorder %s12, 1
      %p29 = por %p27, %p28
      %p30 = scmp.ne.s32.totalorder %s22, %s25
      %p31 = scmp.eq.s32.totalorder %s12, 0
      %p32 = por %p30, %p31
      %p33 = scmp.ne.s32.totalorder %s22, %s25
      %p34 = scmp.eq.s32.totalorder %s17, 1
      %p35 = por %p33, %p34
      %p36 = scmp.ne.s32.totalorder %s25, %s26
      %p37 = scmp.eq.s32.totalorder %s17, 0
      %p38 = por %p36, %p37
      %p39 = scmp.ne.s32.totalorder %s25, %s26
      %p40 = scmp.eq.s32.totalorder %s18, 1
      %p41 = por %p39, %p40
      %p43 = scmp.ne.s32.totalorder %s26, %s42
      %p44 = scmp.eq.s32.totalorder %s18, 0
      %p45 = por %p43, %p44
      %s47 = sadd.s32 %s46, 1
      %p50 = scmp.eq.s32.totalorder %s12, 1
      %p51 = scmp.ne.s32.totalorder %s46, %s48
      %p52 = scmp.eq.s32.totalorder %s12, 0
      %p53 = por %p51, %p52
      %p54 = scmp.ne.s32.totalorder %s46, %s48
      %p55 = scmp.eq.s32.totalorder %s17, 1
      %p56 = por %p54, %p55
      %p57 = scmp.ne.s32.totalorder %s48, %s49
      %p58 = scmp.eq.s32.totalorder %s17, 0
      %p59 = por %p57, %p58
      %p60 = scmp.ne.s32.totalorder %s48, %s49
      %p61 = scmp.eq.s32.totalorder %s18, 1
      %p62 = por %p60, %p61
      %p64 = scmp.ne.s32.totalorder %s49, %s63
      %p65 = scmp.eq.s32.totalorder %s18, 0
      %p66 = por %p64, %p65
      %s68 = sadd.s32 %s67, 1
      %p71 = scmp.eq.s32.totalorder %s12, 1
      %p72 = scmp.ne.s32.totalorder %s67, %s69
      %p73 = scmp.eq.s32.totalorder %s12, 0
      %p74 = por %p72, %p73
      %p75 = scmp.ne.s32.totalorder %s67, %s69
      %p76 = scmp.eq.s32.totalorder %s17, 1
      %p77 = por %p75, %p76
      %p78 = scmp.ne.s32.totalorder %s69, %s70
      %p79 = scmp.eq.s32.totalorder %s17, 0
      %p80 = por %p78, %p79
      %p81 = scmp.ne.s32.totalorder %s69, %s70
      %p82 = scmp.eq.s32.totalorder %s18, 1
      %p83 = por %p81, %p82
      %p85 = scmp.ne.s32.totalorder %s70, %s84
      %p86 = scmp.eq.s32.totalorder %s18, 0
      %p87 = por %p85, %p86
      %s89 = sadd.s32 %s88, 1
      %p92 = scmp.eq.s32.totalorder %s12, 1
      %p93 = scmp.ne.s32.totalorder %s88, %s90
      %p94 = scmp.eq.s32.totalorder %s12, 0
      %p95 = por %p93, %p94
      %p96 = scmp.ne.s32.totalorder %s88, %s90
      %p97 = scmp.eq.s32.totalorder %s17, 1
      %p98 = por %p96, %p97
      %p99 = scmp.ne.s32.totalorder %s90, %s91
      %p100 = scmp.eq.s32.totalorder %s17, 0
      %p101 = por %p99, %p100
      %p102 = scmp.ne.s32.totalorder %s90, %s91
      %p103 = scmp.eq.s32.totalorder %s18, 1
      %p104 = por %p102, %p103
      %p106 = scmp.ne.s32.totalorder %s91, %s105
      %p107 = scmp.eq.s32.totalorder %s18, 0
      %p108 = por %p106, %p107
      %s110 = sadd.s32 %s109, 1
      %p113 = scmp.eq.s32.totalorder %s12, 1
      %p114 = scmp.ne.s32.totalorder %s109, %s111
      %p115 = scmp.eq.s32.totalorder %s12, 0
      %p116 = por %p114, %p115
      %p117 = scmp.ne.s32.totalorder %s109, %s111
      %p118 = scmp.eq.s32.totalorder %s17, 1
      %p119 = por %p117, %p118
      %p120 = scmp.ne.s32.totalorder %s111, %s112
      %p121 = scmp.eq.s32.totalorder %s17, 0
      %p122 = por %p120, %p121
      %p123 = scmp.ne.s32.totalorder %s111, %s112
      %p124 = scmp.eq.s32.totalorder %s18, 1
      %p125 = por %p123, %p124
      %p127 = scmp.ne.s32.totalorder %s112, %s126
      %p128 = scmp.eq.s32.totalorder %s18, 0
      %p129 = por %p127, %p128
      %s130 = ssub.s32 %s12, %s19
      %p131 = scmp.eq.s32.totalorder %s130, 0
      %s133 = sadd.s32 %s132, 1
      %s134 = scalar_select %p131, %s132, %s133
      %p137 = pneg %p131
      %p138 = scmp.eq.s32.totalorder %s12, 1
      %p139 = por %p137, %p138
      %p140 = scmp.ne.s32.totalorder %s132, %s135
      %p141 = scmp.eq.s32.totalorder %s12, 0
      %p142 = por %p140, %p141
      %p143 = scmp.ne.s32.totalorder %s132, %s135
      %p144 = scmp.eq.s32.totalorder %s17, 1
      %p145 = por %p143, %p144
      %p146 = scmp.ne.s32.totalorder %s135, %s136
      %p147 = scmp.eq.s32.totalorder %s17, 0
      %p148 = por %p146, %p147
      %p149 = scmp.ne.s32.totalorder %s135, %s136
      %p150 = scmp.eq.s32.totalorder %s18, 1
      %p151 = por %p149, %p150
      %p153 = scmp.ne.s32.totalorder %s136, %s152
      %p154 = scmp.eq.s32.totalorder %s18, 0
      %p155 = por %p153, %p154
      %p156 = scmp.le.s32.totalorder 1, %s12
      %p157 = scmp.lt.s32.totalorder %s12, 3
      %p158 = pnand %p156, %p157
      %p159 = pneg %p158
      // Predicated region
      $region9: #{regression_model.1} parent=5 // pred_check
        _
      $region10: #{regression_model.1} parent=5 // pred_check_branch
        %161 = sbr.rel (%p158) target = $region12
      $region11: #{regression_model.1} parent=5 // pred_region
        %s162 = ssub.s32 %s12, 1
        // Predicated region
        $region13: #{regression_model.1} parent=11 // pred_check
          %p163 = pneg %p59
        $region14: #{regression_model.1} parent=11 // pred_check_branch
          %165 = sbr.rel (%p163) target = $region16
        $region15: #{regression_model.1} parent=11 // pred_region
          _
        $region16: #{regression_model.1} parent=11 // pred_fallthru
          _
        // Predicated region
        $region17: #{regression_model.1} parent=11 // pred_check
          %p166 = pneg %p80
        $region18: #{regression_model.1} parent=11 // pred_check_branch
          %168 = sbr.rel (%p166) target = $region20
        $region19: #{regression_model.1} parent=11 // pred_region
          %s170 = ssub.s32 16, 16
          %171 = vsyncadd [#allocation5], %s170
          %s173 = sshll.u32 [#allocation4], 4
          %s174 = int_to_ptr.vmem [resolvable:$true] %s173
          %176 = dma.hbm_to_vmem [thread:$0]  %s2, 16, %s174, [#allocation5]
        $region20: #{regression_model.1} parent=11 // pred_fallthru
          _
        // Predicated region
        $region21: #{regression_model.1} parent=11 // pred_check
          %p177 = pneg %p101
        $region22: #{regression_model.1} parent=11 // pred_check_branch
          %179 = sbr.rel (%p177) target = $region24
        $region23: #{regression_model.1} parent=11 // pred_region
          _
        $region24: #{regression_model.1} parent=11 // pred_fallthru
          _
        // Predicated region
        $region25: #{regression_model.1} parent=11 // pred_check
          %p180 = pneg %p122
        $region26: #{regression_model.1} parent=11 // pred_check_branch
          %182 = sbr.rel (%p180) target = $region28
        $region27: #{regression_model.1} parent=11 // pred_region
          _
        $region28: #{regression_model.1} parent=11 // pred_fallthru
          _
      $region12: #{regression_model.1} parent=5 // pred_fallthru
        _
      %p183 = scmp.lt.s32.totalorder %s12, 2
      // Predicated region
      $region29: #{regression_model.1} parent=5 // pred_check
        %p184 = pneg %p183
      $region30: #{regression_model.1} parent=5 // pred_check_branch
        %186 = sbr.rel (%p184) target = $region32
      $region31: #{regression_model.1} parent=5 // pred_region
        // Predicated region
        $region33: #{regression_model.1} parent=31 // pred_check
          %p187 = pneg %p32
        $region34: #{regression_model.1} parent=31 // pred_check_branch
          %189 = sbr.rel (%p187) target = $region36
        $region35: #{regression_model.1} parent=31 // pred_region
          %p190 = scmp.lt.s32.totalorder %s12, 1
          %s191 = scalar_select %p190, %s12, 1
          %s192 = smul.addr %s191, 32
          %s193 = smul.addr %s192, 4
          %s194 = scalar_lea.vmem %s0, %s193
        $region36: #{regression_model.1} parent=31 // pred_fallthru
          _
      $region32: #{regression_model.1} parent=5 // pred_fallthru
        _
      %p195 = scmp.le.s32.totalorder 1, %s12
      %p196 = scmp.lt.s32.totalorder %s12, 3
      %p197 = pnand %p195, %p196
      %p198 = pneg %p197
      // Predicated region
      $region37: #{regression_model.1} parent=5 // pred_check
        _
      $region38: #{regression_model.1} parent=5 // pred_check_branch
        %200 = sbr.rel (%p197) target = $region40
      $region39: #{regression_model.1} parent=5 // pred_region
        %s201 = ssub.s32 %s12, 1
        // Predicated region
        $region41: #{regression_model.1} parent=39 // pred_check
          %p202 = pneg %p80
        $region42: #{regression_model.1} parent=39 // pred_check_branch
          %204 = sbr.rel (%p202) target = $region44
        $region43: #{regression_model.1} parent=39 // pred_region
          %205 = dma.done [#allocation5], 16
        $region44: #{regression_model.1} parent=39 // pred_fallthru
          _
        %p206 = scmp.lt.s32.totalorder %s17, 1
        %s207 = scalar_select %p206, %s17, 1
        %s208 = smul.addr %s207, 32
        %s209 = smul.addr %s208, 4
        %s210 = scalar_lea.vmem %s0, %s209
        %p211 = pneg %p38
        %p212 = pneg %p35
        %p213 = pneg %p59
        %p214 = pneg %p56
        %p215 = pneg %p80
        %p216 = pneg %p77
        %p217 = pneg %p101
        %p218 = pneg %p98
        %p219 = pneg %p122
        %p220 = pneg %p119
        %p221 = pneg %p148
        %p222 = pneg %p145
        %p223 = scmp.lt.s32.totalorder %s17, 1
        %s224 = scalar_select %p223, %s17, 1
        %s225 = smul.addr %s224, 32
        %s226 = smul.addr %s225, 8
        %s227 = scalar_lea.vmem %s5, %s226
        %p228 = scmp.lt.s32.totalorder %s17, 1
        %s229 = scalar_select %p228, %s17, 1
        %s230 = smul.addr %s229, 32
        %s231 = smul.addr %s230, 4
        %s232 = scalar_lea.vmem %s0, %s231
        %p233 = scmp.lt.s32.totalorder %s17, 1
        %s234 = scalar_select %p233, %s17, 1
        %s235 = smul.addr %s234, 32
        %s236 = smul.addr %s235, 8
        %s237 = scalar_lea.vmem %s5, %s236
        %vm239 = vcmask 27648
        %240 = vst.msk [vmem:[#allocation2] sm:$0xf] %vm239, 0
        %241 = vst.msk [vmem:[#allocation2 + $0x4] sm:$0xf] %vm239, 0
        %vm242 = vcmask 24576
        %243 = vst.msk [vmem:[#allocation2 + $0x8] sm:$0x1] %vm242, 0
        %s244 = scalar_lea.vmem [#allocation2], 204
        %245 = vst.msk [vmem:[%s244] sm:$0xf] %vm239, 0
        %246 = vst.msk [vmem:[%s244 + $0x4] sm:$0xf] %vm239, 0
        %247 = vst.msk [vmem:[%s244 + $0x8] sm:$0x1] %vm242, 0
        %vm248 = vcmask 24576
        %vm249 = vsmask.f32 256
        %vm250 = vmand %vm248, %vm249
        %v251 = vld [vmem:[#allocation2] sm:$0x1]
        %v252 = vsel %vm250, 0, %v251
        %253 = vst [vmem:[#allocation2] sm:$0x1] %v252
        %v254 = vld [vmem:[#allocation2 + $0xc] sm:$0x1]
        %v255 = vsel %vm250, 0, %v254
        %256 = vst [vmem:[#allocation2 + $0xc] sm:$0x1] %v255
        %v257 = vld [vmem:[#allocation2 + $0x18] sm:$0x1]
        %v258 = vsel %vm250, 0, %v257
        %259 = vst [vmem:[#allocation2 + $0x18] sm:$0x1] %v258
        %v260 = vld [vmem:[#allocation2 + $0x24] sm:$0x1]
        %v261 = vsel %vm250, 0, %v260
        %262 = vst [vmem:[#allocation2 + $0x24] sm:$0x1] %v261
        %v263 = vld [vmem:[#allocation2 + $0x30] sm:$0x1]
        %v264 = vsel %vm250, 0, %v263
        %265 = vst [vmem:[#allocation2 + $0x30] sm:$0x1] %v264
        %v266 = vld [vmem:[#allocation2 + $0x3c] sm:$0x1]
        %v267 = vsel %vm250, 0, %v266
        %268 = vst [vmem:[#allocation2 + $0x3c] sm:$0x1] %v267
        %v269 = vld [vmem:[#allocation2 + $0x48] sm:$0x1]
        %v270 = vsel %vm250, 0, %v269
        %271 = vst [vmem:[#allocation2 + $0x48] sm:$0x1] %v270
        %v272 = vld [vmem:[#allocation2 + $0x54] sm:$0x1]
        %v273 = vsel %vm250, 0, %v272
        %274 = vst [vmem:[#allocation2 + $0x54] sm:$0x1] %v273
        %v275 = vld [vmem:[#allocation2 + $0x60] sm:$0x1]
        %v276 = vsel %vm250, 0, %v275
        %277 = vst [vmem:[#allocation2 + $0x60] sm:$0x1] %v276
        %v278 = vld [vmem:[#allocation2 + $0x6c] sm:$0x1]
        %v279 = vsel %vm250, 0, %v278
        %280 = vst [vmem:[#allocation2 + $0x6c] sm:$0x1] %v279
        %v281 = vld [vmem:[#allocation2 + $0x78] sm:$0x1]
        %v282 = vsel %vm250, 0, %v281
        %283 = vst [vmem:[#allocation2 + $0x78] sm:$0x1] %v282
        %v284 = vld [vmem:[#allocation2 + $0x84] sm:$0x1]
        %v285 = vsel %vm250, 0, %v284
        %286 = vst [vmem:[#allocation2 + $0x84] sm:$0x1] %v285
        %v287 = vld [vmem:[#allocation2 + $0x90] sm:$0x1]
        %v288 = vsel %vm250, 0, %v287
        %289 = vst [vmem:[#allocation2 + $0x90] sm:$0x1] %v288
        %v290 = vld [vmem:[#allocation2 + $0x9c] sm:$0x1]
        %v291 = vsel %vm250, 0, %v290
        %292 = vst [vmem:[#allocation2 + $0x9c] sm:$0x1] %v291
        %v293 = vld [vmem:[#allocation2 + $0xa8] sm:$0x1]
        %v294 = vsel %vm250, 0, %v293
        %295 = vst [vmem:[#allocation2 + $0xa8] sm:$0x1] %v294
        %v296 = vld [vmem:[#allocation2 + $0xb4] sm:$0x1]
        %v297 = vsel %vm250, 0, %v296
        %298 = vst [vmem:[#allocation2 + $0xb4] sm:$0x1] %v297
        %v299 = vld [vmem:[#allocation2 + $0xc0] sm:$0x1]
        %v300 = vsel %vm250, 0, %v299
        %301 = vst [vmem:[#allocation2 + $0xc0] sm:$0x1] %v300
        %v302 = vld [vmem:[#allocation2 + $0xcc] sm:$0x1]
        %v303 = vsel %vm250, 0, %v302
        %304 = vst [vmem:[#allocation2 + $0xcc] sm:$0x1] %v303
        %vm305 = vsmask.f32 7938
        %vm306 = vmand %vm248, %vm305
        %v307 = vld [vmem:[#allocation2 + $0x8] sm:$0x1]
        %v308 = vsel %vm306, 0, %v307
        %309 = vst [vmem:[#allocation2 + $0x8] sm:$0x1] %v308
        %v310 = vld [vmem:[#allocation2 + $0x14] sm:$0x1]
        %v311 = vsel %vm306, 0, %v310
        %312 = vst [vmem:[#allocation2 + $0x14] sm:$0x1] %v311
        %v313 = vld [vmem:[#allocation2 + $0x20] sm:$0x1]
        %v314 = vsel %vm306, 0, %v313
        %315 = vst [vmem:[#allocation2 + $0x20] sm:$0x1] %v314
        %v316 = vld [vmem:[#allocation2 + $0x2c] sm:$0x1]
        %v317 = vsel %vm306, 0, %v316
        %318 = vst [vmem:[#allocation2 + $0x2c] sm:$0x1] %v317
        %v319 = vld [vmem:[#allocation2 + $0x38] sm:$0x1]
        %v320 = vsel %vm306, 0, %v319
        %321 = vst [vmem:[#allocation2 + $0x38] sm:$0x1] %v320
        %v322 = vld [vmem:[#allocation2 + $0x44] sm:$0x1]
        %v323 = vsel %vm306, 0, %v322
        %324 = vst [vmem:[#allocation2 + $0x44] sm:$0x1] %v323
        %v325 = vld [vmem:[#allocation2 + $0x50] sm:$0x1]
        %v326 = vsel %vm306, 0, %v325
        %327 = vst [vmem:[#allocation2 + $0x50] sm:$0x1] %v326
        %v328 = vld [vmem:[#allocation2 + $0x5c] sm:$0x1]
        %v329 = vsel %vm306, 0, %v328
        %330 = vst [vmem:[#allocation2 + $0x5c] sm:$0x1] %v329
        %v331 = vld [vmem:[#allocation2 + $0x68] sm:$0x1]
        %v332 = vsel %vm306, 0, %v331
        %333 = vst [vmem:[#allocation2 + $0x68] sm:$0x1] %v332
        %v334 = vld [vmem:[#allocation2 + $0x74] sm:$0x1]
        %v335 = vsel %vm306, 0, %v334
        %336 = vst [vmem:[#allocation2 + $0x74] sm:$0x1] %v335
        %v337 = vld [vmem:[#allocation2 + $0x80] sm:$0x1]
        %v338 = vsel %vm306, 0, %v337
        %339 = vst [vmem:[#allocation2 + $0x80] sm:$0x1] %v338
        %v340 = vld [vmem:[#allocation2 + $0x8c] sm:$0x1]
        %v341 = vsel %vm306, 0, %v340
        %342 = vst [vmem:[#allocation2 + $0x8c] sm:$0x1] %v341
        %v343 = vld [vmem:[#allocation2 + $0x98] sm:$0x1]
        %v344 = vsel %vm306, 0, %v343
        %345 = vst [vmem:[#allocation2 + $0x98] sm:$0x1] %v344
        %v346 = vld [vmem:[#allocation2 + $0xa4] sm:$0x1]
        %v347 = vsel %vm306, 0, %v346
        %348 = vst [vmem:[#allocation2 + $0xa4] sm:$0x1] %v347
        %v349 = vld [vmem:[#allocation2 + $0xb0] sm:$0x1]
        %v350 = vsel %vm306, 0, %v349
        %351 = vst [vmem:[#allocation2 + $0xb0] sm:$0x1] %v350
        %v352 = vld [vmem:[#allocation2 + $0xbc] sm:$0x1]
        %v353 = vsel %vm306, 0, %v352
        %354 = vst [vmem:[#allocation2 + $0xbc] sm:$0x1] %v353
        %v355 = vld [vmem:[#allocation2 + $0xc8] sm:$0x1]
        %v356 = vsel %vm306, 0, %v355
        %357 = vst [vmem:[#allocation2 + $0xc8] sm:$0x1] %v356
        %v358 = vld [vmem:[#allocation2 + $0xd4] sm:$0x1]
        %v359 = vsel %vm306, 0, %v358
        %360 = vst [vmem:[#allocation2 + $0xd4] sm:$0x1] %v359
        %vm361 = vcmask 257024
        %362 = vst.msk [vmem:[#allocation3] sm:$0xf] %vm361, 0
        %363 = vst.msk [vmem:[#allocation3 + $0x4] sm:$0xf] %vm361, 0
        %vm364 = vcmask 253952
        %365 = vst.msk [vmem:[#allocation3 + $0x8] sm:$0x1] %vm364, 0
        %s366 = scalar_lea.vmem [#allocation3], 204
        %367 = vst.msk [vmem:[%s366] sm:$0xf] %vm361, 0
        %368 = vst.msk [vmem:[%s366 + $0x4] sm:$0xf] %vm361, 0
        %369 = vst.msk [vmem:[%s366 + $0x8] sm:$0x1] %vm364, 0
        %vm370 = vcmask 253952
        %vm371 = vmand %vm370, %vm249
        %v372 = vld [vmem:[#allocation3] sm:$0x1]
        %v373 = vsel %vm371, 0, %v372
        %374 = vst [vmem:[#allocation3] sm:$0x1] %v373
        %v375 = vld [vmem:[#allocation3 + $0xc] sm:$0x1]
        %v376 = vsel %vm371, 0, %v375
        %377 = vst [vmem:[#allocation3 + $0xc] sm:$0x1] %v376
        %v378 = vld [vmem:[#allocation3 + $0x18] sm:$0x1]
        %v379 = vsel %vm371, 0, %v378
        %380 = vst [vmem:[#allocation3 + $0x18] sm:$0x1] %v379
        %v381 = vld [vmem:[#allocation3 + $0x24] sm:$0x1]
        %v382 = vsel %vm371, 0, %v381
        %383 = vst [vmem:[#allocation3 + $0x24] sm:$0x1] %v382
        %v384 = vld [vmem:[#allocation3 + $0x30] sm:$0x1]
        %v385 = vsel %vm371, 0, %v384
        %386 = vst [vmem:[#allocation3 + $0x30] sm:$0x1] %v385
        %v387 = vld [vmem:[#allocation3 + $0x3c] sm:$0x1]
        %v388 = vsel %vm371, 0, %v387
        %389 = vst [vmem:[#allocation3 + $0x3c] sm:$0x1] %v388
        %v390 = vld [vmem:[#allocation3 + $0x48] sm:$0x1]
        %v391 = vsel %vm371, 0, %v390
        %392 = vst [vmem:[#allocation3 + $0x48] sm:$0x1] %v391
        %v393 = vld [vmem:[#allocation3 + $0x54] sm:$0x1]
        %v394 = vsel %vm371, 0, %v393
        %395 = vst [vmem:[#allocation3 + $0x54] sm:$0x1] %v394
        %v396 = vld [vmem:[#allocation3 + $0x60] sm:$0x1]
        %v397 = vsel %vm371, 0, %v396
        %398 = vst [vmem:[#allocation3 + $0x60] sm:$0x1] %v397
        %v399 = vld [vmem:[#allocation3 + $0x6c] sm:$0x1]
        %v400 = vsel %vm371, 0, %v399
        %401 = vst [vmem:[#allocation3 + $0x6c] sm:$0x1] %v400
        %v402 = vld [vmem:[#allocation3 + $0x78] sm:$0x1]
        %v403 = vsel %vm371, 0, %v402
        %404 = vst [vmem:[#allocation3 + $0x78] sm:$0x1] %v403
        %v405 = vld [vmem:[#allocation3 + $0x84] sm:$0x1]
        %v406 = vsel %vm371, 0, %v405
        %407 = vst [vmem:[#allocation3 + $0x84] sm:$0x1] %v406
        %v408 = vld [vmem:[#allocation3 + $0x90] sm:$0x1]
        %v409 = vsel %vm371, 0, %v408
        %410 = vst [vmem:[#allocation3 + $0x90] sm:$0x1] %v409
        %v411 = vld [vmem:[#allocation3 + $0x9c] sm:$0x1]
        %v412 = vsel %vm371, 0, %v411
        %413 = vst [vmem:[#allocation3 + $0x9c] sm:$0x1] %v412
        %v414 = vld [vmem:[#allocation3 + $0xa8] sm:$0x1]
        %v415 = vsel %vm371, 0, %v414
        %416 = vst [vmem:[#allocation3 + $0xa8] sm:$0x1] %v415
        %v417 = vld [vmem:[#allocation3 + $0xb4] sm:$0x1]
        %v418 = vsel %vm371, 0, %v417
        %419 = vst [vmem:[#allocation3 + $0xb4] sm:$0x1] %v418
        %v420 = vld [vmem:[#allocation3 + $0xc0] sm:$0x1]
        %v421 = vsel %vm371, 0, %v420
        %422 = vst [vmem:[#allocation3 + $0xc0] sm:$0x1] %v421
        %v423 = vld [vmem:[#allocation3 + $0xcc] sm:$0x1]
        %v424 = vsel %vm371, 0, %v423
        %425 = vst [vmem:[#allocation3 + $0xcc] sm:$0x1] %v424
        %vm426 = vmand %vm370, %vm305
        %v427 = vld [vmem:[#allocation3 + $0x8] sm:$0x1]
        %v428 = vsel %vm426, 0, %v427
        %429 = vst [vmem:[#allocation3 + $0x8] sm:$0x1] %v428
        %v430 = vld [vmem:[#allocation3 + $0x14] sm:$0x1]
        %v431 = vsel %vm426, 0, %v430
        %432 = vst [vmem:[#allocation3 + $0x14] sm:$0x1] %v431
        %v433 = vld [vmem:[#allocation3 + $0x20] sm:$0x1]
        %v434 = vsel %vm426, 0, %v433
        %435 = vst [vmem:[#allocation3 + $0x20] sm:$0x1] %v434
        %v436 = vld [vmem:[#allocation3 + $0x2c] sm:$0x1]
        %v437 = vsel %vm426, 0, %v436
        %438 = vst [vmem:[#allocation3 + $0x2c] sm:$0x1] %v437
        %v439 = vld [vmem:[#allocation3 + $0x38] sm:$0x1]
        %v440 = vsel %vm426, 0, %v439
        %441 = vst [vmem:[#allocation3 + $0x38] sm:$0x1] %v440
        %v442 = vld [vmem:[#allocation3 + $0x44] sm:$0x1]
        %v443 = vsel %vm426, 0, %v442
        %444 = vst [vmem:[#allocation3 + $0x44] sm:$0x1] %v443
        %v445 = vld [vmem:[#allocation3 + $0x50] sm:$0x1]
        %v446 = vsel %vm426, 0, %v445
        %447 = vst [vmem:[#allocation3 + $0x50] sm:$0x1] %v446
        %v448 = vld [vmem:[#allocation3 + $0x5c] sm:$0x1]
        %v449 = vsel %vm426, 0, %v448
        %450 = vst [vmem:[#allocation3 + $0x5c] sm:$0x1] %v449
        %v451 = vld [vmem:[#allocation3 + $0x68] sm:$0x1]
        %v452 = vsel %vm426, 0, %v451
        %453 = vst [vmem:[#allocation3 + $0x68] sm:$0x1] %v452
        %v454 = vld [vmem:[#allocation3 + $0x74] sm:$0x1]
        %v455 = vsel %vm426, 0, %v454
        %456 = vst [vmem:[#allocation3 + $0x74] sm:$0x1] %v455
        %v457 = vld [vmem:[#allocation3 + $0x80] sm:$0x1]
        %v458 = vsel %vm426, 0, %v457
        %459 = vst [vmem:[#allocation3 + $0x80] sm:$0x1] %v458
        %v460 = vld [vmem:[#allocation3 + $0x8c] sm:$0x1]
        %v461 = vsel %vm426, 0, %v460
        %462 = vst [vmem:[#allocation3 + $0x8c] sm:$0x1] %v461
        %v463 = vld [vmem:[#allocation3 + $0x98] sm:$0x1]
        %v464 = vsel %vm426, 0, %v463
        %465 = vst [vmem:[#allocation3 + $0x98] sm:$0x1] %v464
        %v466 = vld [vmem:[#allocation3 + $0xa4] sm:$0x1]
        %v467 = vsel %vm426, 0, %v466
        %468 = vst [vmem:[#allocation3 + $0xa4] sm:$0x1] %v467
        %v469 = vld [vmem:[#allocation3 + $0xb0] sm:$0x1]
        %v470 = vsel %vm426, 0, %v469
        %471 = vst [vmem:[#allocation3 + $0xb0] sm:$0x1] %v470
        %v472 = vld [vmem:[#allocation3 + $0xbc] sm:$0x1]
        %v473 = vsel %vm426, 0, %v472
        %474 = vst [vmem:[#allocation3 + $0xbc] sm:$0x1] %v473
        %v475 = vld [vmem:[#allocation3 + $0xc8] sm:$0x1]
        %v476 = vsel %vm426, 0, %v475
        %477 = vst [vmem:[#allocation3 + $0xc8] sm:$0x1] %v476
        %v478 = vld [vmem:[#allocation3 + $0xd4] sm:$0x1]
        %v479 = vsel %vm426, 0, %v478
        %480 = vst [vmem:[#allocation3 + $0xd4] sm:$0x1] %v479
        %v481 = vld [vmem:[%s232] sm:$0xf]
        %v482 = vld [vmem:[%s232 + $0x4] sm:$0xf]
        %v483 = vld [vmem:[%s232 + $0x8] sm:$0xf]
        %v484 = vld [vmem:[%s232 + $0xc] sm:$0xf]
        %v485 = vld [vmem:[%s232 + $0x10] sm:$0xf]
        %v486 = vld [vmem:[%s232 + $0x14] sm:$0xf]
        %v487 = vld [vmem:[%s232 + $0x18] sm:$0xf]
        %v488 = vld [vmem:[%s232 + $0x1c] sm:$0xf]
        %v489 = vld [vmem:[%s232 + $0x20] sm:$0xf]
        %v490 = vld [vmem:[%s232 + $0x24] sm:$0xf]
        %v491 = vld [vmem:[%s232 + $0x28] sm:$0xf]
        %v492 = vld [vmem:[%s232 + $0x2c] sm:$0xf]
        %v493 = vld [vmem:[%s232 + $0x30] sm:$0xf]
        %v494 = vld [vmem:[%s232 + $0x34] sm:$0xf]
        %v495 = vld [vmem:[%s232 + $0x38] sm:$0xf]
        %v496 = vld [vmem:[%s232 + $0x3c] sm:$0xf]
        %v497 = vld [vmem:[%s232 + $0x40] sm:$0xf]
        %v498 = vld [vmem:[%s232 + $0x44] sm:$0xf]
        %v499 = vld [vmem:[%s232 + $0x48] sm:$0xf]
        %v500 = vld [vmem:[%s232 + $0x4c] sm:$0xf]
        %v501 = vld [vmem:[%s232 + $0x50] sm:$0xf]
        %v502 = vld [vmem:[%s232 + $0x54] sm:$0xf]
        %v503 = vld [vmem:[%s232 + $0x58] sm:$0xf]
        %v504 = vld [vmem:[%s232 + $0x5c] sm:$0xf]
        %v505 = vld [vmem:[%s232 + $0x60] sm:$0xf]
        %v506 = vld [vmem:[%s232 + $0x64] sm:$0xf]
        %v507 = vld [vmem:[%s232 + $0x68] sm:$0xf]
        %v508 = vld [vmem:[%s232 + $0x6c] sm:$0xf]
        %v509 = vld [vmem:[%s232 + $0x70] sm:$0xf]
        %v510 = vld [vmem:[%s232 + $0x74] sm:$0xf]
        %v511 = vld [vmem:[%s232 + $0x78] sm:$0xf]
        %v512 = vld [vmem:[%s232 + $0x7c] sm:$0xf]
        %vm513 = vsmask.f32 4368
        %vm514 = vmor %vm249, %vm513
        %v516 = vshrl.u32 %v481, 16
        %v518 = vrot.slane %v516, 7
        %v519 = vshll.u32 %v481, 16
        %v521 = vor.u32 %v518, %v519
        %v522 = vrot.slane %v518, 4
        %v524 = vshrl.u32 %v482, 16
        %v526 = vrot.slane %v524, 7
        %v527 = vshll.u32 %v482, 16
        %v529 = vor.u32 %v526, %v527
        %v530 = vsel %vm514, %v522, %v529
        %v531 = vrot.slane %v526, 4
        %v533 = vshrl.u32 %v483, 16
        %v535 = vrot.slane %v533, 7
        %v536 = vshll.u32 %v483, 16
        %v538 = vor.u32 %v535, %v536
        %v539 = vrot.slane %v535, 4
        %v541 = vshrl.u32 %v484, 16
        %v543 = vrot.slane %v541, 7
        %v544 = vshll.u32 %v484, 16
        %v546 = vor.u32 %v543, %v544
        %v547 = vsel %vm514, %v539, %v546
        %v548 = vrot.slane %v543, 4
        %v550 = vshrl.u32 %v485, 16
        %v552 = vrot.slane %v550, 7
        %v553 = vshll.u32 %v485, 16
        %v555 = vor.u32 %v552, %v553
        %v556 = vrot.slane %v552, 4
        %v558 = vshrl.u32 %v486, 16
        %v560 = vrot.slane %v558, 7
        %v561 = vshll.u32 %v486, 16
        %v563 = vor.u32 %v560, %v561
        %v564 = vsel %vm514, %v556, %v563
        %v565 = vrot.slane %v560, 4
        %v567 = vshrl.u32 %v487, 16
        %v569 = vrot.slane %v567, 7
        %v570 = vshll.u32 %v487, 16
        %v572 = vor.u32 %v569, %v570
        %v573 = vrot.slane %v569, 4
        %v575 = vshrl.u32 %v488, 16
        %v577 = vrot.slane %v575, 7
        %v578 = vshll.u32 %v488, 16
        %v580 = vor.u32 %v577, %v578
        %v581 = vsel %vm514, %v573, %v580
        %v582 = vrot.slane %v577, 4
        %v584 = vshrl.u32 %v489, 16
        %v586 = vrot.slane %v584, 7
        %v587 = vshll.u32 %v489, 16
        %v589 = vor.u32 %v586, %v587
        %v590 = vrot.slane %v586, 4
        %v592 = vshrl.u32 %v490, 16
        %v594 = vrot.slane %v592, 7
        %v595 = vshll.u32 %v490, 16
        %v597 = vor.u32 %v594, %v595
        %v598 = vsel %vm514, %v590, %v597
        %v599 = vrot.slane %v594, 4
        %v601 = vshrl.u32 %v491, 16
        %v603 = vrot.slane %v601, 7
        %v604 = vshll.u32 %v491, 16
        %v606 = vor.u32 %v603, %v604
        %v607 = vrot.slane %v603, 4
        %v609 = vshrl.u32 %v492, 16
        %v611 = vrot.slane %v609, 7
        %v612 = vshll.u32 %v492, 16
        %v614 = vor.u32 %v611, %v612
        %v615 = vsel %vm514, %v607, %v614
        %v616 = vrot.slane %v611, 4
        %v618 = vshrl.u32 %v493, 16
        %v620 = vrot.slane %v618, 7
        %v621 = vshll.u32 %v493, 16
        %v623 = vor.u32 %v620, %v621
        %v624 = vrot.slane %v620, 4
        %v626 = vshrl.u32 %v494, 16
        %v628 = vrot.slane %v626, 7
        %v629 = vshll.u32 %v494, 16
        %v631 = vor.u32 %v628, %v629
        %v632 = vsel %vm514, %v624, %v631
        %v633 = vrot.slane %v628, 4
        %v635 = vshrl.u32 %v495, 16
        %v637 = vrot.slane %v635, 7
        %v638 = vshll.u32 %v495, 16
        %v640 = vor.u32 %v637, %v638
        %v641 = vrot.slane %v637, 4
        %v643 = vshrl.u32 %v496, 16
        %v645 = vrot.slane %v643, 7
        %v646 = vshll.u32 %v496, 16
        %v648 = vor.u32 %v645, %v646
        %v649 = vsel %vm514, %v641, %v648
        %v650 = vrot.slane %v645, 4
        %v652 = vshrl.u32 %v497, 16
        %v654 = vrot.slane %v652, 7
        %v655 = vshll.u32 %v497, 16
        %v657 = vor.u32 %v654, %v655
        %v658 = vrot.slane %v654, 4
        %v660 = vshrl.u32 %v498, 16
        %v662 = vrot.slane %v660, 7
        %v663 = vshll.u32 %v498, 16
        %v665 = vor.u32 %v662, %v663
        %v666 = vsel %vm514, %v658, %v665
        %v667 = vrot.slane %v662, 4
        %v669 = vshrl.u32 %v499, 16
        %v671 = vrot.slane %v669, 7
        %v672 = vshll.u32 %v499, 16
        %v674 = vor.u32 %v671, %v672
        %v675 = vrot.slane %v671, 4
        %v677 = vshrl.u32 %v500, 16
        %v679 = vrot.slane %v677, 7
        %v680 = vshll.u32 %v500, 16
        %v682 = vor.u32 %v679, %v680
        %v683 = vsel %vm514, %v675, %v682
        %v684 = vrot.slane %v679, 4
        %v686 = vshrl.u32 %v501, 16
        %v688 = vrot.slane %v686, 7
        %v689 = vshll.u32 %v501, 16
        %v691 = vor.u32 %v688, %v689
        %v692 = vrot.slane %v688, 4
        %v694 = vshrl.u32 %v502, 16
        %v696 = vrot.slane %v694, 7
        %v697 = vshll.u32 %v502, 16
        %v699 = vor.u32 %v696, %v697
        %v700 = vsel %vm514, %v692, %v699
        %v701 = vrot.slane %v696, 4
        %v703 = vshrl.u32 %v503, 16
        %v705 = vrot.slane %v703, 7
        %v706 = vshll.u32 %v503, 16
        %v708 = vor.u32 %v705, %v706
        %v709 = vrot.slane %v705, 4
        %v711 = vshrl.u32 %v504, 16
        %v713 = vrot.slane %v711, 7
        %v714 = vshll.u32 %v504, 16
        %v716 = vor.u32 %v713, %v714
        %v717 = vsel %vm514, %v709, %v716
        %v718 = vrot.slane %v713, 4
        %v720 = vshrl.u32 %v505, 16
        %v722 = vrot.slane %v720, 7
        %v723 = vshll.u32 %v505, 16
        %v725 = vor.u32 %v722, %v723
        %v726 = vrot.slane %v722, 4
        %v728 = vshrl.u32 %v506, 16
        %v730 = vrot.slane %v728, 7
        %v731 = vshll.u32 %v506, 16
        %v733 = vor.u32 %v730, %v731
        %v734 = vsel %vm514, %v726, %v733
        %v735 = vrot.slane %v730, 4
        %v737 = vshrl.u32 %v507, 16
        %v739 = vrot.slane %v737, 7
        %v740 = vshll.u32 %v507, 16
        %v742 = vor.u32 %v739, %v740
        %v743 = vrot.slane %v739, 4
        %v745 = vshrl.u32 %v508, 16
        %v747 = vrot.slane %v745, 7
        %v748 = vshll.u32 %v508, 16
        %v750 = vor.u32 %v747, %v748
        %v751 = vsel %vm514, %v743, %v750
        %v752 = vrot.slane %v747, 4
        %v754 = vshrl.u32 %v509, 16
        %v756 = vrot.slane %v754, 7
        %v757 = vshll.u32 %v509, 16
        %v759 = vor.u32 %v756, %v757
        %v760 = vrot.slane %v756, 4
        %v762 = vshrl.u32 %v510, 16
        %v764 = vrot.slane %v762, 7
        %v765 = vshll.u32 %v510, 16
        %v767 = vor.u32 %v764, %v765
        %v768 = vsel %vm514, %v760, %v767
        %v769 = vrot.slane %v764, 4
        %v771 = vshrl.u32 %v511, 16
        %v773 = vrot.slane %v771, 7
        %v774 = vshll.u32 %v511, 16
        %v776 = vor.u32 %v773, %v774
        %v777 = vrot.slane %v773, 4
        %v779 = vshrl.u32 %v512, 16
        %v781 = vrot.slane %v779, 7
        %v782 = vshll.u32 %v512, 16
        %v784 = vor.u32 %v781, %v782
        %v785 = vsel %vm514, %v777, %v784
        %v786 = vrot.slane %v781, 4
        %s835 = scalar_lea.vmem [#allocation2], 12
        %vm836 = vcmask 27648
        %vm837 = vmand %vm836, %vm305
        %v838 = vld [vmem:[%s835] sm:$0xf]
        %v839 = vsel %vm837, %v521, %v838
        %840 = vst [vmem:[%s835] sm:$0xf] %v839
        %841 = vst.msk [vmem:[%s835 + $0x4] sm:$0xf] %vm239, %v530
        %v842 = vld [vmem:[%s835 + $0x8] sm:$0x1]
        %v843 = vsel %vm250, %v531, %v842
        %844 = vst [vmem:[%s835 + $0x8] sm:$0x1] %v843
        %v845 = vld [vmem:[%s835 + $0xc] sm:$0xf]
        %v846 = vsel %vm837, %v538, %v845
        %847 = vst [vmem:[%s835 + $0xc] sm:$0xf] %v846
        %848 = vst.msk [vmem:[%s835 + $0x10] sm:$0xf] %vm239, %v547
        %v849 = vld [vmem:[%s835 + $0x14] sm:$0x1]
        %v850 = vsel %vm250, %v548, %v849
        %851 = vst [vmem:[%s835 + $0x14] sm:$0x1] %v850
        %v852 = vld [vmem:[%s835 + $0x18] sm:$0xf]
        %v853 = vsel %vm837, %v555, %v852
        %854 = vst [vmem:[%s835 + $0x18] sm:$0xf] %v853
        %855 = vst.msk [vmem:[%s835 + $0x1c] sm:$0xf] %vm239, %v564
        %v856 = vld [vmem:[%s835 + $0x20] sm:$0x1]
        %v857 = vsel %vm250, %v565, %v856
        %858 = vst [vmem:[%s835 + $0x20] sm:$0x1] %v857
        %v859 = vld [vmem:[%s835 + $0x24] sm:$0xf]
        %v860 = vsel %vm837, %v572, %v859
        %861 = vst [vmem:[%s835 + $0x24] sm:$0xf] %v860
        %862 = vst.msk [vmem:[%s835 + $0x28] sm:$0xf] %vm239, %v581
        %v863 = vld [vmem:[%s835 + $0x2c] sm:$0x1]
        %v864 = vsel %vm250, %v582, %v863
        %865 = vst [vmem:[%s835 + $0x2c] sm:$0x1] %v864
        %v866 = vld [vmem:[%s835 + $0x30] sm:$0xf]
        %v867 = vsel %vm837, %v589, %v866
        %868 = vst [vmem:[%s835 + $0x30] sm:$0xf] %v867
        %869 = vst.msk [vmem:[%s835 + $0x34] sm:$0xf] %vm239, %v598
        %v870 = vld [vmem:[%s835 + $0x38] sm:$0x1]
        %v871 = vsel %vm250, %v599, %v870
        %872 = vst [vmem:[%s835 + $0x38] sm:$0x1] %v871
        %v873 = vld [vmem:[%s835 + $0x3c] sm:$0xf]
        %v874 = vsel %vm837, %v606, %v873
        %875 = vst [vmem:[%s835 + $0x3c] sm:$0xf] %v874
        %876 = vst.msk [vmem:[%s835 + $0x40] sm:$0xf] %vm239, %v615
        %v877 = vld [vmem:[%s835 + $0x44] sm:$0x1]
        %v878 = vsel %vm250, %v616, %v877
        %879 = vst [vmem:[%s835 + $0x44] sm:$0x1] %v878
        %v880 = vld [vmem:[%s835 + $0x48] sm:$0xf]
        %v881 = vsel %vm837, %v623, %v880
        %882 = vst [vmem:[%s835 + $0x48] sm:$0xf] %v881
        %883 = vst.msk [vmem:[%s835 + $0x4c] sm:$0xf] %vm239, %v632
        %v884 = vld [vmem:[%s835 + $0x50] sm:$0x1]
        %v885 = vsel %vm250, %v633, %v884
        %886 = vst [vmem:[%s835 + $0x50] sm:$0x1] %v885
        %v887 = vld [vmem:[%s835 + $0x54] sm:$0xf]
        %v888 = vsel %vm837, %v640, %v887
        %889 = vst [vmem:[%s835 + $0x54] sm:$0xf] %v888
        %890 = vst.msk [vmem:[%s835 + $0x58] sm:$0xf] %vm239, %v649
        %v891 = vld [vmem:[%s835 + $0x5c] sm:$0x1]
        %v892 = vsel %vm250, %v650, %v891
        %893 = vst [vmem:[%s835 + $0x5c] sm:$0x1] %v892
        %v894 = vld [vmem:[%s835 + $0x60] sm:$0xf]
        %v895 = vsel %vm837, %v657, %v894
        %896 = vst [vmem:[%s835 + $0x60] sm:$0xf] %v895
        %897 = vst.msk [vmem:[%s835 + $0x64] sm:$0xf] %vm239, %v666
        %v898 = vld [vmem:[%s835 + $0x68] sm:$0x1]
        %v899 = vsel %vm250, %v667, %v898
        %900 = vst [vmem:[%s835 + $0x68] sm:$0x1] %v899
        %v901 = vld [vmem:[%s835 + $0x6c] sm:$0xf]
        %v902 = vsel %vm837, %v674, %v901
        %903 = vst [vmem:[%s835 + $0x6c] sm:$0xf] %v902
        %904 = vst.msk [vmem:[%s835 + $0x70] sm:$0xf] %vm239, %v683
        %v905 = vld [vmem:[%s835 + $0x74] sm:$0x1]
        %v906 = vsel %vm250, %v684, %v905
        %907 = vst [vmem:[%s835 + $0x74] sm:$0x1] %v906
        %v908 = vld [vmem:[%s835 + $0x78] sm:$0xf]
        %v909 = vsel %vm837, %v691, %v908
        %910 = vst [vmem:[%s835 + $0x78] sm:$0xf] %v909
        %911 = vst.msk [vmem:[%s835 + $0x7c] sm:$0xf] %vm239, %v700
        %v912 = vld [vmem:[%s835 + $0x80] sm:$0x1]
        %v913 = vsel %vm250, %v701, %v912
        %914 = vst [vmem:[%s835 + $0x80] sm:$0x1] %v913
        %v915 = vld [vmem:[%s835 + $0x84] sm:$0xf]
        %v916 = vsel %vm837, %v708, %v915
        %917 = vst [vmem:[%s835 + $0x84] sm:$0xf] %v916
        %918 = vst.msk [vmem:[%s835 + $0x88] sm:$0xf] %vm239, %v717
        %v919 = vld [vmem:[%s835 + $0x8c] sm:$0x1]
        %v920 = vsel %vm250, %v718, %v919
        %921 = vst [vmem:[%s835 + $0x8c] sm:$0x1] %v920
        %v922 = vld [vmem:[%s835 + $0x90] sm:$0xf]
        %v923 = vsel %vm837, %v725, %v922
        %924 = vst [vmem:[%s835 + $0x90] sm:$0xf] %v923
        %925 = vst.msk [vmem:[%s835 + $0x94] sm:$0xf] %vm239, %v734
        %v926 = vld [vmem:[%s835 + $0x98] sm:$0x1]
        %v927 = vsel %vm250, %v735, %v926
        %928 = vst [vmem:[%s835 + $0x98] sm:$0x1] %v927
        %v929 = vld [vmem:[%s835 + $0x9c] sm:$0xf]
        %v930 = vsel %vm837, %v742, %v929
        %931 = vst [vmem:[%s835 + $0x9c] sm:$0xf] %v930
        %932 = vst.msk [vmem:[%s835 + $0xa0] sm:$0xf] %vm239, %v751
        %v933 = vld [vmem:[%s835 + $0xa4] sm:$0x1]
        %v934 = vsel %vm250, %v752, %v933
        %935 = vst [vmem:[%s835 + $0xa4] sm:$0x1] %v934
        %v936 = vld [vmem:[%s835 + $0xa8] sm:$0xf]
        %v937 = vsel %vm837, %v759, %v936
        %938 = vst [vmem:[%s835 + $0xa8] sm:$0xf] %v937
        %939 = vst.msk [vmem:[%s835 + $0xac] sm:$0xf] %vm239, %v768
        %v940 = vld [vmem:[%s835 + $0xb0] sm:$0x1]
        %v941 = vsel %vm250, %v769, %v940
        %942 = vst [vmem:[%s835 + $0xb0] sm:$0x1] %v941
        %v943 = vld [vmem:[%s835 + $0xb4] sm:$0xf]
        %v944 = vsel %vm837, %v776, %v943
        %945 = vst [vmem:[%s835 + $0xb4] sm:$0xf] %v944
        %946 = vst.msk [vmem:[%s835 + $0xb8] sm:$0xf] %vm239, %v785
        %v947 = vld [vmem:[%s835 + $0xbc] sm:$0x1]
        %v948 = vsel %vm250, %v786, %v947
        %949 = vst [vmem:[%s835 + $0xbc] sm:$0x1] %v948
        %v950 = vld [vmem:[#allocation2] sm:$0xf]
        %v951 = vld [vmem:[#allocation2 + $0x4] sm:$0xf]
        %v952 = vld [vmem:[#allocation2 + $0xc] sm:$0xf]
        %v953 = vld [vmem:[#allocation2 + $0x10] sm:$0xf]
        %v954 = vld [vmem:[#allocation2 + $0x18] sm:$0xf]
        %v955 = vld [vmem:[#allocation2 + $0x1c] sm:$0xf]
        %v956 = vld [vmem:[#allocation2 + $0x24] sm:$0xf]
        %v957 = vld [vmem:[#allocation2 + $0x28] sm:$0xf]
        %v958 = vld [vmem:[#allocation2 + $0x30] sm:$0xf]
        %v959 = vld [vmem:[#allocation2 + $0x34] sm:$0xf]
        %v960 = vld [vmem:[#allocation2 + $0x3c] sm:$0xf]
        %v961 = vld [vmem:[#allocation2 + $0x40] sm:$0xf]
        %v962 = vld [vmem:[#allocation2 + $0x48] sm:$0xf]
        %v963 = vld [vmem:[#allocation2 + $0x4c] sm:$0xf]
        %v964 = vld [vmem:[#allocation2 + $0x54] sm:$0xf]
        %v965 = vld [vmem:[#allocation2 + $0x58] sm:$0xf]
        %v966 = vld [vmem:[#allocation2 + $0x60] sm:$0xf]
        %v967 = vld [vmem:[#allocation2 + $0x64] sm:$0xf]
        %v968 = vld [vmem:[#allocation2 + $0x6c] sm:$0xf]
        %v969 = vld [vmem:[#allocation2 + $0x70] sm:$0xf]
        %v970 = vld [vmem:[#allocation2 + $0x78] sm:$0xf]
        %v971 = vld [vmem:[#allocation2 + $0x7c] sm:$0xf]
        %v972 = vld [vmem:[#allocation2 + $0x84] sm:$0xf]
        %v973 = vld [vmem:[#allocation2 + $0x88] sm:$0xf]
        %v974 = vld [vmem:[#allocation2 + $0x90] sm:$0xf]
        %v975 = vld [vmem:[#allocation2 + $0x94] sm:$0xf]
        %v976 = vld [vmem:[#allocation2 + $0x9c] sm:$0xf]
        %v977 = vld [vmem:[#allocation2 + $0xa0] sm:$0xf]
        %v978 = vld [vmem:[#allocation2 + $0xa8] sm:$0xf]
        %v979 = vld [vmem:[#allocation2 + $0xac] sm:$0xf]
        %v980 = vld [vmem:[#allocation2 + $0xb4] sm:$0xf]
        %v981 = vld [vmem:[#allocation2 + $0xb8] sm:$0xf]
        %v982 = vld [vmem:[#allocation2 + $0x8] sm:$0x1]
        %v983 = vld [vmem:[#allocation2 + $0x14] sm:$0x1]
        %v984 = vld [vmem:[#allocation2 + $0x20] sm:$0x1]
        %v985 = vld [vmem:[#allocation2 + $0x2c] sm:$0x1]
        %v986 = vld [vmem:[#allocation2 + $0x38] sm:$0x1]
        %v987 = vld [vmem:[#allocation2 + $0x44] sm:$0x1]
        %v988 = vld [vmem:[#allocation2 + $0x50] sm:$0x1]
        %v989 = vld [vmem:[#allocation2 + $0x5c] sm:$0x1]
        %v990 = vld [vmem:[#allocation2 + $0x68] sm:$0x1]
        %v991 = vld [vmem:[#allocation2 + $0x74] sm:$0x1]
        %v992 = vld [vmem:[#allocation2 + $0x80] sm:$0x1]
        %v993 = vld [vmem:[#allocation2 + $0x8c] sm:$0x1]
        %v994 = vld [vmem:[#allocation2 + $0x98] sm:$0x1]
        %v995 = vld [vmem:[#allocation2 + $0xa4] sm:$0x1]
        %v996 = vld [vmem:[#allocation2 + $0xb0] sm:$0x1]
        %v997 = vld [vmem:[#allocation2 + $0xbc] sm:$0x1]
        %v998 = vld [vmem:[#allocation2] sm:$0xe]
        %v999 = vld [vmem:[#allocation2 + $0xc] sm:$0xe]
        %v1000 = vld [vmem:[#allocation2 + $0x18] sm:$0xe]
        %v1001 = vld [vmem:[#allocation2 + $0x24] sm:$0xe]
        %v1002 = vld [vmem:[#allocation2 + $0x30] sm:$0xe]
        %v1003 = vld [vmem:[#allocation2 + $0x3c] sm:$0xe]
        %v1004 = vld [vmem:[#allocation2 + $0x48] sm:$0xe]
        %v1005 = vld [vmem:[#allocation2 + $0x54] sm:$0xe]
        %v1006 = vld [vmem:[#allocation2 + $0x60] sm:$0xe]
        %v1007 = vld [vmem:[#allocation2 + $0x6c] sm:$0xe]
        %v1008 = vld [vmem:[#allocation2 + $0x78] sm:$0xe]
        %v1009 = vld [vmem:[#allocation2 + $0x84] sm:$0xe]
        %v1010 = vld [vmem:[#allocation2 + $0x90] sm:$0xe]
        %v1011 = vld [vmem:[#allocation2 + $0x9c] sm:$0xe]
        %v1012 = vld [vmem:[#allocation2 + $0xa8] sm:$0xe]
        %v1013 = vld [vmem:[#allocation2 + $0xb4] sm:$0xe]
        %v1014 = vld [vmem:[%s835] sm:$0xf]
        %v1015 = vld [vmem:[%s835 + $0x4] sm:$0xf]
        %v1016 = vld [vmem:[%s835 + $0xc] sm:$0xf]
        %v1017 = vld [vmem:[%s835 + $0x10] sm:$0xf]
        %v1018 = vld [vmem:[%s835 + $0x18] sm:$0xf]
        %v1019 = vld [vmem:[%s835 + $0x1c] sm:$0xf]
        %v1020 = vld [vmem:[%s835 + $0x24] sm:$0xf]
        %v1021 = vld [vmem:[%s835 + $0x28] sm:$0xf]
        %v1022 = vld [vmem:[%s835 + $0x30] sm:$0xf]
        %v1023 = vld [vmem:[%s835 + $0x34] sm:$0xf]
        %v1024 = vld [vmem:[%s835 + $0x3c] sm:$0xf]
        %v1025 = vld [vmem:[%s835 + $0x40] sm:$0xf]
        %v1026 = vld [vmem:[%s835 + $0x48] sm:$0xf]
        %v1027 = vld [vmem:[%s835 + $0x4c] sm:$0xf]
        %v1028 = vld [vmem:[%s835 + $0x54] sm:$0xf]
        %v1029 = vld [vmem:[%s835 + $0x58] sm:$0xf]
        %v1030 = vld [vmem:[%s835 + $0x60] sm:$0xf]
        %v1031 = vld [vmem:[%s835 + $0x64] sm:$0xf]
        %v1032 = vld [vmem:[%s835 + $0x6c] sm:$0xf]
        %v1033 = vld [vmem:[%s835 + $0x70] sm:$0xf]
        %v1034 = vld [vmem:[%s835 + $0x78] sm:$0xf]
        %v1035 = vld [vmem:[%s835 + $0x7c] sm:$0xf]
        %v1036 = vld [vmem:[%s835 + $0x84] sm:$0xf]
        %v1037 = vld [vmem:[%s835 + $0x88] sm:$0xf]
        %v1038 = vld [vmem:[%s835 + $0x90] sm:$0xf]
        %v1039 = vld [vmem:[%s835 + $0x94] sm:$0xf]
        %v1040 = vld [vmem:[%s835 + $0x9c] sm:$0xf]
        %v1041 = vld [vmem:[%s835 + $0xa0] sm:$0xf]
        %v1042 = vld [vmem:[%s835 + $0xa8] sm:$0xf]
        %v1043 = vld [vmem:[%s835 + $0xac] sm:$0xf]
        %v1044 = vld [vmem:[%s835 + $0xb4] sm:$0xf]
        %v1045 = vld [vmem:[%s835 + $0xb8] sm:$0xf]
        %v1046 = vld [vmem:[%s835 + $0x8] sm:$0x1]
        %v1047 = vld [vmem:[%s835 + $0x14] sm:$0x1]
        %v1048 = vld [vmem:[%s835 + $0x20] sm:$0x1]
        %v1049 = vld [vmem:[%s835 + $0x2c] sm:$0x1]
        %v1050 = vld [vmem:[%s835 + $0x38] sm:$0x1]
        %v1051 = vld [vmem:[%s835 + $0x44] sm:$0x1]
        %v1052 = vld [vmem:[%s835 + $0x50] sm:$0x1]
        %v1053 = vld [vmem:[%s835 + $0x5c] sm:$0x1]
        %v1054 = vld [vmem:[%s835 + $0x68] sm:$0x1]
        %v1055 = vld [vmem:[%s835 + $0x74] sm:$0x1]
        %v1056 = vld [vmem:[%s835 + $0x80] sm:$0x1]
        %v1057 = vld [vmem:[%s835 + $0x8c] sm:$0x1]
        %v1058 = vld [vmem:[%s835 + $0x98] sm:$0x1]
        %v1059 = vld [vmem:[%s835 + $0xa4] sm:$0x1]
        %v1060 = vld [vmem:[%s835 + $0xb0] sm:$0x1]
        %v1061 = vld [vmem:[%s835 + $0xbc] sm:$0x1]
        %v1062 = vld [vmem:[%s835] sm:$0xe]
        %v1063 = vld [vmem:[%s835 + $0xc] sm:$0xe]
        %v1064 = vld [vmem:[%s835 + $0x18] sm:$0xe]
        %v1065 = vld [vmem:[%s835 + $0x24] sm:$0xe]
        %v1066 = vld [vmem:[%s835 + $0x30] sm:$0xe]
        %v1067 = vld [vmem:[%s835 + $0x3c] sm:$0xe]
        %v1068 = vld [vmem:[%s835 + $0x48] sm:$0xe]
        %v1069 = vld [vmem:[%s835 + $0x54] sm:$0xe]
        %v1070 = vld [vmem:[%s835 + $0x60] sm:$0xe]
        %v1071 = vld [vmem:[%s835 + $0x6c] sm:$0xe]
        %v1072 = vld [vmem:[%s835 + $0x78] sm:$0xe]
        %v1073 = vld [vmem:[%s835 + $0x84] sm:$0xe]
        %v1074 = vld [vmem:[%s835 + $0x90] sm:$0xe]
        %v1075 = vld [vmem:[%s835 + $0x9c] sm:$0xe]
        %v1076 = vld [vmem:[%s835 + $0xa8] sm:$0xe]
        %v1077 = vld [vmem:[%s835 + $0xb4] sm:$0xe]
        %s1078 = scalar_lea.vmem [#allocation2], 24
        %v1079 = vld [vmem:[%s1078] sm:$0xf]
        %v1080 = vld [vmem:[%s1078 + $0x4] sm:$0xf]
        %v1081 = vld [vmem:[%s1078 + $0xc] sm:$0xf]
        %v1082 = vld [vmem:[%s1078 + $0x10] sm:$0xf]
        %v1083 = vld [vmem:[%s1078 + $0x18] sm:$0xf]
        %v1084 = vld [vmem:[%s1078 + $0x1c] sm:$0xf]
        %v1085 = vld [vmem:[%s1078 + $0x24] sm:$0xf]
        %v1086 = vld [vmem:[%s1078 + $0x28] sm:$0xf]
        %v1087 = vld [vmem:[%s1078 + $0x30] sm:$0xf]
        %v1088 = vld [vmem:[%s1078 + $0x34] sm:$0xf]
        %v1089 = vld [vmem:[%s1078 + $0x3c] sm:$0xf]
        %v1090 = vld [vmem:[%s1078 + $0x40] sm:$0xf]
        %v1091 = vld [vmem:[%s1078 + $0x48] sm:$0xf]
        %v1092 = vld [vmem:[%s1078 + $0x4c] sm:$0xf]
        %v1093 = vld [vmem:[%s1078 + $0x54] sm:$0xf]
        %v1094 = vld [vmem:[%s1078 + $0x58] sm:$0xf]
        %v1095 = vld [vmem:[%s1078 + $0x60] sm:$0xf]
        %v1096 = vld [vmem:[%s1078 + $0x64] sm:$0xf]
        %v1097 = vld [vmem:[%s1078 + $0x6c] sm:$0xf]
        %v1098 = vld [vmem:[%s1078 + $0x70] sm:$0xf]
        %v1099 = vld [vmem:[%s1078 + $0x78] sm:$0xf]
        %v1100 = vld [vmem:[%s1078 + $0x7c] sm:$0xf]
        %v1101 = vld [vmem:[%s1078 + $0x84] sm:$0xf]
        %v1102 = vld [vmem:[%s1078 + $0x88] sm:$0xf]
        %v1103 = vld [vmem:[%s1078 + $0x90] sm:$0xf]
        %v1104 = vld [vmem:[%s1078 + $0x94] sm:$0xf]
        %v1105 = vld [vmem:[%s1078 + $0x9c] sm:$0xf]
        %v1106 = vld [vmem:[%s1078 + $0xa0] sm:$0xf]
        %v1107 = vld [vmem:[%s1078 + $0xa8] sm:$0xf]
        %v1108 = vld [vmem:[%s1078 + $0xac] sm:$0xf]
        %v1109 = vld [vmem:[%s1078 + $0xb4] sm:$0xf]
        %v1110 = vld [vmem:[%s1078 + $0xb8] sm:$0xf]
        %v1111 = vld [vmem:[%s1078 + $0x8] sm:$0x1]
        %v1112 = vld [vmem:[%s1078 + $0x14] sm:$0x1]
        %v1113 = vld [vmem:[%s1078 + $0x20] sm:$0x1]
        %v1114 = vld [vmem:[%s1078 + $0x2c] sm:$0x1]
        %v1115 = vld [vmem:[%s1078 + $0x38] sm:$0x1]
        %v1116 = vld [vmem:[%s1078 + $0x44] sm:$0x1]
        %v1117 = vld [vmem:[%s1078 + $0x50] sm:$0x1]
        %v1118 = vld [vmem:[%s1078 + $0x5c] sm:$0x1]
        %v1119 = vld [vmem:[%s1078 + $0x68] sm:$0x1]
        %v1120 = vld [vmem:[%s1078 + $0x74] sm:$0x1]
        %v1121 = vld [vmem:[%s1078 + $0x80] sm:$0x1]
        %v1122 = vld [vmem:[%s1078 + $0x8c] sm:$0x1]
        %v1123 = vld [vmem:[%s1078 + $0x98] sm:$0x1]
        %v1124 = vld [vmem:[%s1078 + $0xa4] sm:$0x1]
        %v1125 = vld [vmem:[%s1078 + $0xb0] sm:$0x1]
        %v1126 = vld [vmem:[%s1078 + $0xbc] sm:$0x1]
        %v1127 = vld [vmem:[%s1078] sm:$0xe]
        %v1128 = vld [vmem:[%s1078 + $0xc] sm:$0xe]
        %v1129 = vld [vmem:[%s1078 + $0x18] sm:$0xe]
        %v1130 = vld [vmem:[%s1078 + $0x24] sm:$0xe]
        %v1131 = vld [vmem:[%s1078 + $0x30] sm:$0xe]
        %v1132 = vld [vmem:[%s1078 + $0x3c] sm:$0xe]
        %v1133 = vld [vmem:[%s1078 + $0x48] sm:$0xe]
        %v1134 = vld [vmem:[%s1078 + $0x54] sm:$0xe]
        %v1135 = vld [vmem:[%s1078 + $0x60] sm:$0xe]
        %v1136 = vld [vmem:[%s1078 + $0x6c] sm:$0xe]
        %v1137 = vld [vmem:[%s1078 + $0x78] sm:$0xe]
        %v1138 = vld [vmem:[%s1078 + $0x84] sm:$0xe]
        %v1139 = vld [vmem:[%s1078 + $0x90] sm:$0xe]
        %v1140 = vld [vmem:[%s1078 + $0x9c] sm:$0xe]
        %v1141 = vld [vmem:[%s1078 + $0xa8] sm:$0xe]
        %v1142 = vld [vmem:[%s1078 + $0xb4] sm:$0xe]
        %v1175 = vunpack.c.l.b16 %v950
        %v1176 = vunpack.c.l.b16 %v951
        %v1177 = vunpack.c.l.b16 %v952
        %v1178 = vunpack.c.l.b16 %v953
        %v1179 = vunpack.c.l.b16 %v954
        %v1180 = vunpack.c.l.b16 %v955
        %v1181 = vunpack.c.l.b16 %v956
        %v1182 = vunpack.c.l.b16 %v957
        %v1183 = vunpack.c.l.b16 %v958
        %v1184 = vunpack.c.l.b16 %v959
        %v1185 = vunpack.c.l.b16 %v960
        %v1186 = vunpack.c.l.b16 %v961
        %v1187 = vunpack.c.l.b16 %v962
        %v1188 = vunpack.c.l.b16 %v963
        %v1189 = vunpack.c.l.b16 %v964
        %v1190 = vunpack.c.l.b16 %v965
        %v1191 = vunpack.c.l.b16 %v966
        %v1192 = vunpack.c.l.b16 %v967
        %v1193 = vunpack.c.l.b16 %v968
        %v1194 = vunpack.c.l.b16 %v969
        %v1195 = vunpack.c.l.b16 %v970
        %v1196 = vunpack.c.l.b16 %v971
        %v1197 = vunpack.c.l.b16 %v972
        %v1198 = vunpack.c.l.b16 %v973
        %v1199 = vunpack.c.l.b16 %v974
        %v1200 = vunpack.c.l.b16 %v975
        %v1201 = vunpack.c.l.b16 %v976
        %v1202 = vunpack.c.l.b16 %v977
        %v1203 = vunpack.c.l.b16 %v978
        %v1204 = vunpack.c.l.b16 %v979
        %v1205 = vunpack.c.l.b16 %v980
        %v1206 = vunpack.c.l.b16 %v981
        %v1207 = vpack.c.b16 %v1176, %v1175
        %v1208 = vpack.c.b16 %v1178, %v1177
        %v1209 = vpack.c.b16 %v1180, %v1179
        %v1210 = vpack.c.b16 %v1182, %v1181
        %v1211 = vpack.c.b16 %v1184, %v1183
        %v1212 = vpack.c.b16 %v1186, %v1185
        %v1213 = vpack.c.b16 %v1188, %v1187
        %v1214 = vpack.c.b16 %v1190, %v1189
        %v1215 = vpack.c.b16 %v1192, %v1191
        %v1216 = vpack.c.b16 %v1194, %v1193
        %v1217 = vpack.c.b16 %v1196, %v1195
        %v1218 = vpack.c.b16 %v1198, %v1197
        %v1219 = vpack.c.b16 %v1200, %v1199
        %v1220 = vpack.c.b16 %v1202, %v1201
        %v1221 = vpack.c.b16 %v1204, %v1203
        %v1222 = vpack.c.b16 %v1206, %v1205
        %v1239 = vunpack.c.l.b16 %v982
        %v1240 = vunpack.c.l.b16 %v983
        %v1241 = vunpack.c.l.b16 %v984
        %v1242 = vunpack.c.l.b16 %v985
        %v1243 = vunpack.c.l.b16 %v986
        %v1244 = vunpack.c.l.b16 %v987
        %v1245 = vunpack.c.l.b16 %v988
        %v1246 = vunpack.c.l.b16 %v989
        %v1247 = vunpack.c.l.b16 %v990
        %v1248 = vunpack.c.l.b16 %v991
        %v1249 = vunpack.c.l.b16 %v992
        %v1250 = vunpack.c.l.b16 %v993
        %v1251 = vunpack.c.l.b16 %v994
        %v1252 = vunpack.c.l.b16 %v995
        %v1253 = vunpack.c.l.b16 %v996
        %v1254 = vunpack.c.l.b16 %v997
        %v1255 = vpack.c.b16 %v1239, %v1239
        %v1256 = vpack.c.b16 %v1240, %v1240
        %v1257 = vpack.c.b16 %v1241, %v1241
        %v1258 = vpack.c.b16 %v1242, %v1242
        %v1259 = vpack.c.b16 %v1243, %v1243
        %v1260 = vpack.c.b16 %v1244, %v1244
        %v1261 = vpack.c.b16 %v1245, %v1245
        %v1262 = vpack.c.b16 %v1246, %v1246
        %v1263 = vpack.c.b16 %v1247, %v1247
        %v1264 = vpack.c.b16 %v1248, %v1248
        %v1265 = vpack.c.b16 %v1249, %v1249
        %v1266 = vpack.c.b16 %v1250, %v1250
        %v1267 = vpack.c.b16 %v1251, %v1251
        %v1268 = vpack.c.b16 %v1252, %v1252
        %v1269 = vpack.c.b16 %v1253, %v1253
        %v1270 = vpack.c.b16 %v1254, %v1254
        %vm1271 = vsmask.f32 7424
        %v1273 = vshrl.u32 %v1207, 16
        %v1275 = vshll.u32 %v1207, 16
        %v1277 = vrot.slane %v1275, 1
        %v1278 = vor.u32 %v1273, %v1277
        %v1280 = vshll.u32 %v1255, 16
        %v1282 = vrot.slane %v1280, 1
        %v1283 = vsel %vm1271, %v1278, %v1282
        %v1285 = vshrl.u32 %v1208, 16
        %v1287 = vshll.u32 %v1208, 16
        %v1289 = vrot.slane %v1287, 1
        %v1290 = vor.u32 %v1285, %v1289
        %v1292 = vshll.u32 %v1256, 16
        %v1294 = vrot.slane %v1292, 1
        %v1295 = vsel %vm1271, %v1290, %v1294
        %v1297 = vshrl.u32 %v1209, 16
        %v1299 = vshll.u32 %v1209, 16
        %v1301 = vrot.slane %v1299, 1
        %v1302 = vor.u32 %v1297, %v1301
        %v1304 = vshll.u32 %v1257, 16
        %v1306 = vrot.slane %v1304, 1
        %v1307 = vsel %vm1271, %v1302, %v1306
        %v1309 = vshrl.u32 %v1210, 16
        %v1311 = vshll.u32 %v1210, 16
        %v1313 = vrot.slane %v1311, 1
        %v1314 = vor.u32 %v1309, %v1313
        %v1316 = vshll.u32 %v1258, 16
        %v1318 = vrot.slane %v1316, 1
        %v1319 = vsel %vm1271, %v1314, %v1318
        %v1321 = vshrl.u32 %v1211, 16
        %v1323 = vshll.u32 %v1211, 16
        %v1325 = vrot.slane %v1323, 1
        %v1326 = vor.u32 %v1321, %v1325
        %v1328 = vshll.u32 %v1259, 16
        %v1330 = vrot.slane %v1328, 1
        %v1331 = vsel %vm1271, %v1326, %v1330
        %v1333 = vshrl.u32 %v1212, 16
        %v1335 = vshll.u32 %v1212, 16
        %v1337 = vrot.slane %v1335, 1
        %v1338 = vor.u32 %v1333, %v1337
        %v1340 = vshll.u32 %v1260, 16
        %v1342 = vrot.slane %v1340, 1
        %v1343 = vsel %vm1271, %v1338, %v1342
        %v1345 = vshrl.u32 %v1213, 16
        %v1347 = vshll.u32 %v1213, 16
        %v1349 = vrot.slane %v1347, 1
        %v1350 = vor.u32 %v1345, %v1349
        %v1352 = vshll.u32 %v1261, 16
        %v1354 = vrot.slane %v1352, 1
        %v1355 = vsel %vm1271, %v1350, %v1354
        %v1357 = vshrl.u32 %v1214, 16
        %v1359 = vshll.u32 %v1214, 16
        %v1361 = vrot.slane %v1359, 1
        %v1362 = vor.u32 %v1357, %v1361
        %v1364 = vshll.u32 %v1262, 16
        %v1366 = vrot.slane %v1364, 1
        %v1367 = vsel %vm1271, %v1362, %v1366
        %v1369 = vshrl.u32 %v1215, 16
        %v1371 = vshll.u32 %v1215, 16
        %v1373 = vrot.slane %v1371, 1
        %v1374 = vor.u32 %v1369, %v1373
        %v1376 = vshll.u32 %v1263, 16
        %v1378 = vrot.slane %v1376, 1
        %v1379 = vsel %vm1271, %v1374, %v1378
        %v1381 = vshrl.u32 %v1216, 16
        %v1383 = vshll.u32 %v1216, 16
        %v1385 = vrot.slane %v1383, 1
        %v1386 = vor.u32 %v1381, %v1385
        %v1388 = vshll.u32 %v1264, 16
        %v1390 = vrot.slane %v1388, 1
        %v1391 = vsel %vm1271, %v1386, %v1390
        %v1393 = vshrl.u32 %v1217, 16
        %v1395 = vshll.u32 %v1217, 16
        %v1397 = vrot.slane %v1395, 1
        %v1398 = vor.u32 %v1393, %v1397
        %v1400 = vshll.u32 %v1265, 16
        %v1402 = vrot.slane %v1400, 1
        %v1403 = vsel %vm1271, %v1398, %v1402
        %v1405 = vshrl.u32 %v1218, 16
        %v1407 = vshll.u32 %v1218, 16
        %v1409 = vrot.slane %v1407, 1
        %v1410 = vor.u32 %v1405, %v1409
        %v1412 = vshll.u32 %v1266, 16
        %v1414 = vrot.slane %v1412, 1
        %v1415 = vsel %vm1271, %v1410, %v1414
        %v1417 = vshrl.u32 %v1219, 16
        %v1419 = vshll.u32 %v1219, 16
        %v1421 = vrot.slane %v1419, 1
        %v1422 = vor.u32 %v1417, %v1421
        %v1424 = vshll.u32 %v1267, 16
        %v1426 = vrot.slane %v1424, 1
        %v1427 = vsel %vm1271, %v1422, %v1426
        %v1429 = vshrl.u32 %v1220, 16
        %v1431 = vshll.u32 %v1220, 16
        %v1433 = vrot.slane %v1431, 1
        %v1434 = vor.u32 %v1429, %v1433
        %v1436 = vshll.u32 %v1268, 16
        %v1438 = vrot.slane %v1436, 1
        %v1439 = vsel %vm1271, %v1434, %v1438
        %v1441 = vshrl.u32 %v1221, 16
        %v1443 = vshll.u32 %v1221, 16
        %v1445 = vrot.slane %v1443, 1
        %v1446 = vor.u32 %v1441, %v1445
        %v1448 = vshll.u32 %v1269, 16
        %v1450 = vrot.slane %v1448, 1
        %v1451 = vsel %vm1271, %v1446, %v1450
        %v1453 = vshrl.u32 %v1222, 16
        %v1455 = vshll.u32 %v1222, 16
        %v1457 = vrot.slane %v1455, 1
        %v1458 = vor.u32 %v1453, %v1457
        %v1460 = vshll.u32 %v1270, 16
        %v1462 = vrot.slane %v1460, 1
        %v1463 = vsel %vm1271, %v1458, %v1462
        %1464 = vrot.lane.b32.xlu0 %v1283, 4
        %v1465 = vpop.permute.xlu0 %1464
        %1466 = vrot.lane.b32.xlu0 %v1295, 4
        %v1467 = vpop.permute.xlu0 %1466
        %1468 = vrot.lane.b32.xlu0 %v1307, 4
        %v1469 = vpop.permute.xlu0 %1468
        %1470 = vrot.lane.b32.xlu0 %v1319, 4
        %v1471 = vpop.permute.xlu0 %1470
        %1472 = vrot.lane.b32.xlu0 %v1331, 4
        %v1473 = vpop.permute.xlu0 %1472
        %1474 = vrot.lane.b32.xlu0 %v1343, 4
        %v1475 = vpop.permute.xlu0 %1474
        %1476 = vrot.lane.b32.xlu0 %v1355, 4
        %v1477 = vpop.permute.xlu0 %1476
        %1478 = vrot.lane.b32.xlu0 %v1367, 4
        %v1479 = vpop.permute.xlu0 %1478
        %1480 = vrot.lane.b32.xlu0 %v1379, 4
        %v1481 = vpop.permute.xlu0 %1480
        %1482 = vrot.lane.b32.xlu0 %v1391, 4
        %v1483 = vpop.permute.xlu0 %1482
        %1484 = vrot.lane.b32.xlu0 %v1403, 4
        %v1485 = vpop.permute.xlu0 %1484
        %1486 = vrot.lane.b32.xlu0 %v1415, 4
        %v1487 = vpop.permute.xlu0 %1486
        %1488 = vrot.lane.b32.xlu0 %v1427, 4
        %v1489 = vpop.permute.xlu0 %1488
        %1490 = vrot.lane.b32.xlu0 %v1439, 4
        %v1491 = vpop.permute.xlu0 %1490
        %1492 = vrot.lane.b32.xlu0 %v1451, 4
        %v1493 = vpop.permute.xlu0 %1492
        %1494 = vrot.lane.b32.xlu0 %v1463, 4
        %v1495 = vpop.permute.xlu0 %1494
        %v1512 = vunpack.c.l.b16 %v998
        %v1513 = vunpack.c.l.b16 %v999
        %v1514 = vunpack.c.l.b16 %v1000
        %v1515 = vunpack.c.l.b16 %v1001
        %v1516 = vunpack.c.l.b16 %v1002
        %v1517 = vunpack.c.l.b16 %v1003
        %v1518 = vunpack.c.l.b16 %v1004
        %v1519 = vunpack.c.l.b16 %v1005
        %v1520 = vunpack.c.l.b16 %v1006
        %v1521 = vunpack.c.l.b16 %v1007
        %v1522 = vunpack.c.l.b16 %v1008
        %v1523 = vunpack.c.l.b16 %v1009
        %v1524 = vunpack.c.l.b16 %v1010
        %v1525 = vunpack.c.l.b16 %v1011
        %v1526 = vunpack.c.l.b16 %v1012
        %v1527 = vunpack.c.l.b16 %v1013
        %v1528 = vpack.c.b16 %v1176, %v1512
        %v1529 = vpack.c.b16 %v1178, %v1513
        %v1530 = vpack.c.b16 %v1180, %v1514
        %v1531 = vpack.c.b16 %v1182, %v1515
        %v1532 = vpack.c.b16 %v1184, %v1516
        %v1533 = vpack.c.b16 %v1186, %v1517
        %v1534 = vpack.c.b16 %v1188, %v1518
        %v1535 = vpack.c.b16 %v1190, %v1519
        %v1536 = vpack.c.b16 %v1192, %v1520
        %v1537 = vpack.c.b16 %v1194, %v1521
        %v1538 = vpack.c.b16 %v1196, %v1522
        %v1539 = vpack.c.b16 %v1198, %v1523
        %v1540 = vpack.c.b16 %v1200, %v1524
        %v1541 = vpack.c.b16 %v1202, %v1525
        %v1542 = vpack.c.b16 %v1204, %v1526
        %v1543 = vpack.c.b16 %v1206, %v1527
        %vm1544 = vcmask 1046528
        %v1545 = vrot.slane %v1528, 1
        %v1546 = vrot.slane %v1255, 1
        %v1547 = vsel %vm1544, %v1545, %v1546
        %v1548 = vrot.slane %v1529, 1
        %v1549 = vrot.slane %v1256, 1
        %v1550 = vsel %vm1544, %v1548, %v1549
        %v1551 = vrot.slane %v1530, 1
        %v1552 = vrot.slane %v1257, 1
        %v1553 = vsel %vm1544, %v1551, %v1552
        %v1554 = vrot.slane %v1531, 1
        %v1555 = vrot.slane %v1258, 1
        %v1556 = vsel %vm1544, %v1554, %v1555
        %v1557 = vrot.slane %v1532, 1
        %v1558 = vrot.slane %v1259, 1
        %v1559 = vsel %vm1544, %v1557, %v1558
        %v1560 = vrot.slane %v1533, 1
        %v1561 = vrot.slane %v1260, 1
        %v1562 = vsel %vm1544, %v1560, %v1561
        %v1563 = vrot.slane %v1534, 1
        %v1564 = vrot.slane %v1261, 1
        %v1565 = vsel %vm1544, %v1563, %v1564
        %v1566 = vrot.slane %v1535, 1
        %v1567 = vrot.slane %v1262, 1
        %v1568 = vsel %vm1544, %v1566, %v1567
        %v1569 = vrot.slane %v1536, 1
        %v1570 = vrot.slane %v1263, 1
        %v1571 = vsel %vm1544, %v1569, %v1570
        %v1572 = vrot.slane %v1537, 1
        %v1573 = vrot.slane %v1264, 1
        %v1574 = vsel %vm1544, %v1572, %v1573
        %v1575 = vrot.slane %v1538, 1
        %v1576 = vrot.slane %v1265, 1
        %v1577 = vsel %vm1544, %v1575, %v1576
        %v1578 = vrot.slane %v1539, 1
        %v1579 = vrot.slane %v1266, 1
        %v1580 = vsel %vm1544, %v1578, %v1579
        %v1581 = vrot.slane %v1540, 1
        %v1582 = vrot.slane %v1267, 1
        %v1583 = vsel %vm1544, %v1581, %v1582
        %v1584 = vrot.slane %v1541, 1
        %v1585 = vrot.slane %v1268, 1
        %v1586 = vsel %vm1544, %v1584, %v1585
        %v1587 = vrot.slane %v1542, 1
        %v1588 = vrot.slane %v1269, 1
        %v1589 = vsel %vm1544, %v1587, %v1588
        %v1590 = vrot.slane %v1543, 1
        %v1591 = vrot.slane %v1270, 1
        %v1592 = vsel %vm1544, %v1590, %v1591
        %1593 = vrot.lane.b32.xlu0 %v1547, 8
        %v1594 = vpop.permute.xlu0 %1593
        %1595 = vrot.lane.b32.xlu0 %v1550, 8
        %v1596 = vpop.permute.xlu0 %1595
        %1597 = vrot.lane.b32.xlu0 %v1553, 8
        %v1598 = vpop.permute.xlu0 %1597
        %1599 = vrot.lane.b32.xlu0 %v1556, 8
        %v1600 = vpop.permute.xlu0 %1599
        %1601 = vrot.lane.b32.xlu0 %v1559, 8
        %v1602 = vpop.permute.xlu0 %1601
        %1603 = vrot.lane.b32.xlu0 %v1562, 8
        %v1604 = vpop.permute.xlu0 %1603
        %1605 = vrot.lane.b32.xlu0 %v1565, 8
        %v1606 = vpop.permute.xlu0 %1605
        %1607 = vrot.lane.b32.xlu0 %v1568, 8
        %v1608 = vpop.permute.xlu0 %1607
        %1609 = vrot.lane.b32.xlu0 %v1571, 8
        %v1610 = vpop.permute.xlu0 %1609
        %1611 = vrot.lane.b32.xlu0 %v1574, 8
        %v1612 = vpop.permute.xlu0 %1611
        %1613 = vrot.lane.b32.xlu0 %v1577, 8
        %v1614 = vpop.permute.xlu0 %1613
        %1615 = vrot.lane.b32.xlu0 %v1580, 8
        %v1616 = vpop.permute.xlu0 %1615
        %1617 = vrot.lane.b32.xlu0 %v1583, 8
        %v1618 = vpop.permute.xlu0 %1617
        %1619 = vrot.lane.b32.xlu0 %v1586, 8
        %v1620 = vpop.permute.xlu0 %1619
        %1621 = vrot.lane.b32.xlu0 %v1589, 8
        %v1622 = vpop.permute.xlu0 %1621
        %1623 = vrot.lane.b32.xlu0 %v1592, 8
        %v1624 = vpop.permute.xlu0 %1623
        %v1657 = vunpack.c.l.b16 %v1014
        %v1658 = vunpack.c.l.b16 %v1015
        %v1659 = vunpack.c.l.b16 %v1016
        %v1660 = vunpack.c.l.b16 %v1017
        %v1661 = vunpack.c.l.b16 %v1018
        %v1662 = vunpack.c.l.b16 %v1019
        %v1663 = vunpack.c.l.b16 %v1020
        %v1664 = vunpack.c.l.b16 %v1021
        %v1665 = vunpack.c.l.b16 %v1022
        %v1666 = vunpack.c.l.b16 %v1023
        %v1667 = vunpack.c.l.b16 %v1024
        %v1668 = vunpack.c.l.b16 %v1025
        %v1669 = vunpack.c.l.b16 %v1026
        %v1670 = vunpack.c.l.b16 %v1027
        %v1671 = vunpack.c.l.b16 %v1028
        %v1672 = vunpack.c.l.b16 %v1029
        %v1673 = vunpack.c.l.b16 %v1030
        %v1674 = vunpack.c.l.b16 %v1031
        %v1675 = vunpack.c.l.b16 %v1032
        %v1676 = vunpack.c.l.b16 %v1033
        %v1677 = vunpack.c.l.b16 %v1034
        %v1678 = vunpack.c.l.b16 %v1035
        %v1679 = vunpack.c.l.b16 %v1036
        %v1680 = vunpack.c.l.b16 %v1037
        %v1681 = vunpack.c.l.b16 %v1038
        %v1682 = vunpack.c.l.b16 %v1039
        %v1683 = vunpack.c.l.b16 %v1040
        %v1684 = vunpack.c.l.b16 %v1041
        %v1685 = vunpack.c.l.b16 %v1042
        %v1686 = vunpack.c.l.b16 %v1043
        %v1687 = vunpack.c.l.b16 %v1044
        %v1688 = vunpack.c.l.b16 %v1045
        %v1689 = vpack.c.b16 %v1658, %v1657
        %v1690 = vpack.c.b16 %v1660, %v1659
        %v1691 = vpack.c.b16 %v1662, %v1661
        %v1692 = vpack.c.b16 %v1664, %v1663
        %v1693 = vpack.c.b16 %v1666, %v1665
        %v1694 = vpack.c.b16 %v1668, %v1667
        %v1695 = vpack.c.b16 %v1670, %v1669
        %v1696 = vpack.c.b16 %v1672, %v1671
        %v1697 = vpack.c.b16 %v1674, %v1673
        %v1698 = vpack.c.b16 %v1676, %v1675
        %v1699 = vpack.c.b16 %v1678, %v1677
        %v1700 = vpack.c.b16 %v1680, %v1679
        %v1701 = vpack.c.b16 %v1682, %v1681
        %v1702 = vpack.c.b16 %v1684, %v1683
        %v1703 = vpack.c.b16 %v1686, %v1685
        %v1704 = vpack.c.b16 %v1688, %v1687
        %1705 = vrot.lane.b32.xlu0 %v1689, 12
        %v1706 = vpop.permute.xlu0 %1705
        %1707 = vrot.lane.b32.xlu0 %v1690, 12
        %v1708 = vpop.permute.xlu0 %1707
        %1709 = vrot.lane.b32.xlu0 %v1691, 12
        %v1710 = vpop.permute.xlu0 %1709
        %1711 = vrot.lane.b32.xlu0 %v1692, 12
        %v1712 = vpop.permute.xlu0 %1711
        %1713 = vrot.lane.b32.xlu0 %v1693, 12
        %v1714 = vpop.permute.xlu0 %1713
        %1715 = vrot.lane.b32.xlu0 %v1694, 12
        %v1716 = vpop.permute.xlu0 %1715
        %1717 = vrot.lane.b32.xlu0 %v1695, 12
        %v1718 = vpop.permute.xlu0 %1717
        %1719 = vrot.lane.b32.xlu0 %v1696, 12
        %v1720 = vpop.permute.xlu0 %1719
        %1721 = vrot.lane.b32.xlu0 %v1697, 12
        %v1722 = vpop.permute.xlu0 %1721
        %1723 = vrot.lane.b32.xlu0 %v1698, 12
        %v1724 = vpop.permute.xlu0 %1723
        %1725 = vrot.lane.b32.xlu0 %v1699, 12
        %v1726 = vpop.permute.xlu0 %1725
        %1727 = vrot.lane.b32.xlu0 %v1700, 12
        %v1728 = vpop.permute.xlu0 %1727
        %1729 = vrot.lane.b32.xlu0 %v1701, 12
        %v1730 = vpop.permute.xlu0 %1729
        %1731 = vrot.lane.b32.xlu0 %v1702, 12
        %v1732 = vpop.permute.xlu0 %1731
        %1733 = vrot.lane.b32.xlu0 %v1703, 12
        %v1734 = vpop.permute.xlu0 %1733
        %1735 = vrot.lane.b32.xlu0 %v1704, 12
        %v1736 = vpop.permute.xlu0 %1735
        %v1753 = vunpack.c.l.b16 %v1046
        %v1754 = vunpack.c.l.b16 %v1047
        %v1755 = vunpack.c.l.b16 %v1048
        %v1756 = vunpack.c.l.b16 %v1049
        %v1757 = vunpack.c.l.b16 %v1050
        %v1758 = vunpack.c.l.b16 %v1051
        %v1759 = vunpack.c.l.b16 %v1052
        %v1760 = vunpack.c.l.b16 %v1053
        %v1761 = vunpack.c.l.b16 %v1054
        %v1762 = vunpack.c.l.b16 %v1055
        %v1763 = vunpack.c.l.b16 %v1056
        %v1764 = vunpack.c.l.b16 %v1057
        %v1765 = vunpack.c.l.b16 %v1058
        %v1766 = vunpack.c.l.b16 %v1059
        %v1767 = vunpack.c.l.b16 %v1060
        %v1768 = vunpack.c.l.b16 %v1061
        %v1769 = vpack.c.b16 %v1753, %v1753
        %v1770 = vpack.c.b16 %v1754, %v1754
        %v1771 = vpack.c.b16 %v1755, %v1755
        %v1772 = vpack.c.b16 %v1756, %v1756
        %v1773 = vpack.c.b16 %v1757, %v1757
        %v1774 = vpack.c.b16 %v1758, %v1758
        %v1775 = vpack.c.b16 %v1759, %v1759
        %v1776 = vpack.c.b16 %v1760, %v1760
        %v1777 = vpack.c.b16 %v1761, %v1761
        %v1778 = vpack.c.b16 %v1762, %v1762
        %v1779 = vpack.c.b16 %v1763, %v1763
        %v1780 = vpack.c.b16 %v1764, %v1764
        %v1781 = vpack.c.b16 %v1765, %v1765
        %v1782 = vpack.c.b16 %v1766, %v1766
        %v1783 = vpack.c.b16 %v1767, %v1767
        %v1784 = vpack.c.b16 %v1768, %v1768
        %v1786 = vshrl.u32 %v1689, 16
        %v1788 = vshll.u32 %v1689, 16
        %v1790 = vrot.slane %v1788, 1
        %v1791 = vor.u32 %v1786, %v1790
        %v1793 = vshll.u32 %v1769, 16
        %v1795 = vrot.slane %v1793, 1
        %v1796 = vsel %vm1271, %v1791, %v1795
        %v1798 = vshrl.u32 %v1690, 16
        %v1800 = vshll.u32 %v1690, 16
        %v1802 = vrot.slane %v1800, 1
        %v1803 = vor.u32 %v1798, %v1802
        %v1805 = vshll.u32 %v1770, 16
        %v1807 = vrot.slane %v1805, 1
        %v1808 = vsel %vm1271, %v1803, %v1807
        %v1810 = vshrl.u32 %v1691, 16
        %v1812 = vshll.u32 %v1691, 16
        %v1814 = vrot.slane %v1812, 1
        %v1815 = vor.u32 %v1810, %v1814
        %v1817 = vshll.u32 %v1771, 16
        %v1819 = vrot.slane %v1817, 1
        %v1820 = vsel %vm1271, %v1815, %v1819
        %v1822 = vshrl.u32 %v1692, 16
        %v1824 = vshll.u32 %v1692, 16
        %v1826 = vrot.slane %v1824, 1
        %v1827 = vor.u32 %v1822, %v1826
        %v1829 = vshll.u32 %v1772, 16
        %v1831 = vrot.slane %v1829, 1
        %v1832 = vsel %vm1271, %v1827, %v1831
        %v1834 = vshrl.u32 %v1693, 16
        %v1836 = vshll.u32 %v1693, 16
        %v1838 = vrot.slane %v1836, 1
        %v1839 = vor.u32 %v1834, %v1838
        %v1841 = vshll.u32 %v1773, 16
        %v1843 = vrot.slane %v1841, 1
        %v1844 = vsel %vm1271, %v1839, %v1843
        %v1846 = vshrl.u32 %v1694, 16
        %v1848 = vshll.u32 %v1694, 16
        %v1850 = vrot.slane %v1848, 1
        %v1851 = vor.u32 %v1846, %v1850
        %v1853 = vshll.u32 %v1774, 16
        %v1855 = vrot.slane %v1853, 1
        %v1856 = vsel %vm1271, %v1851, %v1855
        %v1858 = vshrl.u32 %v1695, 16
        %v1860 = vshll.u32 %v1695, 16
        %v1862 = vrot.slane %v1860, 1
        %v1863 = vor.u32 %v1858, %v1862
        %v1865 = vshll.u32 %v1775, 16
        %v1867 = vrot.slane %v1865, 1
        %v1868 = vsel %vm1271, %v1863, %v1867
        %v1870 = vshrl.u32 %v1696, 16
        %v1872 = vshll.u32 %v1696, 16
        %v1874 = vrot.slane %v1872, 1
        %v1875 = vor.u32 %v1870, %v1874
        %v1877 = vshll.u32 %v1776, 16
        %v1879 = vrot.slane %v1877, 1
        %v1880 = vsel %vm1271, %v1875, %v1879
        %v1882 = vshrl.u32 %v1697, 16
        %v1884 = vshll.u32 %v1697, 16
        %v1886 = vrot.slane %v1884, 1
        %v1887 = vor.u32 %v1882, %v1886
        %v1889 = vshll.u32 %v1777, 16
        %v1891 = vrot.slane %v1889, 1
        %v1892 = vsel %vm1271, %v1887, %v1891
        %v1894 = vshrl.u32 %v1698, 16
        %v1896 = vshll.u32 %v1698, 16
        %v1898 = vrot.slane %v1896, 1
        %v1899 = vor.u32 %v1894, %v1898
        %v1901 = vshll.u32 %v1778, 16
        %v1903 = vrot.slane %v1901, 1
        %v1904 = vsel %vm1271, %v1899, %v1903
        %v1906 = vshrl.u32 %v1699, 16
        %v1908 = vshll.u32 %v1699, 16
        %v1910 = vrot.slane %v1908, 1
        %v1911 = vor.u32 %v1906, %v1910
        %v1913 = vshll.u32 %v1779, 16
        %v1915 = vrot.slane %v1913, 1
        %v1916 = vsel %vm1271, %v1911, %v1915
        %v1918 = vshrl.u32 %v1700, 16
        %v1920 = vshll.u32 %v1700, 16
        %v1922 = vrot.slane %v1920, 1
        %v1923 = vor.u32 %v1918, %v1922
        %v1925 = vshll.u32 %v1780, 16
        %v1927 = vrot.slane %v1925, 1
        %v1928 = vsel %vm1271, %v1923, %v1927
        %v1930 = vshrl.u32 %v1701, 16
        %v1932 = vshll.u32 %v1701, 16
        %v1934 = vrot.slane %v1932, 1
        %v1935 = vor.u32 %v1930, %v1934
        %v1937 = vshll.u32 %v1781, 16
        %v1939 = vrot.slane %v1937, 1
        %v1940 = vsel %vm1271, %v1935, %v1939
        %v1942 = vshrl.u32 %v1702, 16
        %v1944 = vshll.u32 %v1702, 16
        %v1946 = vrot.slane %v1944, 1
        %v1947 = vor.u32 %v1942, %v1946
        %v1949 = vshll.u32 %v1782, 16
        %v1951 = vrot.slane %v1949, 1
        %v1952 = vsel %vm1271, %v1947, %v1951
        %v1954 = vshrl.u32 %v1703, 16
        %v1956 = vshll.u32 %v1703, 16
        %v1958 = vrot.slane %v1956, 1
        %v1959 = vor.u32 %v1954, %v1958
        %v1961 = vshll.u32 %v1783, 16
        %v1963 = vrot.slane %v1961, 1
        %v1964 = vsel %vm1271, %v1959, %v1963
        %v1966 = vshrl.u32 %v1704, 16
        %v1968 = vshll.u32 %v1704, 16
        %v1970 = vrot.slane %v1968, 1
        %v1971 = vor.u32 %v1966, %v1970
        %v1973 = vshll.u32 %v1784, 16
        %v1975 = vrot.slane %v1973, 1
        %v1976 = vsel %vm1271, %v1971, %v1975
        %1977 = vrot.lane.b32.xlu0 %v1796, 16
        %v1978 = vpop.permute.xlu0 %1977
        %1979 = vrot.lane.b32.xlu0 %v1808, 16
        %v1980 = vpop.permute.xlu0 %1979
        %1981 = vrot.lane.b32.xlu0 %v1820, 16
        %v1982 = vpop.permute.xlu0 %1981
        %1983 = vrot.lane.b32.xlu0 %v1832, 16
        %v1984 = vpop.permute.xlu0 %1983
        %1985 = vrot.lane.b32.xlu0 %v1844, 16
        %v1986 = vpop.permute.xlu0 %1985
        %1987 = vrot.lane.b32.xlu0 %v1856, 16
        %v1988 = vpop.permute.xlu0 %1987
        %1989 = vrot.lane.b32.xlu0 %v1868, 16
        %v1990 = vpop.permute.xlu0 %1989
        %1991 = vrot.lane.b32.xlu0 %v1880, 16
        %v1992 = vpop.permute.xlu0 %1991
        %1993 = vrot.lane.b32.xlu0 %v1892, 16
        %v1994 = vpop.permute.xlu0 %1993
        %1995 = vrot.lane.b32.xlu0 %v1904, 16
        %v1996 = vpop.permute.xlu0 %1995
        %1997 = vrot.lane.b32.xlu0 %v1916, 16
        %v1998 = vpop.permute.xlu0 %1997
        %1999 = vrot.lane.b32.xlu0 %v1928, 16
        %v2000 = vpop.permute.xlu0 %1999
        %2001 = vrot.lane.b32.xlu0 %v1940, 16
        %v2002 = vpop.permute.xlu0 %2001
        %2003 = vrot.lane.b32.xlu0 %v1952, 16
        %v2004 = vpop.permute.xlu0 %2003
        %2005 = vrot.lane.b32.xlu0 %v1964, 16
        %v2006 = vpop.permute.xlu0 %2005
        %2007 = vrot.lane.b32.xlu0 %v1976, 16
        %v2008 = vpop.permute.xlu0 %2007
        %v2025 = vunpack.c.l.b16 %v1062
        %v2026 = vunpack.c.l.b16 %v1063
        %v2027 = vunpack.c.l.b16 %v1064
        %v2028 = vunpack.c.l.b16 %v1065
        %v2029 = vunpack.c.l.b16 %v1066
        %v2030 = vunpack.c.l.b16 %v1067
        %v2031 = vunpack.c.l.b16 %v1068
        %v2032 = vunpack.c.l.b16 %v1069
        %v2033 = vunpack.c.l.b16 %v1070
        %v2034 = vunpack.c.l.b16 %v1071
        %v2035 = vunpack.c.l.b16 %v1072
        %v2036 = vunpack.c.l.b16 %v1073
        %v2037 = vunpack.c.l.b16 %v1074
        %v2038 = vunpack.c.l.b16 %v1075
        %v2039 = vunpack.c.l.b16 %v1076
        %v2040 = vunpack.c.l.b16 %v1077
        %v2041 = vpack.c.b16 %v1658, %v2025
        %v2042 = vpack.c.b16 %v1660, %v2026
        %v2043 = vpack.c.b16 %v1662, %v2027
        %v2044 = vpack.c.b16 %v1664, %v2028
        %v2045 = vpack.c.b16 %v1666, %v2029
        %v2046 = vpack.c.b16 %v1668, %v2030
        %v2047 = vpack.c.b16 %v1670, %v2031
        %v2048 = vpack.c.b16 %v1672, %v2032
        %v2049 = vpack.c.b16 %v1674, %v2033
        %v2050 = vpack.c.b16 %v1676, %v2034
        %v2051 = vpack.c.b16 %v1678, %v2035
        %v2052 = vpack.c.b16 %v1680, %v2036
        %v2053 = vpack.c.b16 %v1682, %v2037
        %v2054 = vpack.c.b16 %v1684, %v2038
        %v2055 = vpack.c.b16 %v1686, %v2039
        %v2056 = vpack.c.b16 %v1688, %v2040
        %v2057 = vrot.slane %v2041, 1
        %v2058 = vrot.slane %v1769, 1
        %v2059 = vsel %vm1544, %v2057, %v2058
        %v2060 = vrot.slane %v2042, 1
        %v2061 = vrot.slane %v1770, 1
        %v2062 = vsel %vm1544, %v2060, %v2061
        %v2063 = vrot.slane %v2043, 1
        %v2064 = vrot.slane %v1771, 1
        %v2065 = vsel %vm1544, %v2063, %v2064
        %v2066 = vrot.slane %v2044, 1
        %v2067 = vrot.slane %v1772, 1
        %v2068 = vsel %vm1544, %v2066, %v2067
        %v2069 = vrot.slane %v2045, 1
        %v2070 = vrot.slane %v1773, 1
        %v2071 = vsel %vm1544, %v2069, %v2070
        %v2072 = vrot.slane %v2046, 1
        %v2073 = vrot.slane %v1774, 1
        %v2074 = vsel %vm1544, %v2072, %v2073
        %v2075 = vrot.slane %v2047, 1
        %v2076 = vrot.slane %v1775, 1
        %v2077 = vsel %vm1544, %v2075, %v2076
        %v2078 = vrot.slane %v2048, 1
        %v2079 = vrot.slane %v1776, 1
        %v2080 = vsel %vm1544, %v2078, %v2079
        %v2081 = vrot.slane %v2049, 1
        %v2082 = vrot.slane %v1777, 1
        %v2083 = vsel %vm1544, %v2081, %v2082
        %v2084 = vrot.slane %v2050, 1
        %v2085 = vrot.slane %v1778, 1
        %v2086 = vsel %vm1544, %v2084, %v2085
        %v2087 = vrot.slane %v2051, 1
        %v2088 = vrot.slane %v1779, 1
        %v2089 = vsel %vm1544, %v2087, %v2088
        %v2090 = vrot.slane %v2052, 1
        %v2091 = vrot.slane %v1780, 1
        %v2092 = vsel %vm1544, %v2090, %v2091
        %v2093 = vrot.slane %v2053, 1
        %v2094 = vrot.slane %v1781, 1
        %v2095 = vsel %vm1544, %v2093, %v2094
        %v2096 = vrot.slane %v2054, 1
        %v2097 = vrot.slane %v1782, 1
        %v2098 = vsel %vm1544, %v2096, %v2097
        %v2099 = vrot.slane %v2055, 1
        %v2100 = vrot.slane %v1783, 1
        %v2101 = vsel %vm1544, %v2099, %v2100
        %v2102 = vrot.slane %v2056, 1
        %v2103 = vrot.slane %v1784, 1
        %v2104 = vsel %vm1544, %v2102, %v2103
        %2105 = vrot.lane.b32.xlu0 %v2059, 20
        %v2106 = vpop.permute.xlu0 %2105
        %2107 = vrot.lane.b32.xlu0 %v2062, 20
        %v2108 = vpop.permute.xlu0 %2107
        %2109 = vrot.lane.b32.xlu0 %v2065, 20
        %v2110 = vpop.permute.xlu0 %2109
        %2111 = vrot.lane.b32.xlu0 %v2068, 20
        %v2112 = vpop.permute.xlu0 %2111
        %2113 = vrot.lane.b32.xlu0 %v2071, 20
        %v2114 = vpop.permute.xlu0 %2113
        %2115 = vrot.lane.b32.xlu0 %v2074, 20
        %v2116 = vpop.permute.xlu0 %2115
        %2117 = vrot.lane.b32.xlu0 %v2077, 20
        %v2118 = vpop.permute.xlu0 %2117
        %2119 = vrot.lane.b32.xlu0 %v2080, 20
        %v2120 = vpop.permute.xlu0 %2119
        %2121 = vrot.lane.b32.xlu0 %v2083, 20
        %v2122 = vpop.permute.xlu0 %2121
        %2123 = vrot.lane.b32.xlu0 %v2086, 20
        %v2124 = vpop.permute.xlu0 %2123
        %2125 = vrot.lane.b32.xlu0 %v2089, 20
        %v2126 = vpop.permute.xlu0 %2125
        %2127 = vrot.lane.b32.xlu0 %v2092, 20
        %v2128 = vpop.permute.xlu0 %2127
        %2129 = vrot.lane.b32.xlu0 %v2095, 20
        %v2130 = vpop.permute.xlu0 %2129
        %2131 = vrot.lane.b32.xlu0 %v2098, 20
        %v2132 = vpop.permute.xlu0 %2131
        %2133 = vrot.lane.b32.xlu0 %v2101, 20
        %v2134 = vpop.permute.xlu0 %2133
        %2135 = vrot.lane.b32.xlu0 %v2104, 20
        %v2136 = vpop.permute.xlu0 %2135
        %v2169 = vunpack.c.l.b16 %v1079
        %v2170 = vunpack.c.l.b16 %v1080
        %v2171 = vunpack.c.l.b16 %v1081
        %v2172 = vunpack.c.l.b16 %v1082
        %v2173 = vunpack.c.l.b16 %v1083
        %v2174 = vunpack.c.l.b16 %v1084
        %v2175 = vunpack.c.l.b16 %v1085
        %v2176 = vunpack.c.l.b16 %v1086
        %v2177 = vunpack.c.l.b16 %v1087
        %v2178 = vunpack.c.l.b16 %v1088
        %v2179 = vunpack.c.l.b16 %v1089
        %v2180 = vunpack.c.l.b16 %v1090
        %v2181 = vunpack.c.l.b16 %v1091
        %v2182 = vunpack.c.l.b16 %v1092
        %v2183 = vunpack.c.l.b16 %v1093
        %v2184 = vunpack.c.l.b16 %v1094
        %v2185 = vunpack.c.l.b16 %v1095
        %v2186 = vunpack.c.l.b16 %v1096
        %v2187 = vunpack.c.l.b16 %v1097
        %v2188 = vunpack.c.l.b16 %v1098
        %v2189 = vunpack.c.l.b16 %v1099
        %v2190 = vunpack.c.l.b16 %v1100
        %v2191 = vunpack.c.l.b16 %v1101
        %v2192 = vunpack.c.l.b16 %v1102
        %v2193 = vunpack.c.l.b16 %v1103
        %v2194 = vunpack.c.l.b16 %v1104
        %v2195 = vunpack.c.l.b16 %v1105
        %v2196 = vunpack.c.l.b16 %v1106
        %v2197 = vunpack.c.l.b16 %v1107
        %v2198 = vunpack.c.l.b16 %v1108
        %v2199 = vunpack.c.l.b16 %v1109
        %v2200 = vunpack.c.l.b16 %v1110
        %v2201 = vpack.c.b16 %v2170, %v2169
        %v2202 = vpack.c.b16 %v2172, %v2171
        %v2203 = vpack.c.b16 %v2174, %v2173
        %v2204 = vpack.c.b16 %v2176, %v2175
        %v2205 = vpack.c.b16 %v2178, %v2177
        %v2206 = vpack.c.b16 %v2180, %v2179
        %v2207 = vpack.c.b16 %v2182, %v2181
        %v2208 = vpack.c.b16 %v2184, %v2183
        %v2209 = vpack.c.b16 %v2186, %v2185
        %v2210 = vpack.c.b16 %v2188, %v2187
        %v2211 = vpack.c.b16 %v2190, %v2189
        %v2212 = vpack.c.b16 %v2192, %v2191
        %v2213 = vpack.c.b16 %v2194, %v2193
        %v2214 = vpack.c.b16 %v2196, %v2195
        %v2215 = vpack.c.b16 %v2198, %v2197
        %v2216 = vpack.c.b16 %v2200, %v2199
        %2217 = vrot.lane.b32.xlu0 %v2201, 24
        %v2218 = vpop.permute.xlu0 %2217
        %2219 = vrot.lane.b32.xlu0 %v2202, 24
        %v2220 = vpop.permute.xlu0 %2219
        %2221 = vrot.lane.b32.xlu0 %v2203, 24
        %v2222 = vpop.permute.xlu0 %2221
        %2223 = vrot.lane.b32.xlu0 %v2204, 24
        %v2224 = vpop.permute.xlu0 %2223
        %2225 = vrot.lane.b32.xlu0 %v2205, 24
        %v2226 = vpop.permute.xlu0 %2225
        %2227 = vrot.lane.b32.xlu0 %v2206, 24
        %v2228 = vpop.permute.xlu0 %2227
        %2229 = vrot.lane.b32.xlu0 %v2207, 24
        %v2230 = vpop.permute.xlu0 %2229
        %2231 = vrot.lane.b32.xlu0 %v2208, 24
        %v2232 = vpop.permute.xlu0 %2231
        %2233 = vrot.lane.b32.xlu0 %v2209, 24
        %v2234 = vpop.permute.xlu0 %2233
        %2235 = vrot.lane.b32.xlu0 %v2210, 24
        %v2236 = vpop.permute.xlu0 %2235
        %2237 = vrot.lane.b32.xlu0 %v2211, 24
        %v2238 = vpop.permute.xlu0 %2237
        %2239 = vrot.lane.b32.xlu0 %v2212, 24
        %v2240 = vpop.permute.xlu0 %2239
        %2241 = vrot.lane.b32.xlu0 %v2213, 24
        %v2242 = vpop.permute.xlu0 %2241
        %2243 = vrot.lane.b32.xlu0 %v2214, 24
        %v2244 = vpop.permute.xlu0 %2243
        %2245 = vrot.lane.b32.xlu0 %v2215, 24
        %v2246 = vpop.permute.xlu0 %2245
        %2247 = vrot.lane.b32.xlu0 %v2216, 24
        %v2248 = vpop.permute.xlu0 %2247
        %v2265 = vunpack.c.l.b16 %v1111
        %v2266 = vunpack.c.l.b16 %v1112
        %v2267 = vunpack.c.l.b16 %v1113
        %v2268 = vunpack.c.l.b16 %v1114
        %v2269 = vunpack.c.l.b16 %v1115
        %v2270 = vunpack.c.l.b16 %v1116
        %v2271 = vunpack.c.l.b16 %v1117
        %v2272 = vunpack.c.l.b16 %v1118
        %v2273 = vunpack.c.l.b16 %v1119
        %v2274 = vunpack.c.l.b16 %v1120
        %v2275 = vunpack.c.l.b16 %v1121
        %v2276 = vunpack.c.l.b16 %v1122
        %v2277 = vunpack.c.l.b16 %v1123
        %v2278 = vunpack.c.l.b16 %v1124
        %v2279 = vunpack.c.l.b16 %v1125
        %v2280 = vunpack.c.l.b16 %v1126
        %v2281 = vpack.c.b16 %v2265, %v2265
        %v2282 = vpack.c.b16 %v2266, %v2266
        %v2283 = vpack.c.b16 %v2267, %v2267
        %v2284 = vpack.c.b16 %v2268, %v2268
        %v2285 = vpack.c.b16 %v2269, %v2269
        %v2286 = vpack.c.b16 %v2270, %v2270
        %v2287 = vpack.c.b16 %v2271, %v2271
        %v2288 = vpack.c.b16 %v2272, %v2272
        %v2289 = vpack.c.b16 %v2273, %v2273
        %v2290 = vpack.c.b16 %v2274, %v2274
        %v2291 = vpack.c.b16 %v2275, %v2275
        %v2292 = vpack.c.b16 %v2276, %v2276
        %v2293 = vpack.c.b16 %v2277, %v2277
        %v2294 = vpack.c.b16 %v2278, %v2278
        %v2295 = vpack.c.b16 %v2279, %v2279
        %v2296 = vpack.c.b16 %v2280, %v2280
        %v2298 = vshrl.u32 %v2201, 16
        %v2300 = vshll.u32 %v2201, 16
        %v2302 = vrot.slane %v2300, 1
        %v2303 = vor.u32 %v2298, %v2302
        %v2305 = vshll.u32 %v2281, 16
        %v2307 = vrot.slane %v2305, 1
        %v2308 = vsel %vm1271, %v2303, %v2307
        %v2310 = vshrl.u32 %v2202, 16
        %v2312 = vshll.u32 %v2202, 16
        %v2314 = vrot.slane %v2312, 1
        %v2315 = vor.u32 %v2310, %v2314
        %v2317 = vshll.u32 %v2282, 16
        %v2319 = vrot.slane %v2317, 1
        %v2320 = vsel %vm1271, %v2315, %v2319
        %v2322 = vshrl.u32 %v2203, 16
        %v2324 = vshll.u32 %v2203, 16
        %v2326 = vrot.slane %v2324, 1
        %v2327 = vor.u32 %v2322, %v2326
        %v2329 = vshll.u32 %v2283, 16
        %v2331 = vrot.slane %v2329, 1
        %v2332 = vsel %vm1271, %v2327, %v2331
        %v2334 = vshrl.u32 %v2204, 16
        %v2336 = vshll.u32 %v2204, 16
        %v2338 = vrot.slane %v2336, 1
        %v2339 = vor.u32 %v2334, %v2338
        %v2341 = vshll.u32 %v2284, 16
        %v2343 = vrot.slane %v2341, 1
        %v2344 = vsel %vm1271, %v2339, %v2343
        %v2346 = vshrl.u32 %v2205, 16
        %v2348 = vshll.u32 %v2205, 16
        %v2350 = vrot.slane %v2348, 1
        %v2351 = vor.u32 %v2346, %v2350
        %v2353 = vshll.u32 %v2285, 16
        %v2355 = vrot.slane %v2353, 1
        %v2356 = vsel %vm1271, %v2351, %v2355
        %v2358 = vshrl.u32 %v2206, 16
        %v2360 = vshll.u32 %v2206, 16
        %v2362 = vrot.slane %v2360, 1
        %v2363 = vor.u32 %v2358, %v2362
        %v2365 = vshll.u32 %v2286, 16
        %v2367 = vrot.slane %v2365, 1
        %v2368 = vsel %vm1271, %v2363, %v2367
        %v2370 = vshrl.u32 %v2207, 16
        %v2372 = vshll.u32 %v2207, 16
        %v2374 = vrot.slane %v2372, 1
        %v2375 = vor.u32 %v2370, %v2374
        %v2377 = vshll.u32 %v2287, 16
        %v2379 = vrot.slane %v2377, 1
        %v2380 = vsel %vm1271, %v2375, %v2379
        %v2382 = vshrl.u32 %v2208, 16
        %v2384 = vshll.u32 %v2208, 16
        %v2386 = vrot.slane %v2384, 1
        %v2387 = vor.u32 %v2382, %v2386
        %v2389 = vshll.u32 %v2288, 16
        %v2391 = vrot.slane %v2389, 1
        %v2392 = vsel %vm1271, %v2387, %v2391
        %v2394 = vshrl.u32 %v2209, 16
        %v2396 = vshll.u32 %v2209, 16
        %v2398 = vrot.slane %v2396, 1
        %v2399 = vor.u32 %v2394, %v2398
        %v2401 = vshll.u32 %v2289, 16
        %v2403 = vrot.slane %v2401, 1
        %v2404 = vsel %vm1271, %v2399, %v2403
        %v2406 = vshrl.u32 %v2210, 16
        %v2408 = vshll.u32 %v2210, 16
        %v2410 = vrot.slane %v2408, 1
        %v2411 = vor.u32 %v2406, %v2410
        %v2413 = vshll.u32 %v2290, 16
        %v2415 = vrot.slane %v2413, 1
        %v2416 = vsel %vm1271, %v2411, %v2415
        %v2418 = vshrl.u32 %v2211, 16
        %v2420 = vshll.u32 %v2211, 16
        %v2422 = vrot.slane %v2420, 1
        %v2423 = vor.u32 %v2418, %v2422
        %v2425 = vshll.u32 %v2291, 16
        %v2427 = vrot.slane %v2425, 1
        %v2428 = vsel %vm1271, %v2423, %v2427
        %v2430 = vshrl.u32 %v2212, 16
        %v2432 = vshll.u32 %v2212, 16
        %v2434 = vrot.slane %v2432, 1
        %v2435 = vor.u32 %v2430, %v2434
        %v2437 = vshll.u32 %v2292, 16
        %v2439 = vrot.slane %v2437, 1
        %v2440 = vsel %vm1271, %v2435, %v2439
        %v2442 = vshrl.u32 %v2213, 16
        %v2444 = vshll.u32 %v2213, 16
        %v2446 = vrot.slane %v2444, 1
        %v2447 = vor.u32 %v2442, %v2446
        %v2449 = vshll.u32 %v2293, 16
        %v2451 = vrot.slane %v2449, 1
        %v2452 = vsel %vm1271, %v2447, %v2451
        %v2454 = vshrl.u32 %v2214, 16
        %v2456 = vshll.u32 %v2214, 16
        %v2458 = vrot.slane %v2456, 1
        %v2459 = vor.u32 %v2454, %v2458
        %v2461 = vshll.u32 %v2294, 16
        %v2463 = vrot.slane %v2461, 1
        %v2464 = vsel %vm1271, %v2459, %v2463
        %v2466 = vshrl.u32 %v2215, 16
        %v2468 = vshll.u32 %v2215, 16
        %v2470 = vrot.slane %v2468, 1
        %v2471 = vor.u32 %v2466, %v2470
        %v2473 = vshll.u32 %v2295, 16
        %v2475 = vrot.slane %v2473, 1
        %v2476 = vsel %vm1271, %v2471, %v2475
        %v2478 = vshrl.u32 %v2216, 16
        %v2480 = vshll.u32 %v2216, 16
        %v2482 = vrot.slane %v2480, 1
        %v2483 = vor.u32 %v2478, %v2482
        %v2485 = vshll.u32 %v2296, 16
        %v2487 = vrot.slane %v2485, 1
        %v2488 = vsel %vm1271, %v2483, %v2487
        %2489 = vrot.lane.b32.xlu0 %v2308, 28
        %v2490 = vpop.permute.xlu0 %2489
        %2491 = vrot.lane.b32.xlu0 %v2320, 28
        %v2492 = vpop.permute.xlu0 %2491
        %2493 = vrot.lane.b32.xlu0 %v2332, 28
        %v2494 = vpop.permute.xlu0 %2493
        %2495 = vrot.lane.b32.xlu0 %v2344, 28
        %v2496 = vpop.permute.xlu0 %2495
        %2497 = vrot.lane.b32.xlu0 %v2356, 28
        %v2498 = vpop.permute.xlu0 %2497
        %2499 = vrot.lane.b32.xlu0 %v2368, 28
        %v2500 = vpop.permute.xlu0 %2499
        %2501 = vrot.lane.b32.xlu0 %v2380, 28
        %v2502 = vpop.permute.xlu0 %2501
        %2503 = vrot.lane.b32.xlu0 %v2392, 28
        %v2504 = vpop.permute.xlu0 %2503
        %2505 = vrot.lane.b32.xlu0 %v2404, 28
        %v2506 = vpop.permute.xlu0 %2505
        %2507 = vrot.lane.b32.xlu0 %v2416, 28
        %v2508 = vpop.permute.xlu0 %2507
        %2509 = vrot.lane.b32.xlu0 %v2428, 28
        %v2510 = vpop.permute.xlu0 %2509
        %2511 = vrot.lane.b32.xlu0 %v2440, 28
        %v2512 = vpop.permute.xlu0 %2511
        %2513 = vrot.lane.b32.xlu0 %v2452, 28
        %v2514 = vpop.permute.xlu0 %2513
        %2515 = vrot.lane.b32.xlu0 %v2464, 28
        %v2516 = vpop.permute.xlu0 %2515
        %2517 = vrot.lane.b32.xlu0 %v2476, 28
        %v2518 = vpop.permute.xlu0 %2517
        %2519 = vrot.lane.b32.xlu0 %v2488, 28
        %v2520 = vpop.permute.xlu0 %2519
        %v2537 = vunpack.c.l.b16 %v1127
        %v2538 = vunpack.c.l.b16 %v1128
        %v2539 = vunpack.c.l.b16 %v1129
        %v2540 = vunpack.c.l.b16 %v1130
        %v2541 = vunpack.c.l.b16 %v1131
        %v2542 = vunpack.c.l.b16 %v1132
        %v2543 = vunpack.c.l.b16 %v1133
        %v2544 = vunpack.c.l.b16 %v1134
        %v2545 = vunpack.c.l.b16 %v1135
        %v2546 = vunpack.c.l.b16 %v1136
        %v2547 = vunpack.c.l.b16 %v1137
        %v2548 = vunpack.c.l.b16 %v1138
        %v2549 = vunpack.c.l.b16 %v1139
        %v2550 = vunpack.c.l.b16 %v1140
        %v2551 = vunpack.c.l.b16 %v1141
        %v2552 = vunpack.c.l.b16 %v1142
        %v2553 = vpack.c.b16 %v2170, %v2537
        %v2554 = vpack.c.b16 %v2172, %v2538
        %v2555 = vpack.c.b16 %v2174, %v2539
        %v2556 = vpack.c.b16 %v2176, %v2540
        %v2557 = vpack.c.b16 %v2178, %v2541
        %v2558 = vpack.c.b16 %v2180, %v2542
        %v2559 = vpack.c.b16 %v2182, %v2543
        %v2560 = vpack.c.b16 %v2184, %v2544
        %v2561 = vpack.c.b16 %v2186, %v2545
        %v2562 = vpack.c.b16 %v2188, %v2546
        %v2563 = vpack.c.b16 %v2190, %v2547
        %v2564 = vpack.c.b16 %v2192, %v2548
        %v2565 = vpack.c.b16 %v2194, %v2549
        %v2566 = vpack.c.b16 %v2196, %v2550
        %v2567 = vpack.c.b16 %v2198, %v2551
        %v2568 = vpack.c.b16 %v2200, %v2552
        %v2569 = vrot.slane %v2553, 1
        %v2570 = vrot.slane %v2281, 1
        %v2571 = vsel %vm1544, %v2569, %v2570
        %v2572 = vrot.slane %v2554, 1
        %v2573 = vrot.slane %v2282, 1
        %v2574 = vsel %vm1544, %v2572, %v2573
        %v2575 = vrot.slane %v2555, 1
        %v2576 = vrot.slane %v2283, 1
        %v2577 = vsel %vm1544, %v2575, %v2576
        %v2578 = vrot.slane %v2556, 1
        %v2579 = vrot.slane %v2284, 1
        %v2580 = vsel %vm1544, %v2578, %v2579
        %v2581 = vrot.slane %v2557, 1
        %v2582 = vrot.slane %v2285, 1
        %v2583 = vsel %vm1544, %v2581, %v2582
        %v2584 = vrot.slane %v2558, 1
        %v2585 = vrot.slane %v2286, 1
        %v2586 = vsel %vm1544, %v2584, %v2585
        %v2587 = vrot.slane %v2559, 1
        %v2588 = vrot.slane %v2287, 1
        %v2589 = vsel %vm1544, %v2587, %v2588
        %v2590 = vrot.slane %v2560, 1
        %v2591 = vrot.slane %v2288, 1
        %v2592 = vsel %vm1544, %v2590, %v2591
        %v2593 = vrot.slane %v2561, 1
        %v2594 = vrot.slane %v2289, 1
        %v2595 = vsel %vm1544, %v2593, %v2594
        %v2596 = vrot.slane %v2562, 1
        %v2597 = vrot.slane %v2290, 1
        %v2598 = vsel %vm1544, %v2596, %v2597
        %v2599 = vrot.slane %v2563, 1
        %v2600 = vrot.slane %v2291, 1
        %v2601 = vsel %vm1544, %v2599, %v2600
        %v2602 = vrot.slane %v2564, 1
        %v2603 = vrot.slane %v2292, 1
        %v2604 = vsel %vm1544, %v2602, %v2603
        %v2605 = vrot.slane %v2565, 1
        %v2606 = vrot.slane %v2293, 1
        %v2607 = vsel %vm1544, %v2605, %v2606
        %v2608 = vrot.slane %v2566, 1
        %v2609 = vrot.slane %v2294, 1
        %v2610 = vsel %vm1544, %v2608, %v2609
        %v2611 = vrot.slane %v2567, 1
        %v2612 = vrot.slane %v2295, 1
        %v2613 = vsel %vm1544, %v2611, %v2612
        %v2614 = vrot.slane %v2568, 1
        %v2615 = vrot.slane %v2296, 1
        %v2616 = vsel %vm1544, %v2614, %v2615
        %2617 = vrot.lane.b32.xlu0 %v2571, 32
        %v2618 = vpop.permute.xlu0 %2617
        %2619 = vrot.lane.b32.xlu0 %v2574, 32
        %v2620 = vpop.permute.xlu0 %2619
        %2621 = vrot.lane.b32.xlu0 %v2577, 32
        %v2622 = vpop.permute.xlu0 %2621
        %2623 = vrot.lane.b32.xlu0 %v2580, 32
        %v2624 = vpop.permute.xlu0 %2623
        %2625 = vrot.lane.b32.xlu0 %v2583, 32
        %v2626 = vpop.permute.xlu0 %2625
        %2627 = vrot.lane.b32.xlu0 %v2586, 32
        %v2628 = vpop.permute.xlu0 %2627
        %2629 = vrot.lane.b32.xlu0 %v2589, 32
        %v2630 = vpop.permute.xlu0 %2629
        %2631 = vrot.lane.b32.xlu0 %v2592, 32
        %v2632 = vpop.permute.xlu0 %2631
        %2633 = vrot.lane.b32.xlu0 %v2595, 32
        %v2634 = vpop.permute.xlu0 %2633
        %2635 = vrot.lane.b32.xlu0 %v2598, 32
        %v2636 = vpop.permute.xlu0 %2635
        %2637 = vrot.lane.b32.xlu0 %v2601, 32
        %v2638 = vpop.permute.xlu0 %2637
        %2639 = vrot.lane.b32.xlu0 %v2604, 32
        %v2640 = vpop.permute.xlu0 %2639
        %2641 = vrot.lane.b32.xlu0 %v2607, 32
        %v2642 = vpop.permute.xlu0 %2641
        %2643 = vrot.lane.b32.xlu0 %v2610, 32
        %v2644 = vpop.permute.xlu0 %2643
        %2645 = vrot.lane.b32.xlu0 %v2613, 32
        %v2646 = vpop.permute.xlu0 %2645
        %2647 = vrot.lane.b32.xlu0 %v2616, 32
        %v2648 = vpop.permute.xlu0 %2647
        %vm2649 = vcmask 31744
        %v2651 = vsel %vm2649, %v1207, %v1465
        %v2653 = vsel %vm2649, %v1208, %v1467
        %v2655 = vsel %vm2649, %v1209, %v1469
        %v2657 = vsel %vm2649, %v1210, %v1471
        %v2659 = vsel %vm2649, %v1211, %v1473
        %v2661 = vsel %vm2649, %v1212, %v1475
        %v2663 = vsel %vm2649, %v1213, %v1477
        %v2665 = vsel %vm2649, %v1214, %v1479
        %v2667 = vsel %vm2649, %v1215, %v1481
        %v2669 = vsel %vm2649, %v1216, %v1483
        %v2671 = vsel %vm2649, %v1217, %v1485
        %v2673 = vsel %vm2649, %v1218, %v1487
        %v2675 = vsel %vm2649, %v1219, %v1489
        %v2677 = vsel %vm2649, %v1220, %v1491
        %v2679 = vsel %vm2649, %v1221, %v1493
        %v2681 = vsel %vm2649, %v1222, %v1495
        %vm2682 = vcmask 64512
        %v2684 = vsel %vm2682, %v2651, %v1594
        %v2686 = vsel %vm2682, %v2653, %v1596
        %v2688 = vsel %vm2682, %v2655, %v1598
        %v2690 = vsel %vm2682, %v2657, %v1600
        %v2692 = vsel %vm2682, %v2659, %v1602
        %v2694 = vsel %vm2682, %v2661, %v1604
        %v2696 = vsel %vm2682, %v2663, %v1606
        %v2698 = vsel %vm2682, %v2665, %v1608
        %v2700 = vsel %vm2682, %v2667, %v1610
        %v2702 = vsel %vm2682, %v2669, %v1612
        %v2704 = vsel %vm2682, %v2671, %v1614
        %v2706 = vsel %vm2682, %v2673, %v1616
        %v2708 = vsel %vm2682, %v2675, %v1618
        %v2710 = vsel %vm2682, %v2677, %v1620
        %v2712 = vsel %vm2682, %v2679, %v1622
        %v2714 = vsel %vm2682, %v2681, %v1624
        %vm2715 = vcmask 97280
        %v2717 = vsel %vm2715, %v2684, %v1706
        %v2719 = vsel %vm2715, %v2686, %v1708
        %v2721 = vsel %vm2715, %v2688, %v1710
        %v2723 = vsel %vm2715, %v2690, %v1712
        %v2725 = vsel %vm2715, %v2692, %v1714
        %v2727 = vsel %vm2715, %v2694, %v1716
        %v2729 = vsel %vm2715, %v2696, %v1718
        %v2731 = vsel %vm2715, %v2698, %v1720
        %v2733 = vsel %vm2715, %v2700, %v1722
        %v2735 = vsel %vm2715, %v2702, %v1724
        %v2737 = vsel %vm2715, %v2704, %v1726
        %v2739 = vsel %vm2715, %v2706, %v1728
        %v2741 = vsel %vm2715, %v2708, %v1730
        %v2743 = vsel %vm2715, %v2710, %v1732
        %v2745 = vsel %vm2715, %v2712, %v1734
        %v2747 = vsel %vm2715, %v2714, %v1736
        %vm2748 = vcmask 130048
        %v2750 = vsel %vm2748, %v2717, %v1978
        %v2752 = vsel %vm2748, %v2719, %v1980
        %v2754 = vsel %vm2748, %v2721, %v1982
        %v2756 = vsel %vm2748, %v2723, %v1984
        %v2758 = vsel %vm2748, %v2725, %v1986
        %v2760 = vsel %vm2748, %v2727, %v1988
        %v2762 = vsel %vm2748, %v2729, %v1990
        %v2764 = vsel %vm2748, %v2731, %v1992
        %v2766 = vsel %vm2748, %v2733, %v1994
        %v2768 = vsel %vm2748, %v2735, %v1996
        %v2770 = vsel %vm2748, %v2737, %v1998
        %v2772 = vsel %vm2748, %v2739, %v2000
        %v2774 = vsel %vm2748, %v2741, %v2002
        %v2776 = vsel %vm2748, %v2743, %v2004
        %v2778 = vsel %vm2748, %v2745, %v2006
        %v2780 = vsel %vm2748, %v2747, %v2008
        %vm2781 = vcmask 162816
        %v2783 = vsel %vm2781, %v2750, %v2106
        %v2785 = vsel %vm2781, %v2752, %v2108
        %v2787 = vsel %vm2781, %v2754, %v2110
        %v2789 = vsel %vm2781, %v2756, %v2112
        %v2791 = vsel %vm2781, %v2758, %v2114
        %v2793 = vsel %vm2781, %v2760, %v2116
        %v2795 = vsel %vm2781, %v2762, %v2118
        %v2797 = vsel %vm2781, %v2764, %v2120
        %v2799 = vsel %vm2781, %v2766, %v2122
        %v2801 = vsel %vm2781, %v2768, %v2124
        %v2803 = vsel %vm2781, %v2770, %v2126
        %v2805 = vsel %vm2781, %v2772, %v2128
        %v2807 = vsel %vm2781, %v2774, %v2130
        %v2809 = vsel %vm2781, %v2776, %v2132
        %v2811 = vsel %vm2781, %v2778, %v2134
        %v2813 = vsel %vm2781, %v2780, %v2136
        %vm2814 = vcmask 195584
        %v2816 = vsel %vm2814, %v2783, %v2218
        %v2818 = vsel %vm2814, %v2785, %v2220
        %v2820 = vsel %vm2814, %v2787, %v2222
        %v2822 = vsel %vm2814, %v2789, %v2224
        %v2824 = vsel %vm2814, %v2791, %v2226
        %v2826 = vsel %vm2814, %v2793, %v2228
        %v2828 = vsel %vm2814, %v2795, %v2230
        %v2830 = vsel %vm2814, %v2797, %v2232
        %v2832 = vsel %vm2814, %v2799, %v2234
        %v2834 = vsel %vm2814, %v2801, %v2236
        %v2836 = vsel %vm2814, %v2803, %v2238
        %v2838 = vsel %vm2814, %v2805, %v2240
        %v2840 = vsel %vm2814, %v2807, %v2242
        %v2842 = vsel %vm2814, %v2809, %v2244
        %v2844 = vsel %vm2814, %v2811, %v2246
        %v2846 = vsel %vm2814, %v2813, %v2248
        %vm2847 = vcmask 228352
        %v2849 = vsel %vm2847, %v2816, %v2490
        %v2851 = vsel %vm2847, %v2818, %v2492
        %v2853 = vsel %vm2847, %v2820, %v2494
        %v2855 = vsel %vm2847, %v2822, %v2496
        %v2857 = vsel %vm2847, %v2824, %v2498
        %v2859 = vsel %vm2847, %v2826, %v2500
        %v2861 = vsel %vm2847, %v2828, %v2502
        %v2863 = vsel %vm2847, %v2830, %v2504
        %v2865 = vsel %vm2847, %v2832, %v2506
        %v2867 = vsel %vm2847, %v2834, %v2508
        %v2869 = vsel %vm2847, %v2836, %v2510
        %v2871 = vsel %vm2847, %v2838, %v2512
        %v2873 = vsel %vm2847, %v2840, %v2514
        %v2875 = vsel %vm2847, %v2842, %v2516
        %v2877 = vsel %vm2847, %v2844, %v2518
        %v2879 = vsel %vm2847, %v2846, %v2520
        %vm2880 = vcmask 261120
        %v2882 = vsel %vm2880, %v2849, %v2618
        %v2884 = vsel %vm2880, %v2851, %v2620
        %v2886 = vsel %vm2880, %v2853, %v2622
        %v2888 = vsel %vm2880, %v2855, %v2624
        %v2890 = vsel %vm2880, %v2857, %v2626
        %v2892 = vsel %vm2880, %v2859, %v2628
        %v2894 = vsel %vm2880, %v2861, %v2630
        %v2896 = vsel %vm2880, %v2863, %v2632
        %v2898 = vsel %vm2880, %v2865, %v2634
        %v2900 = vsel %vm2880, %v2867, %v2636
        %v2902 = vsel %vm2880, %v2869, %v2638
        %v2904 = vsel %vm2880, %v2871, %v2640
        %v2906 = vsel %vm2880, %v2873, %v2642
        %v2908 = vsel %vm2880, %v2875, %v2644
        %v2910 = vsel %vm2880, %v2877, %v2646
        %v2912 = vsel %vm2880, %v2879, %v2648
        %v2913 = vld [vmem:[%s1] sm:$0xf]
        %v2914 = vld [vmem:[%s1 + $0x4] sm:$0xf]
        %v2915 = vld [vmem:[%s1 + $0x8] sm:$0xf]
        %v2916 = vld [vmem:[%s1 + $0xc] sm:$0xf]
        %v2917 = vld [vmem:[%s1 + $0x10] sm:$0x3]
        %v2918 = vld [vmem:[#allocation4] sm:$0x1]
        %v2920 = vlaneseq
        %v2921 = vshrl.u32 %v2920, 7
        %v2922 = vsub.s32 0, %v2921
        %v2923 = vrot.slane %v2918, %v2922
        %v2930 = vunpack.c.l.b16 %v2913
        %v2931 = vunpack.c.l.b16 %v2914
        %v2932 = vunpack.c.l.b16 %v2915
        %v2933 = vunpack.c.l.b16 %v2916
        %v2934 = vunpack.c.l.b16 %v2917
        %v2935 = vpack.c.b16 %v2931, %v2930
        %v2936 = vpack.c.b16 %v2933, %v2932
        %v2937 = vpack.c.b16 %v2934, %v2934
        %vm2940 = vcmask 293888
        %v2941 = vsel %vm2940, %v2882, 0
        %v2943 = vsel %vm2940, %v2884, 0
        %v2945 = vsel %vm2940, %v2886, 0
        %v2947 = vsel %vm2940, %v2888, 0
        %v2949 = vsel %vm2940, %v2890, 0
        %v2951 = vsel %vm2940, %v2892, 0
        %v2953 = vsel %vm2940, %v2894, 0
        %v2955 = vsel %vm2940, %v2896, 0
        %v2957 = vsel %vm2940, %v2898, 0
        %v2959 = vsel %vm2940, %v2900, 0
        %v2961 = vsel %vm2940, %v2902, 0
        %v2963 = vsel %vm2940, %v2904, 0
        %v2965 = vsel %vm2940, %v2906, 0
        %v2967 = vsel %vm2940, %v2908, 0
        %v2969 = vsel %vm2940, %v2910, 0
        %v2971 = vsel %vm2940, %v2912, 0
        %vm2973 = vcmask 1041408
        %v2975 = vsel %vm2973, %v2937, 0
        %2977 = vmatprep.subr.bf16.mxu0 0
        %2978 = vmatpush1.bf16.msra.mxu0 %v2935
        %2979 = vmatprep.subr.bf16.mxu0 0
        %2980 = vmatpush1.bf16.msra.mxu0 %v2936
        %2981 = vmatprep.subr.bf16.mxu0 0
        %2982 = vmatpush1.bf16.msra.mxu0 %v2975
        %2983 = vmatprep.subr.bf16.mxu0 0
        %2984 = vmatpush1.bf16.msra.mxu0 0
        %2985 = vmatprep.subr.bf16.mxu0 0
        %2986 = vmatpush1.bf16.msra.mxu0 0
        %2987 = vmatprep.subr.bf16.mxu0 0
        %2988 = vmatpush1.bf16.msra.mxu0 0
        %2989 = vmatprep.subr.bf16.mxu0 0
        %2990 = vmatpush1.bf16.msra.mxu0 0
        %2991 = vmatprep.subr.bf16.mxu0 0
        %2992 = vmatpush1.bf16.msra.mxu0 0
        %2993 = vmatprep.subr.bf16.mxu0 0
        %2994 = vmatpush1.bf16.msra.mxu0 0
        %2995 = vmatprep.subr.bf16.mxu0 0
        %2996 = vmatpush1.bf16.msra.mxu0 0
        %2997 = vmatprep.subr.bf16.mxu0 0
        %2998 = vmatpush1.bf16.msra.mxu0 0
        %2999 = vmatprep.subr.bf16.mxu0 0
        %3000 = vmatpush1.bf16.msra.mxu0 0
        %3001 = vmatprep.subr.bf16.mxu0 0
        %3002 = vmatpush1.bf16.msra.mxu0 0
        %3003 = vmatprep.subr.bf16.mxu0 0
        %3004 = vmatpush1.bf16.msra.mxu0 0
        %3005 = vmatprep.subr.bf16.mxu0 0
        %3006 = vmatpush1.bf16.msra.mxu0 0
        %3007 = vmatprep.subr.bf16.mxu0 0
        %3008 = vmatpush1.bf16.msra.mxu0 0
        %3009 = vmatprep.mubr.bf16.mxu0 0
        %3010 = vmatmul.mubr.bf16.gmra.mrb[0].mxu0 %v2941
        %v3011 = vpop.f32.mrb[0].mxu0
        %v3012 = vadd.f32 %v2923, %v3011
        %v3013 = vpop.f32.mrb[0].mxu0
        %v3014 = vpop.f32.mrb[0].mxu0
        %v3015 = vadd.f32 %v2923, %v3014
        %v3016 = vpop.f32.mrb[0].mxu0
        %3017 = vmatprep.mubr.bf16.mxu0 0
        %3018 = vmatmul.mubr.bf16.gmra.mrb[0].mxu0 %v2943
        %v3019 = vpop.f32.mrb[0].mxu0
        %v3020 = vadd.f32 %v2923, %v3019
        %v3021 = vpop.f32.mrb[0].mxu0
        %v3022 = vpop.f32.mrb[0].mxu0
        %v3023 = vadd.f32 %v2923, %v3022
        %v3024 = vpop.f32.mrb[0].mxu0
        %3025 = vmatprep.mubr.bf16.mxu0 0
        %3026 = vmatmul.mubr.bf16.gmra.mrb[0].mxu0 %v2945
        %v3027 = vpop.f32.mrb[0].mxu0
        %v3028 = vadd.f32 %v2923, %v3027
        %v3029 = vpop.f32.mrb[0].mxu0
        %v3030 = vpop.f32.mrb[0].mxu0
        %v3031 = vadd.f32 %v2923, %v3030
        %v3032 = vpop.f32.mrb[0].mxu0
        %3033 = vmatprep.mubr.bf16.mxu0 0
        %3034 = vmatmul.mubr.bf16.gmra.mrb[0].mxu0 %v2947
        %v3035 = vpop.f32.mrb[0].mxu0
        %v3036 = vadd.f32 %v2923, %v3035
        %v3037 = vpop.f32.mrb[0].mxu0
        %v3038 = vpop.f32.mrb[0].mxu0
        %v3039 = vadd.f32 %v2923, %v3038
        %v3040 = vpop.f32.mrb[0].mxu0
        %3041 = vmatprep.mubr.bf16.mxu0 0
        %3042 = vmatmul.mubr.bf16.gmra.mrb[0].mxu0 %v2949
        %v3043 = vpop.f32.mrb[0].mxu0
        %v3044 = vadd.f32 %v2923, %v3043
        %v3045 = vpop.f32.mrb[0].mxu0
        %v3046 = vpop.f32.mrb[0].mxu0
        %v3047 = vadd.f32 %v2923, %v3046
        %v3048 = vpop.f32.mrb[0].mxu0
        %3049 = vmatprep.mubr.bf16.mxu0 0
        %3050 = vmatmul.mubr.bf16.gmra.mrb[0].mxu0 %v2951
        %v3051 = vpop.f32.mrb[0].mxu0
        %v3052 = vadd.f32 %v2923, %v3051
        %v3053 = vpop.f32.mrb[0].mxu0
        %v3054 = vpop.f32.mrb[0].mxu0
        %v3055 = vadd.f32 %v2923, %v3054
        %v3056 = vpop.f32.mrb[0].mxu0
        %3057 = vmatprep.mubr.bf16.mxu0 0
        %3058 = vmatmul.mubr.bf16.gmra.mrb[0].mxu0 %v2953
        %v3059 = vpop.f32.mrb[0].mxu0
        %v3060 = vadd.f32 %v2923, %v3059
        %v3061 = vpop.f32.mrb[0].mxu0
        %v3062 = vpop.f32.mrb[0].mxu0
        %v3063 = vadd.f32 %v2923, %v3062
        %v3064 = vpop.f32.mrb[0].mxu0
        %3065 = vmatprep.mubr.bf16.mxu0 0
        %3066 = vmatmul.mubr.bf16.gmra.mrb[0].mxu0 %v2955
        %v3067 = vpop.f32.mrb[0].mxu0
        %v3068 = vadd.f32 %v2923, %v3067
        %v3069 = vpop.f32.mrb[0].mxu0
        %v3070 = vpop.f32.mrb[0].mxu0
        %v3071 = vadd.f32 %v2923, %v3070
        %v3072 = vpop.f32.mrb[0].mxu0
        %3073 = vmatprep.mubr.bf16.mxu0 0
        %3074 = vmatmul.mubr.bf16.gmra.mrb[0].mxu0 %v2957
        %v3075 = vpop.f32.mrb[0].mxu0
        %v3076 = vadd.f32 %v2923, %v3075
        %v3077 = vpop.f32.mrb[0].mxu0
        %v3078 = vpop.f32.mrb[0].mxu0
        %v3079 = vadd.f32 %v2923, %v3078
        %v3080 = vpop.f32.mrb[0].mxu0
        %3081 = vmatprep.mubr.bf16.mxu0 0
        %3082 = vmatmul.mubr.bf16.gmra.mrb[0].mxu0 %v2959
        %v3083 = vpop.f32.mrb[0].mxu0
        %v3084 = vadd.f32 %v2923, %v3083
        %v3085 = vpop.f32.mrb[0].mxu0
        %v3086 = vpop.f32.mrb[0].mxu0
        %v3087 = vadd.f32 %v2923, %v3086
        %v3088 = vpop.f32.mrb[0].mxu0
        %3089 = vmatprep.mubr.bf16.mxu0 0
        %3090 = vmatmul.mubr.bf16.gmra.mrb[0].mxu0 %v2961
        %v3091 = vpop.f32.mrb[0].mxu0
        %v3092 = vadd.f32 %v2923, %v3091
        %v3093 = vpop.f32.mrb[0].mxu0
        %v3094 = vpop.f32.mrb[0].mxu0
        %v3095 = vadd.f32 %v2923, %v3094
        %v3096 = vpop.f32.mrb[0].mxu0
        %3097 = vmatprep.mubr.bf16.mxu0 0
        %3098 = vmatmul.mubr.bf16.gmra.mrb[0].mxu0 %v2963
        %v3099 = vpop.f32.mrb[0].mxu0
        %v3100 = vadd.f32 %v2923, %v3099
        %v3101 = vpop.f32.mrb[0].mxu0
        %v3102 = vpop.f32.mrb[0].mxu0
        %v3103 = vadd.f32 %v2923, %v3102
        %v3104 = vpop.f32.mrb[0].mxu0
        %3105 = vmatprep.mubr.bf16.mxu0 0
        %3106 = vmatmul.mubr.bf16.gmra.mrb[0].mxu0 %v2965
        %v3107 = vpop.f32.mrb[0].mxu0
        %v3108 = vadd.f32 %v2923, %v3107
        %v3109 = vpop.f32.mrb[0].mxu0
        %v3110 = vpop.f32.mrb[0].mxu0
        %v3111 = vadd.f32 %v2923, %v3110
        %v3112 = vpop.f32.mrb[0].mxu0
        %3113 = vmatprep.mubr.bf16.mxu0 0
        %3114 = vmatmul.mubr.bf16.gmra.mrb[0].mxu0 %v2967
        %v3115 = vpop.f32.mrb[0].mxu0
        %v3116 = vadd.f32 %v2923, %v3115
        %v3117 = vpop.f32.mrb[0].mxu0
        %v3118 = vpop.f32.mrb[0].mxu0
        %v3119 = vadd.f32 %v2923, %v3118
        %v3120 = vpop.f32.mrb[0].mxu0
        %3121 = vmatprep.mubr.bf16.mxu0 0
        %3122 = vmatmul.mubr.bf16.gmra.mrb[0].mxu0 %v2969
        %v3123 = vpop.f32.mrb[0].mxu0
        %v3124 = vadd.f32 %v2923, %v3123
        %v3125 = vpop.f32.mrb[0].mxu0
        %v3126 = vpop.f32.mrb[0].mxu0
        %v3127 = vadd.f32 %v2923, %v3126
        %v3128 = vpop.f32.mrb[0].mxu0
        %3129 = vmatprep.mubr.bf16.mxu0 0
        %3130 = vmatmul.mubr.bf16.gmra.mrb[0].mxu0 %v2971
        %v3131 = vpop.f32.mrb[0].mxu0
        %v3132 = vadd.f32 %v2923, %v3131
        %v3133 = vpop.f32.mrb[0].mxu0
        %v3134 = vpop.f32.mrb[0].mxu0
        %v3135 = vadd.f32 %v2923, %v3134
        %v3136 = vpop.f32.mrb[0].mxu0
        %3137 = vdwg.mxu0
        %v3138 = vmax.f32 %v3012, 0.0
        %v3139 = vmax.f32 %v3015, 0.0
        %v3140 = vmax.f32 %v3020, 0.0
        %v3141 = vmax.f32 %v3023, 0.0
        %v3142 = vmax.f32 %v3028, 0.0
        %v3143 = vmax.f32 %v3031, 0.0
        %v3144 = vmax.f32 %v3036, 0.0
        %v3145 = vmax.f32 %v3039, 0.0
        %v3146 = vmax.f32 %v3044, 0.0
        %v3147 = vmax.f32 %v3047, 0.0
        %v3148 = vmax.f32 %v3052, 0.0
        %v3149 = vmax.f32 %v3055, 0.0
        %v3150 = vmax.f32 %v3060, 0.0
        %v3151 = vmax.f32 %v3063, 0.0
        %v3152 = vmax.f32 %v3068, 0.0
        %v3153 = vmax.f32 %v3071, 0.0
        %v3154 = vmax.f32 %v3076, 0.0
        %v3155 = vmax.f32 %v3079, 0.0
        %v3156 = vmax.f32 %v3084, 0.0
        %v3157 = vmax.f32 %v3087, 0.0
        %v3158 = vmax.f32 %v3092, 0.0
        %v3159 = vmax.f32 %v3095, 0.0
        %v3160 = vmax.f32 %v3100, 0.0
        %v3161 = vmax.f32 %v3103, 0.0
        %v3162 = vmax.f32 %v3108, 0.0
        %v3163 = vmax.f32 %v3111, 0.0
        %v3164 = vmax.f32 %v3116, 0.0
        %v3165 = vmax.f32 %v3119, 0.0
        %v3166 = vmax.f32 %v3124, 0.0
        %v3167 = vmax.f32 %v3127, 0.0
        %v3168 = vmax.f32 %v3132, 0.0
        %v3169 = vmax.f32 %v3135, 0.0
        %v3170 = vpack.c.bf16 %v3139, %v3138
        %v3171 = vpack.c.bf16 %v3141, %v3140
        %v3172 = vpack.c.bf16 %v3143, %v3142
        %v3173 = vpack.c.bf16 %v3145, %v3144
        %v3174 = vpack.c.bf16 %v3147, %v3146
        %v3175 = vpack.c.bf16 %v3149, %v3148
        %v3176 = vpack.c.bf16 %v3151, %v3150
        %v3177 = vpack.c.bf16 %v3153, %v3152
        %v3178 = vpack.c.bf16 %v3155, %v3154
        %v3179 = vpack.c.bf16 %v3157, %v3156
        %v3180 = vpack.c.bf16 %v3159, %v3158
        %v3181 = vpack.c.bf16 %v3161, %v3160
        %v3182 = vpack.c.bf16 %v3163, %v3162
        %v3183 = vpack.c.bf16 %v3165, %v3164
        %v3184 = vpack.c.bf16 %v3167, %v3166
        %v3185 = vpack.c.bf16 %v3169, %v3168
        %v3202 = vunpack.c.l.b16 %v3170
        %v3203 = vunpack.c.h.b16 %v3170
        %v3204 = vunpack.c.l.b16 %v3171
        %v3205 = vunpack.c.h.b16 %v3171
        %v3206 = vunpack.c.l.b16 %v3172
        %v3207 = vunpack.c.h.b16 %v3172
        %v3208 = vunpack.c.l.b16 %v3173
        %v3209 = vunpack.c.h.b16 %v3173
        %v3210 = vunpack.c.l.b16 %v3174
        %v3211 = vunpack.c.h.b16 %v3174
        %v3212 = vunpack.c.l.b16 %v3175
        %v3213 = vunpack.c.h.b16 %v3175
        %v3214 = vunpack.c.l.b16 %v3176
        %v3215 = vunpack.c.h.b16 %v3176
        %v3216 = vunpack.c.l.b16 %v3177
        %v3217 = vunpack.c.h.b16 %v3177
        %v3218 = vunpack.c.l.b16 %v3178
        %v3219 = vunpack.c.h.b16 %v3178
        %v3220 = vunpack.c.l.b16 %v3179
        %v3221 = vunpack.c.h.b16 %v3179
        %v3222 = vunpack.c.l.b16 %v3180
        %v3223 = vunpack.c.h.b16 %v3180
        %v3224 = vunpack.c.l.b16 %v3181
        %v3225 = vunpack.c.h.b16 %v3181
        %v3226 = vunpack.c.l.b16 %v3182
        %v3227 = vunpack.c.h.b16 %v3182
        %v3228 = vunpack.c.l.b16 %v3183
        %v3229 = vunpack.c.h.b16 %v3183
        %v3230 = vunpack.c.l.b16 %v3184
        %v3231 = vunpack.c.h.b16 %v3184
        %v3232 = vunpack.c.l.b16 %v3185
        %v3233 = vunpack.c.h.b16 %v3185
        %v3234 = vpack.c.b16 %v3202, %v3202
        %v3235 = vpack.c.b16 %v3203, %v3203
        %v3236 = vpack.c.b16 %v3204, %v3204
        %v3237 = vpack.c.b16 %v3205, %v3205
        %v3238 = vpack.c.b16 %v3206, %v3206
        %v3239 = vpack.c.b16 %v3207, %v3207
        %v3240 = vpack.c.b16 %v3208, %v3208
        %v3241 = vpack.c.b16 %v3209, %v3209
        %v3242 = vpack.c.b16 %v3210, %v3210
        %v3243 = vpack.c.b16 %v3211, %v3211
        %v3244 = vpack.c.b16 %v3212, %v3212
        %v3245 = vpack.c.b16 %v3213, %v3213
        %v3246 = vpack.c.b16 %v3214, %v3214
        %v3247 = vpack.c.b16 %v3215, %v3215
        %v3248 = vpack.c.b16 %v3216, %v3216
        %v3249 = vpack.c.b16 %v3217, %v3217
        %v3250 = vpack.c.b16 %v3218, %v3218
        %v3251 = vpack.c.b16 %v3219, %v3219
        %v3252 = vpack.c.b16 %v3220, %v3220
        %v3253 = vpack.c.b16 %v3221, %v3221
        %v3254 = vpack.c.b16 %v3222, %v3222
        %v3255 = vpack.c.b16 %v3223, %v3223
        %v3256 = vpack.c.b16 %v3224, %v3224
        %v3257 = vpack.c.b16 %v3225, %v3225
        %v3258 = vpack.c.b16 %v3226, %v3226
        %v3259 = vpack.c.b16 %v3227, %v3227
        %v3260 = vpack.c.b16 %v3228, %v3228
        %v3261 = vpack.c.b16 %v3229, %v3229
        %v3262 = vpack.c.b16 %v3230, %v3230
        %v3263 = vpack.c.b16 %v3231, %v3231
        %v3264 = vpack.c.b16 %v3232, %v3232
        %v3265 = vpack.c.b16 %v3233, %v3233
        %v3267 = vshrl.u32 %v3234, 16
        %v3269 = vrot.slane %v3267, 7
        %v3270 = vshll.u32 %v3234, 16
        %v3272 = vor.u32 %v3269, %v3270
        %v3273 = vrot.slane %v3269, 4
        %v3275 = vshrl.u32 %v3235, 16
        %v3277 = vrot.slane %v3275, 7
        %v3278 = vshll.u32 %v3235, 16
        %v3280 = vor.u32 %v3277, %v3278
        %v3281 = vsel %vm514, %v3273, %v3280
        %v3282 = vrot.slane %v3277, 4
        %v3284 = vshrl.u32 %v3236, 16
        %v3286 = vrot.slane %v3284, 7
        %v3287 = vshll.u32 %v3236, 16
        %v3289 = vor.u32 %v3286, %v3287
        %v3290 = vrot.slane %v3286, 4
        %v3292 = vshrl.u32 %v3237, 16
        %v3294 = vrot.slane %v3292, 7
        %v3295 = vshll.u32 %v3237, 16
        %v3297 = vor.u32 %v3294, %v3295
        %v3298 = vsel %vm514, %v3290, %v3297
        %v3299 = vrot.slane %v3294, 4
        %v3301 = vshrl.u32 %v3238, 16
        %v3303 = vrot.slane %v3301, 7
        %v3304 = vshll.u32 %v3238, 16
        %v3306 = vor.u32 %v3303, %v3304
        %v3307 = vrot.slane %v3303, 4
        %v3309 = vshrl.u32 %v3239, 16
        %v3311 = vrot.slane %v3309, 7
        %v3312 = vshll.u32 %v3239, 16
        %v3314 = vor.u32 %v3311, %v3312
        %v3315 = vsel %vm514, %v3307, %v3314
        %v3316 = vrot.slane %v3311, 4
        %v3318 = vshrl.u32 %v3240, 16
        %v3320 = vrot.slane %v3318, 7
        %v3321 = vshll.u32 %v3240, 16
        %v3323 = vor.u32 %v3320, %v3321
        %v3324 = vrot.slane %v3320, 4
        %v3326 = vshrl.u32 %v3241, 16
        %v3328 = vrot.slane %v3326, 7
        %v3329 = vshll.u32 %v3241, 16
        %v3331 = vor.u32 %v3328, %v3329
        %v3332 = vsel %vm514, %v3324, %v3331
        %v3333 = vrot.slane %v3328, 4
        %v3335 = vshrl.u32 %v3242, 16
        %v3337 = vrot.slane %v3335, 7
        %v3338 = vshll.u32 %v3242, 16
        %v3340 = vor.u32 %v3337, %v3338
        %v3341 = vrot.slane %v3337, 4
        %v3343 = vshrl.u32 %v3243, 16
        %v3345 = vrot.slane %v3343, 7
        %v3346 = vshll.u32 %v3243, 16
        %v3348 = vor.u32 %v3345, %v3346
        %v3349 = vsel %vm514, %v3341, %v3348
        %v3350 = vrot.slane %v3345, 4
        %v3352 = vshrl.u32 %v3244, 16
        %v3354 = vrot.slane %v3352, 7
        %v3355 = vshll.u32 %v3244, 16
        %v3357 = vor.u32 %v3354, %v3355
        %v3358 = vrot.slane %v3354, 4
        %v3360 = vshrl.u32 %v3245, 16
        %v3362 = vrot.slane %v3360, 7
        %v3363 = vshll.u32 %v3245, 16
        %v3365 = vor.u32 %v3362, %v3363
        %v3366 = vsel %vm514, %v3358, %v3365
        %v3367 = vrot.slane %v3362, 4
        %v3369 = vshrl.u32 %v3246, 16
        %v3371 = vrot.slane %v3369, 7
        %v3372 = vshll.u32 %v3246, 16
        %v3374 = vor.u32 %v3371, %v3372
        %v3375 = vrot.slane %v3371, 4
        %v3377 = vshrl.u32 %v3247, 16
        %v3379 = vrot.slane %v3377, 7
        %v3380 = vshll.u32 %v3247, 16
        %v3382 = vor.u32 %v3379, %v3380
        %v3383 = vsel %vm514, %v3375, %v3382
        %v3384 = vrot.slane %v3379, 4
        %v3386 = vshrl.u32 %v3248, 16
        %v3388 = vrot.slane %v3386, 7
        %v3389 = vshll.u32 %v3248, 16
        %v3391 = vor.u32 %v3388, %v3389
        %v3392 = vrot.slane %v3388, 4
        %v3394 = vshrl.u32 %v3249, 16
        %v3396 = vrot.slane %v3394, 7
        %v3397 = vshll.u32 %v3249, 16
        %v3399 = vor.u32 %v3396, %v3397
        %v3400 = vsel %vm514, %v3392, %v3399
        %v3401 = vrot.slane %v3396, 4
        %v3403 = vshrl.u32 %v3250, 16
        %v3405 = vrot.slane %v3403, 7
        %v3406 = vshll.u32 %v3250, 16
        %v3408 = vor.u32 %v3405, %v3406
        %v3409 = vrot.slane %v3405, 4
        %v3411 = vshrl.u32 %v3251, 16
        %v3413 = vrot.slane %v3411, 7
        %v3414 = vshll.u32 %v3251, 16
        %v3416 = vor.u32 %v3413, %v3414
        %v3417 = vsel %vm514, %v3409, %v3416
        %v3418 = vrot.slane %v3413, 4
        %v3420 = vshrl.u32 %v3252, 16
        %v3422 = vrot.slane %v3420, 7
        %v3423 = vshll.u32 %v3252, 16
        %v3425 = vor.u32 %v3422, %v3423
        %v3426 = vrot.slane %v3422, 4
        %v3428 = vshrl.u32 %v3253, 16
        %v3430 = vrot.slane %v3428, 7
        %v3431 = vshll.u32 %v3253, 16
        %v3433 = vor.u32 %v3430, %v3431
        %v3434 = vsel %vm514, %v3426, %v3433
        %v3435 = vrot.slane %v3430, 4
        %v3437 = vshrl.u32 %v3254, 16
        %v3439 = vrot.slane %v3437, 7
        %v3440 = vshll.u32 %v3254, 16
        %v3442 = vor.u32 %v3439, %v3440
        %v3443 = vrot.slane %v3439, 4
        %v3445 = vshrl.u32 %v3255, 16
        %v3447 = vrot.slane %v3445, 7
        %v3448 = vshll.u32 %v3255, 16
        %v3450 = vor.u32 %v3447, %v3448
        %v3451 = vsel %vm514, %v3443, %v3450
        %v3452 = vrot.slane %v3447, 4
        %v3454 = vshrl.u32 %v3256, 16
        %v3456 = vrot.slane %v3454, 7
        %v3457 = vshll.u32 %v3256, 16
        %v3459 = vor.u32 %v3456, %v3457
        %v3460 = vrot.slane %v3456, 4
        %v3462 = vshrl.u32 %v3257, 16
        %v3464 = vrot.slane %v3462, 7
        %v3465 = vshll.u32 %v3257, 16
        %v3467 = vor.u32 %v3464, %v3465
        %v3468 = vsel %vm514, %v3460, %v3467
        %v3469 = vrot.slane %v3464, 4
        %v3471 = vshrl.u32 %v3258, 16
        %v3473 = vrot.slane %v3471, 7
        %v3474 = vshll.u32 %v3258, 16
        %v3476 = vor.u32 %v3473, %v3474
        %v3477 = vrot.slane %v3473, 4
        %v3479 = vshrl.u32 %v3259, 16
        %v3481 = vrot.slane %v3479, 7
        %v3482 = vshll.u32 %v3259, 16
        %v3484 = vor.u32 %v3481, %v3482
        %v3485 = vsel %vm514, %v3477, %v3484
        %v3486 = vrot.slane %v3481, 4
        %v3488 = vshrl.u32 %v3260, 16
        %v3490 = vrot.slane %v3488, 7
        %v3491 = vshll.u32 %v3260, 16
        %v3493 = vor.u32 %v3490, %v3491
        %v3494 = vrot.slane %v3490, 4
        %v3496 = vshrl.u32 %v3261, 16
        %v3498 = vrot.slane %v3496, 7
        %v3499 = vshll.u32 %v3261, 16
        %v3501 = vor.u32 %v3498, %v3499
        %v3502 = vsel %vm514, %v3494, %v3501
        %v3503 = vrot.slane %v3498, 4
        %v3505 = vshrl.u32 %v3262, 16
        %v3507 = vrot.slane %v3505, 7
        %v3508 = vshll.u32 %v3262, 16
        %v3510 = vor.u32 %v3507, %v3508
        %v3511 = vrot.slane %v3507, 4
        %v3513 = vshrl.u32 %v3263, 16
        %v3515 = vrot.slane %v3513, 7
        %v3516 = vshll.u32 %v3263, 16
        %v3518 = vor.u32 %v3515, %v3516
        %v3519 = vsel %vm514, %v3511, %v3518
        %v3520 = vrot.slane %v3515, 4
        %v3522 = vshrl.u32 %v3264, 16
        %v3524 = vrot.slane %v3522, 7
        %v3525 = vshll.u32 %v3264, 16
        %v3527 = vor.u32 %v3524, %v3525
        %v3528 = vrot.slane %v3524, 4
        %v3530 = vshrl.u32 %v3265, 16
        %v3532 = vrot.slane %v3530, 7
        %v3533 = vshll.u32 %v3265, 16
        %v3535 = vor.u32 %v3532, %v3533
        %v3536 = vsel %vm514, %v3528, %v3535
        %v3537 = vrot.slane %v3532, 4
        %s3586 = scalar_lea.vmem [#allocation3], 12
        %vm3587 = vcmask 257024
        %vm3588 = vmand %vm3587, %vm305
        %v3589 = vld [vmem:[%s3586] sm:$0xf]
        %v3590 = vsel %vm3588, %v3272, %v3589
        %3591 = vst [vmem:[%s3586] sm:$0xf] %v3590
        %3592 = vst.msk [vmem:[%s3586 + $0x4] sm:$0xf] %vm361, %v3281
        %v3593 = vld [vmem:[%s3586 + $0x8] sm:$0x1]
        %v3594 = vsel %vm371, %v3282, %v3593
        %3595 = vst [vmem:[%s3586 + $0x8] sm:$0x1] %v3594
        %v3596 = vld [vmem:[%s3586 + $0xc] sm:$0xf]
        %v3597 = vsel %vm3588, %v3289, %v3596
        %3598 = vst [vmem:[%s3586 + $0xc] sm:$0xf] %v3597
        %3599 = vst.msk [vmem:[%s3586 + $0x10] sm:$0xf] %vm361, %v3298
        %v3600 = vld [vmem:[%s3586 + $0x14] sm:$0x1]
        %v3601 = vsel %vm371, %v3299, %v3600
        %3602 = vst [vmem:[%s3586 + $0x14] sm:$0x1] %v3601
        %v3603 = vld [vmem:[%s3586 + $0x18] sm:$0xf]
        %v3604 = vsel %vm3588, %v3306, %v3603
        %3605 = vst [vmem:[%s3586 + $0x18] sm:$0xf] %v3604
        %3606 = vst.msk [vmem:[%s3586 + $0x1c] sm:$0xf] %vm361, %v3315
        %v3607 = vld [vmem:[%s3586 + $0x20] sm:$0x1]
        %v3608 = vsel %vm371, %v3316, %v3607
        %3609 = vst [vmem:[%s3586 + $0x20] sm:$0x1] %v3608
        %v3610 = vld [vmem:[%s3586 + $0x24] sm:$0xf]
        %v3611 = vsel %vm3588, %v3323, %v3610
        %3612 = vst [vmem:[%s3586 + $0x24] sm:$0xf] %v3611
        %3613 = vst.msk [vmem:[%s3586 + $0x28] sm:$0xf] %vm361, %v3332
        %v3614 = vld [vmem:[%s3586 + $0x2c] sm:$0x1]
        %v3615 = vsel %vm371, %v3333, %v3614
        %3616 = vst [vmem:[%s3586 + $0x2c] sm:$0x1] %v3615
        %v3617 = vld [vmem:[%s3586 + $0x30] sm:$0xf]
        %v3618 = vsel %vm3588, %v3340, %v3617
        %3619 = vst [vmem:[%s3586 + $0x30] sm:$0xf] %v3618
        %3620 = vst.msk [vmem:[%s3586 + $0x34] sm:$0xf] %vm361, %v3349
        %v3621 = vld [vmem:[%s3586 + $0x38] sm:$0x1]
        %v3622 = vsel %vm371, %v3350, %v3621
        %3623 = vst [vmem:[%s3586 + $0x38] sm:$0x1] %v3622
        %v3624 = vld [vmem:[%s3586 + $0x3c] sm:$0xf]
        %v3625 = vsel %vm3588, %v3357, %v3624
        %3626 = vst [vmem:[%s3586 + $0x3c] sm:$0xf] %v3625
        %3627 = vst.msk [vmem:[%s3586 + $0x40] sm:$0xf] %vm361, %v3366
        %v3628 = vld [vmem:[%s3586 + $0x44] sm:$0x1]
        %v3629 = vsel %vm371, %v3367, %v3628
        %3630 = vst [vmem:[%s3586 + $0x44] sm:$0x1] %v3629
        %v3631 = vld [vmem:[%s3586 + $0x48] sm:$0xf]
        %v3632 = vsel %vm3588, %v3374, %v3631
        %3633 = vst [vmem:[%s3586 + $0x48] sm:$0xf] %v3632
        %3634 = vst.msk [vmem:[%s3586 + $0x4c] sm:$0xf] %vm361, %v3383
        %v3635 = vld [vmem:[%s3586 + $0x50] sm:$0x1]
        %v3636 = vsel %vm371, %v3384, %v3635
        %3637 = vst [vmem:[%s3586 + $0x50] sm:$0x1] %v3636
        %v3638 = vld [vmem:[%s3586 + $0x54] sm:$0xf]
        %v3639 = vsel %vm3588, %v3391, %v3638
        %3640 = vst [vmem:[%s3586 + $0x54] sm:$0xf] %v3639
        %3641 = vst.msk [vmem:[%s3586 + $0x58] sm:$0xf] %vm361, %v3400
        %v3642 = vld [vmem:[%s3586 + $0x5c] sm:$0x1]
        %v3643 = vsel %vm371, %v3401, %v3642
        %3644 = vst [vmem:[%s3586 + $0x5c] sm:$0x1] %v3643
        %v3645 = vld [vmem:[%s3586 + $0x60] sm:$0xf]
        %v3646 = vsel %vm3588, %v3408, %v3645
        %3647 = vst [vmem:[%s3586 + $0x60] sm:$0xf] %v3646
        %3648 = vst.msk [vmem:[%s3586 + $0x64] sm:$0xf] %vm361, %v3417
        %v3649 = vld [vmem:[%s3586 + $0x68] sm:$0x1]
        %v3650 = vsel %vm371, %v3418, %v3649
        %3651 = vst [vmem:[%s3586 + $0x68] sm:$0x1] %v3650
        %v3652 = vld [vmem:[%s3586 + $0x6c] sm:$0xf]
        %v3653 = vsel %vm3588, %v3425, %v3652
        %3654 = vst [vmem:[%s3586 + $0x6c] sm:$0xf] %v3653
        %3655 = vst.msk [vmem:[%s3586 + $0x70] sm:$0xf] %vm361, %v3434
        %v3656 = vld [vmem:[%s3586 + $0x74] sm:$0x1]
        %v3657 = vsel %vm371, %v3435, %v3656
        %3658 = vst [vmem:[%s3586 + $0x74] sm:$0x1] %v3657
        %v3659 = vld [vmem:[%s3586 + $0x78] sm:$0xf]
        %v3660 = vsel %vm3588, %v3442, %v3659
        %3661 = vst [vmem:[%s3586 + $0x78] sm:$0xf] %v3660
        %3662 = vst.msk [vmem:[%s3586 + $0x7c] sm:$0xf] %vm361, %v3451
        %v3663 = vld [vmem:[%s3586 + $0x80] sm:$0x1]
        %v3664 = vsel %vm371, %v3452, %v3663
        %3665 = vst [vmem:[%s3586 + $0x80] sm:$0x1] %v3664
        %v3666 = vld [vmem:[%s3586 + $0x84] sm:$0xf]
        %v3667 = vsel %vm3588, %v3459, %v3666
        %3668 = vst [vmem:[%s3586 + $0x84] sm:$0xf] %v3667
        %3669 = vst.msk [vmem:[%s3586 + $0x88] sm:$0xf] %vm361, %v3468
        %v3670 = vld [vmem:[%s3586 + $0x8c] sm:$0x1]
        %v3671 = vsel %vm371, %v3469, %v3670
        %3672 = vst [vmem:[%s3586 + $0x8c] sm:$0x1] %v3671
        %v3673 = vld [vmem:[%s3586 + $0x90] sm:$0xf]
        %v3674 = vsel %vm3588, %v3476, %v3673
        %3675 = vst [vmem:[%s3586 + $0x90] sm:$0xf] %v3674
        %3676 = vst.msk [vmem:[%s3586 + $0x94] sm:$0xf] %vm361, %v3485
        %v3677 = vld [vmem:[%s3586 + $0x98] sm:$0x1]
        %v3678 = vsel %vm371, %v3486, %v3677
        %3679 = vst [vmem:[%s3586 + $0x98] sm:$0x1] %v3678
        %v3680 = vld [vmem:[%s3586 + $0x9c] sm:$0xf]
        %v3681 = vsel %vm3588, %v3493, %v3680
        %3682 = vst [vmem:[%s3586 + $0x9c] sm:$0xf] %v3681
        %3683 = vst.msk [vmem:[%s3586 + $0xa0] sm:$0xf] %vm361, %v3502
        %v3684 = vld [vmem:[%s3586 + $0xa4] sm:$0x1]
        %v3685 = vsel %vm371, %v3503, %v3684
        %3686 = vst [vmem:[%s3586 + $0xa4] sm:$0x1] %v3685
        %v3687 = vld [vmem:[%s3586 + $0xa8] sm:$0xf]
        %v3688 = vsel %vm3588, %v3510, %v3687
        %3689 = vst [vmem:[%s3586 + $0xa8] sm:$0xf] %v3688
        %3690 = vst.msk [vmem:[%s3586 + $0xac] sm:$0xf] %vm361, %v3519
        %v3691 = vld [vmem:[%s3586 + $0xb0] sm:$0x1]
        %v3692 = vsel %vm371, %v3520, %v3691
        %3693 = vst [vmem:[%s3586 + $0xb0] sm:$0x1] %v3692
        %v3694 = vld [vmem:[%s3586 + $0xb4] sm:$0xf]
        %v3695 = vsel %vm3588, %v3527, %v3694
        %3696 = vst [vmem:[%s3586 + $0xb4] sm:$0xf] %v3695
        %3697 = vst.msk [vmem:[%s3586 + $0xb8] sm:$0xf] %vm361, %v3536
        %v3698 = vld [vmem:[%s3586 + $0xbc] sm:$0x1]
        %v3699 = vsel %vm371, %v3537, %v3698
        %3700 = vst [vmem:[%s3586 + $0xbc] sm:$0x1] %v3699
        %v3701 = vld [vmem:[#allocation3] sm:$0xf]
        %v3702 = vld [vmem:[#allocation3 + $0x4] sm:$0xf]
        %v3703 = vld [vmem:[#allocation3 + $0xc] sm:$0xf]
        %v3704 = vld [vmem:[#allocation3 + $0x10] sm:$0xf]
        %v3705 = vld [vmem:[#allocation3 + $0x18] sm:$0xf]
        %v3706 = vld [vmem:[#allocation3 + $0x1c] sm:$0xf]
        %v3707 = vld [vmem:[#allocation3 + $0x24] sm:$0xf]
        %v3708 = vld [vmem:[#allocation3 + $0x28] sm:$0xf]
        %v3709 = vld [vmem:[#allocation3 + $0x30] sm:$0xf]
        %v3710 = vld [vmem:[#allocation3 + $0x34] sm:$0xf]
        %v3711 = vld [vmem:[#allocation3 + $0x3c] sm:$0xf]
        %v3712 = vld [vmem:[#allocation3 + $0x40] sm:$0xf]
        %v3713 = vld [vmem:[#allocation3 + $0x48] sm:$0xf]
        %v3714 = vld [vmem:[#allocation3 + $0x4c] sm:$0xf]
        %v3715 = vld [vmem:[#allocation3 + $0x54] sm:$0xf]
        %v3716 = vld [vmem:[#allocation3 + $0x58] sm:$0xf]
        %v3717 = vld [vmem:[#allocation3 + $0x60] sm:$0xf]
        %v3718 = vld [vmem:[#allocation3 + $0x64] sm:$0xf]
        %v3719 = vld [vmem:[#allocation3 + $0x6c] sm:$0xf]
        %v3720 = vld [vmem:[#allocation3 + $0x70] sm:$0xf]
        %v3721 = vld [vmem:[#allocation3 + $0x78] sm:$0xf]
        %v3722 = vld [vmem:[#allocation3 + $0x7c] sm:$0xf]
        %v3723 = vld [vmem:[#allocation3 + $0x84] sm:$0xf]
        %v3724 = vld [vmem:[#allocation3 + $0x88] sm:$0xf]
        %v3725 = vld [vmem:[#allocation3 + $0x90] sm:$0xf]
        %v3726 = vld [vmem:[#allocation3 + $0x94] sm:$0xf]
        %v3727 = vld [vmem:[#allocation3 + $0x9c] sm:$0xf]
        %v3728 = vld [vmem:[#allocation3 + $0xa0] sm:$0xf]
        %v3729 = vld [vmem:[#allocation3 + $0xa8] sm:$0xf]
        %v3730 = vld [vmem:[#allocation3 + $0xac] sm:$0xf]
        %v3731 = vld [vmem:[#allocation3 + $0xb4] sm:$0xf]
        %v3732 = vld [vmem:[#allocation3 + $0xb8] sm:$0xf]
        %v3733 = vld [vmem:[#allocation3 + $0x8] sm:$0x1]
        %v3734 = vld [vmem:[#allocation3 + $0x14] sm:$0x1]
        %v3735 = vld [vmem:[#allocation3 + $0x20] sm:$0x1]
        %v3736 = vld [vmem:[#allocation3 + $0x2c] sm:$0x1]
        %v3737 = vld [vmem:[#allocation3 + $0x38] sm:$0x1]
        %v3738 = vld [vmem:[#allocation3 + $0x44] sm:$0x1]
        %v3739 = vld [vmem:[#allocation3 + $0x50] sm:$0x1]
        %v3740 = vld [vmem:[#allocation3 + $0x5c] sm:$0x1]
        %v3741 = vld [vmem:[#allocation3 + $0x68] sm:$0x1]
        %v3742 = vld [vmem:[#allocation3 + $0x74] sm:$0x1]
        %v3743 = vld [vmem:[#allocation3 + $0x80] sm:$0x1]
        %v3744 = vld [vmem:[#allocation3 + $0x8c] sm:$0x1]
        %v3745 = vld [vmem:[#allocation3 + $0x98] sm:$0x1]
        %v3746 = vld [vmem:[#allocation3 + $0xa4] sm:$0x1]
        %v3747 = vld [vmem:[#allocation3 + $0xb0] sm:$0x1]
        %v3748 = vld [vmem:[#allocation3 + $0xbc] sm:$0x1]
        %v3749 = vld [vmem:[#allocation3] sm:$0xe]
        %v3750 = vld [vmem:[#allocation3 + $0xc] sm:$0xe]
        %v3751 = vld [vmem:[#allocation3 + $0x18] sm:$0xe]
        %v3752 = vld [vmem:[#allocation3 + $0x24] sm:$0xe]
        %v3753 = vld [vmem:[#allocation3 + $0x30] sm:$0xe]
        %v3754 = vld [vmem:[#allocation3 + $0x3c] sm:$0xe]
        %v3755 = vld [vmem:[#allocation3 + $0x48] sm:$0xe]
        %v3756 = vld [vmem:[#allocation3 + $0x54] sm:$0xe]
        %v3757 = vld [vmem:[#allocation3 + $0x60] sm:$0xe]
        %v3758 = vld [vmem:[#allocation3 + $0x6c] sm:$0xe]
        %v3759 = vld [vmem:[#allocation3 + $0x78] sm:$0xe]
        %v3760 = vld [vmem:[#allocation3 + $0x84] sm:$0xe]
        %v3761 = vld [vmem:[#allocation3 + $0x90] sm:$0xe]
        %v3762 = vld [vmem:[#allocation3 + $0x9c] sm:$0xe]
        %v3763 = vld [vmem:[#allocation3 + $0xa8] sm:$0xe]
        %v3764 = vld [vmem:[#allocation3 + $0xb4] sm:$0xe]
        %v3765 = vld [vmem:[%s3586] sm:$0xf]
        %v3766 = vld [vmem:[%s3586 + $0x4] sm:$0xf]
        %v3767 = vld [vmem:[%s3586 + $0xc] sm:$0xf]
        %v3768 = vld [vmem:[%s3586 + $0x10] sm:$0xf]
        %v3769 = vld [vmem:[%s3586 + $0x18] sm:$0xf]
        %v3770 = vld [vmem:[%s3586 + $0x1c] sm:$0xf]
        %v3771 = vld [vmem:[%s3586 + $0x24] sm:$0xf]
        %v3772 = vld [vmem:[%s3586 + $0x28] sm:$0xf]
        %v3773 = vld [vmem:[%s3586 + $0x30] sm:$0xf]
        %v3774 = vld [vmem:[%s3586 + $0x34] sm:$0xf]
        %v3775 = vld [vmem:[%s3586 + $0x3c] sm:$0xf]
        %v3776 = vld [vmem:[%s3586 + $0x40] sm:$0xf]
        %v3777 = vld [vmem:[%s3586 + $0x48] sm:$0xf]
        %v3778 = vld [vmem:[%s3586 + $0x4c] sm:$0xf]
        %v3779 = vld [vmem:[%s3586 + $0x54] sm:$0xf]
        %v3780 = vld [vmem:[%s3586 + $0x58] sm:$0xf]
        %v3781 = vld [vmem:[%s3586 + $0x60] sm:$0xf]
        %v3782 = vld [vmem:[%s3586 + $0x64] sm:$0xf]
        %v3783 = vld [vmem:[%s3586 + $0x6c] sm:$0xf]
        %v3784 = vld [vmem:[%s3586 + $0x70] sm:$0xf]
        %v3785 = vld [vmem:[%s3586 + $0x78] sm:$0xf]
        %v3786 = vld [vmem:[%s3586 + $0x7c] sm:$0xf]
        %v3787 = vld [vmem:[%s3586 + $0x84] sm:$0xf]
        %v3788 = vld [vmem:[%s3586 + $0x88] sm:$0xf]
        %v3789 = vld [vmem:[%s3586 + $0x90] sm:$0xf]
        %v3790 = vld [vmem:[%s3586 + $0x94] sm:$0xf]
        %v3791 = vld [vmem:[%s3586 + $0x9c] sm:$0xf]
        %v3792 = vld [vmem:[%s3586 + $0xa0] sm:$0xf]
        %v3793 = vld [vmem:[%s3586 + $0xa8] sm:$0xf]
        %v3794 = vld [vmem:[%s3586 + $0xac] sm:$0xf]
        %v3795 = vld [vmem:[%s3586 + $0xb4] sm:$0xf]
        %v3796 = vld [vmem:[%s3586 + $0xb8] sm:$0xf]
        %v3797 = vld [vmem:[%s3586 + $0x8] sm:$0x1]
        %v3798 = vld [vmem:[%s3586 + $0x14] sm:$0x1]
        %v3799 = vld [vmem:[%s3586 + $0x20] sm:$0x1]
        %v3800 = vld [vmem:[%s3586 + $0x2c] sm:$0x1]
        %v3801 = vld [vmem:[%s3586 + $0x38] sm:$0x1]
        %v3802 = vld [vmem:[%s3586 + $0x44] sm:$0x1]
        %v3803 = vld [vmem:[%s3586 + $0x50] sm:$0x1]
        %v3804 = vld [vmem:[%s3586 + $0x5c] sm:$0x1]
        %v3805 = vld [vmem:[%s3586 + $0x68] sm:$0x1]
        %v3806 = vld [vmem:[%s3586 + $0x74] sm:$0x1]
        %v3807 = vld [vmem:[%s3586 + $0x80] sm:$0x1]
        %v3808 = vld [vmem:[%s3586 + $0x8c] sm:$0x1]
        %v3809 = vld [vmem:[%s3586 + $0x98] sm:$0x1]
        %v3810 = vld [vmem:[%s3586 + $0xa4] sm:$0x1]
        %v3811 = vld [vmem:[%s3586 + $0xb0] sm:$0x1]
        %v3812 = vld [vmem:[%s3586 + $0xbc] sm:$0x1]
        %v3813 = vld [vmem:[%s3586] sm:$0xe]
        %v3814 = vld [vmem:[%s3586 + $0xc] sm:$0xe]
        %v3815 = vld [vmem:[%s3586 + $0x18] sm:$0xe]
        %v3816 = vld [vmem:[%s3586 + $0x24] sm:$0xe]
        %v3817 = vld [vmem:[%s3586 + $0x30] sm:$0xe]
        %v3818 = vld [vmem:[%s3586 + $0x3c] sm:$0xe]
        %v3819 = vld [vmem:[%s3586 + $0x48] sm:$0xe]
        %v3820 = vld [vmem:[%s3586 + $0x54] sm:$0xe]
        %v3821 = vld [vmem:[%s3586 + $0x60] sm:$0xe]
        %v3822 = vld [vmem:[%s3586 + $0x6c] sm:$0xe]
        %v3823 = vld [vmem:[%s3586 + $0x78] sm:$0xe]
        %v3824 = vld [vmem:[%s3586 + $0x84] sm:$0xe]
        %v3825 = vld [vmem:[%s3586 + $0x90] sm:$0xe]
        %v3826 = vld [vmem:[%s3586 + $0x9c] sm:$0xe]
        %v3827 = vld [vmem:[%s3586 + $0xa8] sm:$0xe]
        %v3828 = vld [vmem:[%s3586 + $0xb4] sm:$0xe]
        %s3829 = scalar_lea.vmem [#allocation3], 24
        %v3830 = vld [vmem:[%s3829] sm:$0xf]
        %v3831 = vld [vmem:[%s3829 + $0x4] sm:$0xf]
        %v3832 = vld [vmem:[%s3829 + $0xc] sm:$0xf]
        %v3833 = vld [vmem:[%s3829 + $0x10] sm:$0xf]
        %v3834 = vld [vmem:[%s3829 + $0x18] sm:$0xf]
        %v3835 = vld [vmem:[%s3829 + $0x1c] sm:$0xf]
        %v3836 = vld [vmem:[%s3829 + $0x24] sm:$0xf]
        %v3837 = vld [vmem:[%s3829 + $0x28] sm:$0xf]
        %v3838 = vld [vmem:[%s3829 + $0x30] sm:$0xf]
        %v3839 = vld [vmem:[%s3829 + $0x34] sm:$0xf]
        %v3840 = vld [vmem:[%s3829 + $0x3c] sm:$0xf]
        %v3841 = vld [vmem:[%s3829 + $0x40] sm:$0xf]
        %v3842 = vld [vmem:[%s3829 + $0x48] sm:$0xf]
        %v3843 = vld [vmem:[%s3829 + $0x4c] sm:$0xf]
        %v3844 = vld [vmem:[%s3829 + $0x54] sm:$0xf]
        %v3845 = vld [vmem:[%s3829 + $0x58] sm:$0xf]
        %v3846 = vld [vmem:[%s3829 + $0x60] sm:$0xf]
        %v3847 = vld [vmem:[%s3829 + $0x64] sm:$0xf]
        %v3848 = vld [vmem:[%s3829 + $0x6c] sm:$0xf]
        %v3849 = vld [vmem:[%s3829 + $0x70] sm:$0xf]
        %v3850 = vld [vmem:[%s3829 + $0x78] sm:$0xf]
        %v3851 = vld [vmem:[%s3829 + $0x7c] sm:$0xf]
        %v3852 = vld [vmem:[%s3829 + $0x84] sm:$0xf]
        %v3853 = vld [vmem:[%s3829 + $0x88] sm:$0xf]
        %v3854 = vld [vmem:[%s3829 + $0x90] sm:$0xf]
        %v3855 = vld [vmem:[%s3829 + $0x94] sm:$0xf]
        %v3856 = vld [vmem:[%s3829 + $0x9c] sm:$0xf]
        %v3857 = vld [vmem:[%s3829 + $0xa0] sm:$0xf]
        %v3858 = vld [vmem:[%s3829 + $0xa8] sm:$0xf]
        %v3859 = vld [vmem:[%s3829 + $0xac] sm:$0xf]
        %v3860 = vld [vmem:[%s3829 + $0xb4] sm:$0xf]
        %v3861 = vld [vmem:[%s3829 + $0xb8] sm:$0xf]
        %v3862 = vld [vmem:[%s3829 + $0x8] sm:$0x1]
        %v3863 = vld [vmem:[%s3829 + $0x14] sm:$0x1]
        %v3864 = vld [vmem:[%s3829 + $0x20] sm:$0x1]
        %v3865 = vld [vmem:[%s3829 + $0x2c] sm:$0x1]
        %v3866 = vld [vmem:[%s3829 + $0x38] sm:$0x1]
        %v3867 = vld [vmem:[%s3829 + $0x44] sm:$0x1]
        %v3868 = vld [vmem:[%s3829 + $0x50] sm:$0x1]
        %v3869 = vld [vmem:[%s3829 + $0x5c] sm:$0x1]
        %v3870 = vld [vmem:[%s3829 + $0x68] sm:$0x1]
        %v3871 = vld [vmem:[%s3829 + $0x74] sm:$0x1]
        %v3872 = vld [vmem:[%s3829 + $0x80] sm:$0x1]
        %v3873 = vld [vmem:[%s3829 + $0x8c] sm:$0x1]
        %v3874 = vld [vmem:[%s3829 + $0x98] sm:$0x1]
        %v3875 = vld [vmem:[%s3829 + $0xa4] sm:$0x1]
        %v3876 = vld [vmem:[%s3829 + $0xb0] sm:$0x1]
        %v3877 = vld [vmem:[%s3829 + $0xbc] sm:$0x1]
        %v3878 = vld [vmem:[%s3829] sm:$0xe]
        %v3879 = vld [vmem:[%s3829 + $0xc] sm:$0xe]
        %v3880 = vld [vmem:[%s3829 + $0x18] sm:$0xe]
        %v3881 = vld [vmem:[%s3829 + $0x24] sm:$0xe]
        %v3882 = vld [vmem:[%s3829 + $0x30] sm:$0xe]
        %v3883 = vld [vmem:[%s3829 + $0x3c] sm:$0xe]
        %v3884 = vld [vmem:[%s3829 + $0x48] sm:$0xe]
        %v3885 = vld [vmem:[%s3829 + $0x54] sm:$0xe]
        %v3886 = vld [vmem:[%s3829 + $0x60] sm:$0xe]
        %v3887 = vld [vmem:[%s3829 + $0x6c] sm:$0xe]
        %v3888 = vld [vmem:[%s3829 + $0x78] sm:$0xe]
        %v3889 = vld [vmem:[%s3829 + $0x84] sm:$0xe]
        %v3890 = vld [vmem:[%s3829 + $0x90] sm:$0xe]
        %v3891 = vld [vmem:[%s3829 + $0x9c] sm:$0xe]
        %v3892 = vld [vmem:[%s3829 + $0xa8] sm:$0xe]
        %v3893 = vld [vmem:[%s3829 + $0xb4] sm:$0xe]
        %v3926 = vunpack.c.l.b16 %v3701
        %v3927 = vunpack.c.l.b16 %v3702
        %v3928 = vunpack.c.l.b16 %v3703
        %v3929 = vunpack.c.l.b16 %v3704
        %v3930 = vunpack.c.l.b16 %v3705
        %v3931 = vunpack.c.l.b16 %v3706
        %v3932 = vunpack.c.l.b16 %v3707
        %v3933 = vunpack.c.l.b16 %v3708
        %v3934 = vunpack.c.l.b16 %v3709
        %v3935 = vunpack.c.l.b16 %v3710
        %v3936 = vunpack.c.l.b16 %v3711
        %v3937 = vunpack.c.l.b16 %v3712
        %v3938 = vunpack.c.l.b16 %v3713
        %v3939 = vunpack.c.l.b16 %v3714
        %v3940 = vunpack.c.l.b16 %v3715
        %v3941 = vunpack.c.l.b16 %v3716
        %v3942 = vunpack.c.l.b16 %v3717
        %v3943 = vunpack.c.l.b16 %v3718
        %v3944 = vunpack.c.l.b16 %v3719
        %v3945 = vunpack.c.l.b16 %v3720
        %v3946 = vunpack.c.l.b16 %v3721
        %v3947 = vunpack.c.l.b16 %v3722
        %v3948 = vunpack.c.l.b16 %v3723
        %v3949 = vunpack.c.l.b16 %v3724
        %v3950 = vunpack.c.l.b16 %v3725
        %v3951 = vunpack.c.l.b16 %v3726
        %v3952 = vunpack.c.l.b16 %v3727
        %v3953 = vunpack.c.l.b16 %v3728
        %v3954 = vunpack.c.l.b16 %v3729
        %v3955 = vunpack.c.l.b16 %v3730
        %v3956 = vunpack.c.l.b16 %v3731
        %v3957 = vunpack.c.l.b16 %v3732
        %v3958 = vpack.c.b16 %v3927, %v3926
        %v3959 = vpack.c.b16 %v3929, %v3928
        %v3960 = vpack.c.b16 %v3931, %v3930
        %v3961 = vpack.c.b16 %v3933, %v3932
        %v3962 = vpack.c.b16 %v3935, %v3934
        %v3963 = vpack.c.b16 %v3937, %v3936
        %v3964 = vpack.c.b16 %v3939, %v3938
        %v3965 = vpack.c.b16 %v3941, %v3940
        %v3966 = vpack.c.b16 %v3943, %v3942
        %v3967 = vpack.c.b16 %v3945, %v3944
        %v3968 = vpack.c.b16 %v3947, %v3946
        %v3969 = vpack.c.b16 %v3949, %v3948
        %v3970 = vpack.c.b16 %v3951, %v3950
        %v3971 = vpack.c.b16 %v3953, %v3952
        %v3972 = vpack.c.b16 %v3955, %v3954
        %v3973 = vpack.c.b16 %v3957, %v3956
        %v3990 = vunpack.c.l.b16 %v3733
        %v3991 = vunpack.c.l.b16 %v3734
        %v3992 = vunpack.c.l.b16 %v3735
        %v3993 = vunpack.c.l.b16 %v3736
        %v3994 = vunpack.c.l.b16 %v3737
        %v3995 = vunpack.c.l.b16 %v3738
        %v3996 = vunpack.c.l.b16 %v3739
        %v3997 = vunpack.c.l.b16 %v3740
        %v3998 = vunpack.c.l.b16 %v3741
        %v3999 = vunpack.c.l.b16 %v3742
        %v4000 = vunpack.c.l.b16 %v3743
        %v4001 = vunpack.c.l.b16 %v3744
        %v4002 = vunpack.c.l.b16 %v3745
        %v4003 = vunpack.c.l.b16 %v3746
        %v4004 = vunpack.c.l.b16 %v3747
        %v4005 = vunpack.c.l.b16 %v3748
        %v4006 = vpack.c.b16 %v3990, %v3990
        %v4007 = vpack.c.b16 %v3991, %v3991
        %v4008 = vpack.c.b16 %v3992, %v3992
        %v4009 = vpack.c.b16 %v3993, %v3993
        %v4010 = vpack.c.b16 %v3994, %v3994
        %v4011 = vpack.c.b16 %v3995, %v3995
        %v4012 = vpack.c.b16 %v3996, %v3996
        %v4013 = vpack.c.b16 %v3997, %v3997
        %v4014 = vpack.c.b16 %v3998, %v3998
        %v4015 = vpack.c.b16 %v3999, %v3999
        %v4016 = vpack.c.b16 %v4000, %v4000
        %v4017 = vpack.c.b16 %v4001, %v4001
        %v4018 = vpack.c.b16 %v4002, %v4002
        %v4019 = vpack.c.b16 %v4003, %v4003
        %v4020 = vpack.c.b16 %v4004, %v4004
        %v4021 = vpack.c.b16 %v4005, %v4005
        %v4023 = vshrl.u32 %v3958, 16
        %v4025 = vshll.u32 %v3958, 16
        %v4027 = vrot.slane %v4025, 1
        %v4028 = vor.u32 %v4023, %v4027
        %v4030 = vshll.u32 %v4006, 16
        %v4032 = vrot.slane %v4030, 1
        %v4033 = vsel %vm1271, %v4028, %v4032
        %v4035 = vshrl.u32 %v3959, 16
        %v4037 = vshll.u32 %v3959, 16
        %v4039 = vrot.slane %v4037, 1
        %v4040 = vor.u32 %v4035, %v4039
        %v4042 = vshll.u32 %v4007, 16
        %v4044 = vrot.slane %v4042, 1
        %v4045 = vsel %vm1271, %v4040, %v4044
        %v4047 = vshrl.u32 %v3960, 16
        %v4049 = vshll.u32 %v3960, 16
        %v4051 = vrot.slane %v4049, 1
        %v4052 = vor.u32 %v4047, %v4051
        %v4054 = vshll.u32 %v4008, 16
        %v4056 = vrot.slane %v4054, 1
        %v4057 = vsel %vm1271, %v4052, %v4056
        %v4059 = vshrl.u32 %v3961, 16
        %v4061 = vshll.u32 %v3961, 16
        %v4063 = vrot.slane %v4061, 1
        %v4064 = vor.u32 %v4059, %v4063
        %v4066 = vshll.u32 %v4009, 16
        %v4068 = vrot.slane %v4066, 1
        %v4069 = vsel %vm1271, %v4064, %v4068
        %v4071 = vshrl.u32 %v3962, 16
        %v4073 = vshll.u32 %v3962, 16
        %v4075 = vrot.slane %v4073, 1
        %v4076 = vor.u32 %v4071, %v4075
        %v4078 = vshll.u32 %v4010, 16
        %v4080 = vrot.slane %v4078, 1
        %v4081 = vsel %vm1271, %v4076, %v4080
        %v4083 = vshrl.u32 %v3963, 16
        %v4085 = vshll.u32 %v3963, 16
        %v4087 = vrot.slane %v4085, 1
        %v4088 = vor.u32 %v4083, %v4087
        %v4090 = vshll.u32 %v4011, 16
        %v4092 = vrot.slane %v4090, 1
        %v4093 = vsel %vm1271, %v4088, %v4092
        %v4095 = vshrl.u32 %v3964, 16
        %v4097 = vshll.u32 %v3964, 16
        %v4099 = vrot.slane %v4097, 1
        %v4100 = vor.u32 %v4095, %v4099
        %v4102 = vshll.u32 %v4012, 16
        %v4104 = vrot.slane %v4102, 1
        %v4105 = vsel %vm1271, %v4100, %v4104
        %v4107 = vshrl.u32 %v3965, 16
        %v4109 = vshll.u32 %v3965, 16
        %v4111 = vrot.slane %v4109, 1
        %v4112 = vor.u32 %v4107, %v4111
        %v4114 = vshll.u32 %v4013, 16
        %v4116 = vrot.slane %v4114, 1
        %v4117 = vsel %vm1271, %v4112, %v4116
        %v4119 = vshrl.u32 %v3966, 16
        %v4121 = vshll.u32 %v3966, 16
        %v4123 = vrot.slane %v4121, 1
        %v4124 = vor.u32 %v4119, %v4123
        %v4126 = vshll.u32 %v4014, 16
        %v4128 = vrot.slane %v4126, 1
        %v4129 = vsel %vm1271, %v4124, %v4128
        %v4131 = vshrl.u32 %v3967, 16
        %v4133 = vshll.u32 %v3967, 16
        %v4135 = vrot.slane %v4133, 1
        %v4136 = vor.u32 %v4131, %v4135
        %v4138 = vshll.u32 %v4015, 16
        %v4140 = vrot.slane %v4138, 1
        %v4141 = vsel %vm1271, %v4136, %v4140
        %v4143 = vshrl.u32 %v3968, 16
        %v4145 = vshll.u32 %v3968, 16
        %v4147 = vrot.slane %v4145, 1
        %v4148 = vor.u32 %v4143, %v4147
        %v4150 = vshll.u32 %v4016, 16
        %v4152 = vrot.slane %v4150, 1
        %v4153 = vsel %vm1271, %v4148, %v4152
        %v4155 = vshrl.u32 %v3969, 16
        %v4157 = vshll.u32 %v3969, 16
        %v4159 = vrot.slane %v4157, 1
        %v4160 = vor.u32 %v4155, %v4159
        %v4162 = vshll.u32 %v4017, 16
        %v4164 = vrot.slane %v4162, 1
        %v4165 = vsel %vm1271, %v4160, %v4164
        %v4167 = vshrl.u32 %v3970, 16
        %v4169 = vshll.u32 %v3970, 16
        %v4171 = vrot.slane %v4169, 1
        %v4172 = vor.u32 %v4167, %v4171
        %v4174 = vshll.u32 %v4018, 16
        %v4176 = vrot.slane %v4174, 1
        %v4177 = vsel %vm1271, %v4172, %v4176
        %v4179 = vshrl.u32 %v3971, 16
        %v4181 = vshll.u32 %v3971, 16
        %v4183 = vrot.slane %v4181, 1
        %v4184 = vor.u32 %v4179, %v4183
        %v4186 = vshll.u32 %v4019, 16
        %v4188 = vrot.slane %v4186, 1
        %v4189 = vsel %vm1271, %v4184, %v4188
        %v4191 = vshrl.u32 %v3972, 16
        %v4193 = vshll.u32 %v3972, 16
        %v4195 = vrot.slane %v4193, 1
        %v4196 = vor.u32 %v4191, %v4195
        %v4198 = vshll.u32 %v4020, 16
        %v4200 = vrot.slane %v4198, 1
        %v4201 = vsel %vm1271, %v4196, %v4200
        %v4203 = vshrl.u32 %v3973, 16
        %v4205 = vshll.u32 %v3973, 16
        %v4207 = vrot.slane %v4205, 1
        %v4208 = vor.u32 %v4203, %v4207
        %v4210 = vshll.u32 %v4021, 16
        %v4212 = vrot.slane %v4210, 1
        %v4213 = vsel %vm1271, %v4208, %v4212
        %4214 = vrot.lane.b32.xlu0 %v4033, 32
        %v4215 = vpop.permute.xlu0 %4214
        %4216 = vrot.lane.b32.xlu0 %v4045, 32
        %v4217 = vpop.permute.xlu0 %4216
        %4218 = vrot.lane.b32.xlu0 %v4057, 32
        %v4219 = vpop.permute.xlu0 %4218
        %4220 = vrot.lane.b32.xlu0 %v4069, 32
        %v4221 = vpop.permute.xlu0 %4220
        %4222 = vrot.lane.b32.xlu0 %v4081, 32
        %v4223 = vpop.permute.xlu0 %4222
        %4224 = vrot.lane.b32.xlu0 %v4093, 32
        %v4225 = vpop.permute.xlu0 %4224
        %4226 = vrot.lane.b32.xlu0 %v4105, 32
        %v4227 = vpop.permute.xlu0 %4226
        %4228 = vrot.lane.b32.xlu0 %v4117, 32
        %v4229 = vpop.permute.xlu0 %4228
        %4230 = vrot.lane.b32.xlu0 %v4129, 32
        %v4231 = vpop.permute.xlu0 %4230
        %4232 = vrot.lane.b32.xlu0 %v4141, 32
        %v4233 = vpop.permute.xlu0 %4232
        %4234 = vrot.lane.b32.xlu0 %v4153, 32
        %v4235 = vpop.permute.xlu0 %4234
        %4236 = vrot.lane.b32.xlu0 %v4165, 32
        %v4237 = vpop.permute.xlu0 %4236
        %4238 = vrot.lane.b32.xlu0 %v4177, 32
        %v4239 = vpop.permute.xlu0 %4238
        %4240 = vrot.lane.b32.xlu0 %v4189, 32
        %v4241 = vpop.permute.xlu0 %4240
        %4242 = vrot.lane.b32.xlu0 %v4201, 32
        %v4243 = vpop.permute.xlu0 %4242
        %4244 = vrot.lane.b32.xlu0 %v4213, 32
        %v4245 = vpop.permute.xlu0 %4244
        %v4262 = vunpack.c.l.b16 %v3749
        %v4263 = vunpack.c.l.b16 %v3750
        %v4264 = vunpack.c.l.b16 %v3751
        %v4265 = vunpack.c.l.b16 %v3752
        %v4266 = vunpack.c.l.b16 %v3753
        %v4267 = vunpack.c.l.b16 %v3754
        %v4268 = vunpack.c.l.b16 %v3755
        %v4269 = vunpack.c.l.b16 %v3756
        %v4270 = vunpack.c.l.b16 %v3757
        %v4271 = vunpack.c.l.b16 %v3758
        %v4272 = vunpack.c.l.b16 %v3759
        %v4273 = vunpack.c.l.b16 %v3760
        %v4274 = vunpack.c.l.b16 %v3761
        %v4275 = vunpack.c.l.b16 %v3762
        %v4276 = vunpack.c.l.b16 %v3763
        %v4277 = vunpack.c.l.b16 %v3764
        %v4278 = vpack.c.b16 %v3927, %v4262
        %v4279 = vpack.c.b16 %v3929, %v4263
        %v4280 = vpack.c.b16 %v3931, %v4264
        %v4281 = vpack.c.b16 %v3933, %v4265
        %v4282 = vpack.c.b16 %v3935, %v4266
        %v4283 = vpack.c.b16 %v3937, %v4267
        %v4284 = vpack.c.b16 %v3939, %v4268
        %v4285 = vpack.c.b16 %v3941, %v4269
        %v4286 = vpack.c.b16 %v3943, %v4270
        %v4287 = vpack.c.b16 %v3945, %v4271
        %v4288 = vpack.c.b16 %v3947, %v4272
        %v4289 = vpack.c.b16 %v3949, %v4273
        %v4290 = vpack.c.b16 %v3951, %v4274
        %v4291 = vpack.c.b16 %v3953, %v4275
        %v4292 = vpack.c.b16 %v3955, %v4276
        %v4293 = vpack.c.b16 %v3957, %v4277
        %v4294 = vrot.slane %v4278, 1
        %v4295 = vrot.slane %v4006, 1
        %v4296 = vsel %vm1544, %v4294, %v4295
        %v4297 = vrot.slane %v4279, 1
        %v4298 = vrot.slane %v4007, 1
        %v4299 = vsel %vm1544, %v4297, %v4298
        %v4300 = vrot.slane %v4280, 1
        %v4301 = vrot.slane %v4008, 1
        %v4302 = vsel %vm1544, %v4300, %v4301
        %v4303 = vrot.slane %v4281, 1
        %v4304 = vrot.slane %v4009, 1
        %v4305 = vsel %vm1544, %v4303, %v4304
        %v4306 = vrot.slane %v4282, 1
        %v4307 = vrot.slane %v4010, 1
        %v4308 = vsel %vm1544, %v4306, %v4307
        %v4309 = vrot.slane %v4283, 1
        %v4310 = vrot.slane %v4011, 1
        %v4311 = vsel %vm1544, %v4309, %v4310
        %v4312 = vrot.slane %v4284, 1
        %v4313 = vrot.slane %v4012, 1
        %v4314 = vsel %vm1544, %v4312, %v4313
        %v4315 = vrot.slane %v4285, 1
        %v4316 = vrot.slane %v4013, 1
        %v4317 = vsel %vm1544, %v4315, %v4316
        %v4318 = vrot.slane %v4286, 1
        %v4319 = vrot.slane %v4014, 1
        %v4320 = vsel %vm1544, %v4318, %v4319
        %v4321 = vrot.slane %v4287, 1
        %v4322 = vrot.slane %v4015, 1
        %v4323 = vsel %vm1544, %v4321, %v4322
        %v4324 = vrot.slane %v4288, 1
        %v4325 = vrot.slane %v4016, 1
        %v4326 = vsel %vm1544, %v4324, %v4325
        %v4327 = vrot.slane %v4289, 1
        %v4328 = vrot.slane %v4017, 1
        %v4329 = vsel %vm1544, %v4327, %v4328
        %v4330 = vrot.slane %v4290, 1
        %v4331 = vrot.slane %v4018, 1
        %v4332 = vsel %vm1544, %v4330, %v4331
        %v4333 = vrot.slane %v4291, 1
        %v4334 = vrot.slane %v4019, 1
        %v4335 = vsel %vm1544, %v4333, %v4334
        %v4336 = vrot.slane %v4292, 1
        %v4337 = vrot.slane %v4020, 1
        %v4338 = vsel %vm1544, %v4336, %v4337
        %v4339 = vrot.slane %v4293, 1
        %v4340 = vrot.slane %v4021, 1
        %v4341 = vsel %vm1544, %v4339, %v4340
        %4342 = vrot.lane.b32.xlu0 %v4296, 64
        %v4343 = vpop.permute.xlu0 %4342
        %4344 = vrot.lane.b32.xlu0 %v4299, 64
        %v4345 = vpop.permute.xlu0 %4344
        %4346 = vrot.lane.b32.xlu0 %v4302, 64
        %v4347 = vpop.permute.xlu0 %4346
        %4348 = vrot.lane.b32.xlu0 %v4305, 64
        %v4349 = vpop.permute.xlu0 %4348
        %4350 = vrot.lane.b32.xlu0 %v4308, 64
        %v4351 = vpop.permute.xlu0 %4350
        %4352 = vrot.lane.b32.xlu0 %v4311, 64
        %v4353 = vpop.permute.xlu0 %4352
        %4354 = vrot.lane.b32.xlu0 %v4314, 64
        %v4355 = vpop.permute.xlu0 %4354
        %4356 = vrot.lane.b32.xlu0 %v4317, 64
        %v4357 = vpop.permute.xlu0 %4356
        %4358 = vrot.lane.b32.xlu0 %v4320, 64
        %v4359 = vpop.permute.xlu0 %4358
        %4360 = vrot.lane.b32.xlu0 %v4323, 64
        %v4361 = vpop.permute.xlu0 %4360
        %4362 = vrot.lane.b32.xlu0 %v4326, 64
        %v4363 = vpop.permute.xlu0 %4362
        %4364 = vrot.lane.b32.xlu0 %v4329, 64
        %v4365 = vpop.permute.xlu0 %4364
        %4366 = vrot.lane.b32.xlu0 %v4332, 64
        %v4367 = vpop.permute.xlu0 %4366
        %4368 = vrot.lane.b32.xlu0 %v4335, 64
        %v4369 = vpop.permute.xlu0 %4368
        %4370 = vrot.lane.b32.xlu0 %v4338, 64
        %v4371 = vpop.permute.xlu0 %4370
        %4372 = vrot.lane.b32.xlu0 %v4341, 64
        %v4373 = vpop.permute.xlu0 %4372
        %v4406 = vunpack.c.l.b16 %v3765
        %v4407 = vunpack.c.l.b16 %v3766
        %v4408 = vunpack.c.l.b16 %v3767
        %v4409 = vunpack.c.l.b16 %v3768
        %v4410 = vunpack.c.l.b16 %v3769
        %v4411 = vunpack.c.l.b16 %v3770
        %v4412 = vunpack.c.l.b16 %v3771
        %v4413 = vunpack.c.l.b16 %v3772
        %v4414 = vunpack.c.l.b16 %v3773
        %v4415 = vunpack.c.l.b16 %v3774
        %v4416 = vunpack.c.l.b16 %v3775
        %v4417 = vunpack.c.l.b16 %v3776
        %v4418 = vunpack.c.l.b16 %v3777
        %v4419 = vunpack.c.l.b16 %v3778
        %v4420 = vunpack.c.l.b16 %v3779
        %v4421 = vunpack.c.l.b16 %v3780
        %v4422 = vunpack.c.l.b16 %v3781
        %v4423 = vunpack.c.l.b16 %v3782
        %v4424 = vunpack.c.l.b16 %v3783
        %v4425 = vunpack.c.l.b16 %v3784
        %v4426 = vunpack.c.l.b16 %v3785
        %v4427 = vunpack.c.l.b16 %v3786
        %v4428 = vunpack.c.l.b16 %v3787
        %v4429 = vunpack.c.l.b16 %v3788
        %v4430 = vunpack.c.l.b16 %v3789
        %v4431 = vunpack.c.l.b16 %v3790
        %v4432 = vunpack.c.l.b16 %v3791
        %v4433 = vunpack.c.l.b16 %v3792
        %v4434 = vunpack.c.l.b16 %v3793
        %v4435 = vunpack.c.l.b16 %v3794
        %v4436 = vunpack.c.l.b16 %v3795
        %v4437 = vunpack.c.l.b16 %v3796
        %v4438 = vpack.c.b16 %v4407, %v4406
        %v4439 = vpack.c.b16 %v4409, %v4408
        %v4440 = vpack.c.b16 %v4411, %v4410
        %v4441 = vpack.c.b16 %v4413, %v4412
        %v4442 = vpack.c.b16 %v4415, %v4414
        %v4443 = vpack.c.b16 %v4417, %v4416
        %v4444 = vpack.c.b16 %v4419, %v4418
        %v4445 = vpack.c.b16 %v4421, %v4420
        %v4446 = vpack.c.b16 %v4423, %v4422
        %v4447 = vpack.c.b16 %v4425, %v4424
        %v4448 = vpack.c.b16 %v4427, %v4426
        %v4449 = vpack.c.b16 %v4429, %v4428
        %v4450 = vpack.c.b16 %v4431, %v4430
        %v4451 = vpack.c.b16 %v4433, %v4432
        %v4452 = vpack.c.b16 %v4435, %v4434
        %v4453 = vpack.c.b16 %v4437, %v4436
        %4454 = vrot.lane.b32.xlu0 %v4438, 96
        %v4455 = vpop.permute.xlu0 %4454
        %4456 = vrot.lane.b32.xlu0 %v4439, 96
        %v4457 = vpop.permute.xlu0 %4456
        %4458 = vrot.lane.b32.xlu0 %v4440, 96
        %v4459 = vpop.permute.xlu0 %4458
        %4460 = vrot.lane.b32.xlu0 %v4441, 96
        %v4461 = vpop.permute.xlu0 %4460
        %4462 = vrot.lane.b32.xlu0 %v4442, 96
        %v4463 = vpop.permute.xlu0 %4462
        %4464 = vrot.lane.b32.xlu0 %v4443, 96
        %v4465 = vpop.permute.xlu0 %4464
        %4466 = vrot.lane.b32.xlu0 %v4444, 96
        %v4467 = vpop.permute.xlu0 %4466
        %4468 = vrot.lane.b32.xlu0 %v4445, 96
        %v4469 = vpop.permute.xlu0 %4468
        %4470 = vrot.lane.b32.xlu0 %v4446, 96
        %v4471 = vpop.permute.xlu0 %4470
        %4472 = vrot.lane.b32.xlu0 %v4447, 96
        %v4473 = vpop.permute.xlu0 %4472
        %4474 = vrot.lane.b32.xlu0 %v4448, 96
        %v4475 = vpop.permute.xlu0 %4474
        %4476 = vrot.lane.b32.xlu0 %v4449, 96
        %v4477 = vpop.permute.xlu0 %4476
        %4478 = vrot.lane.b32.xlu0 %v4450, 96
        %v4479 = vpop.permute.xlu0 %4478
        %4480 = vrot.lane.b32.xlu0 %v4451, 96
        %v4481 = vpop.permute.xlu0 %4480
        %4482 = vrot.lane.b32.xlu0 %v4452, 96
        %v4483 = vpop.permute.xlu0 %4482
        %4484 = vrot.lane.b32.xlu0 %v4453, 96
        %v4485 = vpop.permute.xlu0 %4484
        %v4502 = vunpack.c.l.b16 %v3797
        %v4503 = vunpack.c.l.b16 %v3798
        %v4504 = vunpack.c.l.b16 %v3799
        %v4505 = vunpack.c.l.b16 %v3800
        %v4506 = vunpack.c.l.b16 %v3801
        %v4507 = vunpack.c.l.b16 %v3802
        %v4508 = vunpack.c.l.b16 %v3803
        %v4509 = vunpack.c.l.b16 %v3804
        %v4510 = vunpack.c.l.b16 %v3805
        %v4511 = vunpack.c.l.b16 %v3806
        %v4512 = vunpack.c.l.b16 %v3807
        %v4513 = vunpack.c.l.b16 %v3808
        %v4514 = vunpack.c.l.b16 %v3809
        %v4515 = vunpack.c.l.b16 %v3810
        %v4516 = vunpack.c.l.b16 %v3811
        %v4517 = vunpack.c.l.b16 %v3812
        %v4518 = vpack.c.b16 %v4502, %v4502
        %v4519 = vpack.c.b16 %v4503, %v4503
        %v4520 = vpack.c.b16 %v4504, %v4504
        %v4521 = vpack.c.b16 %v4505, %v4505
        %v4522 = vpack.c.b16 %v4506, %v4506
        %v4523 = vpack.c.b16 %v4507, %v4507
        %v4524 = vpack.c.b16 %v4508, %v4508
        %v4525 = vpack.c.b16 %v4509, %v4509
        %v4526 = vpack.c.b16 %v4510, %v4510
        %v4527 = vpack.c.b16 %v4511, %v4511
        %v4528 = vpack.c.b16 %v4512, %v4512
        %v4529 = vpack.c.b16 %v4513, %v4513
        %v4530 = vpack.c.b16 %v4514, %v4514
        %v4531 = vpack.c.b16 %v4515, %v4515
        %v4532 = vpack.c.b16 %v4516, %v4516
        %v4533 = vpack.c.b16 %v4517, %v4517
        %v4535 = vshrl.u32 %v4438, 16
        %v4537 = vshll.u32 %v4438, 16
        %v4539 = vrot.slane %v4537, 1
        %v4540 = vor.u32 %v4535, %v4539
        %v4542 = vshll.u32 %v4518, 16
        %v4544 = vrot.slane %v4542, 1
        %v4545 = vsel %vm1271, %v4540, %v4544
        %v4547 = vshrl.u32 %v4439, 16
        %v4549 = vshll.u32 %v4439, 16
        %v4551 = vrot.slane %v4549, 1
        %v4552 = vor.u32 %v4547, %v4551
        %v4554 = vshll.u32 %v4519, 16
        %v4556 = vrot.slane %v4554, 1
        %v4557 = vsel %vm1271, %v4552, %v4556
        %v4559 = vshrl.u32 %v4440, 16
        %v4561 = vshll.u32 %v4440, 16
        %v4563 = vrot.slane %v4561, 1
        %v4564 = vor.u32 %v4559, %v4563
        %v4566 = vshll.u32 %v4520, 16
        %v4568 = vrot.slane %v4566, 1
        %v4569 = vsel %vm1271, %v4564, %v4568
        %v4571 = vshrl.u32 %v4441, 16
        %v4573 = vshll.u32 %v4441, 16
        %v4575 = vrot.slane %v4573, 1
        %v4576 = vor.u32 %v4571, %v4575
        %v4578 = vshll.u32 %v4521, 16
        %v4580 = vrot.slane %v4578, 1
        %v4581 = vsel %vm1271, %v4576, %v4580
        %v4583 = vshrl.u32 %v4442, 16
        %v4585 = vshll.u32 %v4442, 16
        %v4587 = vrot.slane %v4585, 1
        %v4588 = vor.u32 %v4583, %v4587
        %v4590 = vshll.u32 %v4522, 16
        %v4592 = vrot.slane %v4590, 1
        %v4593 = vsel %vm1271, %v4588, %v4592
        %v4595 = vshrl.u32 %v4443, 16
        %v4597 = vshll.u32 %v4443, 16
        %v4599 = vrot.slane %v4597, 1
        %v4600 = vor.u32 %v4595, %v4599
        %v4602 = vshll.u32 %v4523, 16
        %v4604 = vrot.slane %v4602, 1
        %v4605 = vsel %vm1271, %v4600, %v4604
        %v4607 = vshrl.u32 %v4444, 16
        %v4609 = vshll.u32 %v4444, 16
        %v4611 = vrot.slane %v4609, 1
        %v4612 = vor.u32 %v4607, %v4611
        %v4614 = vshll.u32 %v4524, 16
        %v4616 = vrot.slane %v4614, 1
        %v4617 = vsel %vm1271, %v4612, %v4616
        %v4619 = vshrl.u32 %v4445, 16
        %v4621 = vshll.u32 %v4445, 16
        %v4623 = vrot.slane %v4621, 1
        %v4624 = vor.u32 %v4619, %v4623
        %v4626 = vshll.u32 %v4525, 16
        %v4628 = vrot.slane %v4626, 1
        %v4629 = vsel %vm1271, %v4624, %v4628
        %v4631 = vshrl.u32 %v4446, 16
        %v4633 = vshll.u32 %v4446, 16
        %v4635 = vrot.slane %v4633, 1
        %v4636 = vor.u32 %v4631, %v4635
        %v4638 = vshll.u32 %v4526, 16
        %v4640 = vrot.slane %v4638, 1
        %v4641 = vsel %vm1271, %v4636, %v4640
        %v4643 = vshrl.u32 %v4447, 16
        %v4645 = vshll.u32 %v4447, 16
        %v4647 = vrot.slane %v4645, 1
        %v4648 = vor.u32 %v4643, %v4647
        %v4650 = vshll.u32 %v4527, 16
        %v4652 = vrot.slane %v4650, 1
        %v4653 = vsel %vm1271, %v4648, %v4652
        %v4655 = vshrl.u32 %v4448, 16
        %v4657 = vshll.u32 %v4448, 16
        %v4659 = vrot.slane %v4657, 1
        %v4660 = vor.u32 %v4655, %v4659
        %v4662 = vshll.u32 %v4528, 16
        %v4664 = vrot.slane %v4662, 1
        %v4665 = vsel %vm1271, %v4660, %v4664
        %v4667 = vshrl.u32 %v4449, 16
        %v4669 = vshll.u32 %v4449, 16
        %v4671 = vrot.slane %v4669, 1
        %v4672 = vor.u32 %v4667, %v4671
        %v4674 = vshll.u32 %v4529, 16
        %v4676 = vrot.slane %v4674, 1
        %v4677 = vsel %vm1271, %v4672, %v4676
        %v4679 = vshrl.u32 %v4450, 16
        %v4681 = vshll.u32 %v4450, 16
        %v4683 = vrot.slane %v4681, 1
        %v4684 = vor.u32 %v4679, %v4683
        %v4686 = vshll.u32 %v4530, 16
        %v4688 = vrot.slane %v4686, 1
        %v4689 = vsel %vm1271, %v4684, %v4688
        %v4691 = vshrl.u32 %v4451, 16
        %v4693 = vshll.u32 %v4451, 16
        %v4695 = vrot.slane %v4693, 1
        %v4696 = vor.u32 %v4691, %v4695
        %v4698 = vshll.u32 %v4531, 16
        %v4700 = vrot.slane %v4698, 1
        %v4701 = vsel %vm1271, %v4696, %v4700
        %v4703 = vshrl.u32 %v4452, 16
        %v4705 = vshll.u32 %v4452, 16
        %v4707 = vrot.slane %v4705, 1
        %v4708 = vor.u32 %v4703, %v4707
        %v4710 = vshll.u32 %v4532, 16
        %v4712 = vrot.slane %v4710, 1
        %v4713 = vsel %vm1271, %v4708, %v4712
        %v4715 = vshrl.u32 %v4453, 16
        %v4717 = vshll.u32 %v4453, 16
        %v4719 = vrot.slane %v4717, 1
        %v4720 = vor.u32 %v4715, %v4719
        %v4722 = vshll.u32 %v4533, 16
        %v4724 = vrot.slane %v4722, 1
        %v4725 = vsel %vm1271, %v4720, %v4724
        %v4742 = vunpack.c.l.b16 %v3813
        %v4743 = vunpack.c.l.b16 %v3814
        %v4744 = vunpack.c.l.b16 %v3815
        %v4745 = vunpack.c.l.b16 %v3816
        %v4746 = vunpack.c.l.b16 %v3817
        %v4747 = vunpack.c.l.b16 %v3818
        %v4748 = vunpack.c.l.b16 %v3819
        %v4749 = vunpack.c.l.b16 %v3820
        %v4750 = vunpack.c.l.b16 %v3821
        %v4751 = vunpack.c.l.b16 %v3822
        %v4752 = vunpack.c.l.b16 %v3823
        %v4753 = vunpack.c.l.b16 %v3824
        %v4754 = vunpack.c.l.b16 %v3825
        %v4755 = vunpack.c.l.b16 %v3826
        %v4756 = vunpack.c.l.b16 %v3827
        %v4757 = vunpack.c.l.b16 %v3828
        %v4758 = vpack.c.b16 %v4407, %v4742
        %v4759 = vpack.c.b16 %v4409, %v4743
        %v4760 = vpack.c.b16 %v4411, %v4744
        %v4761 = vpack.c.b16 %v4413, %v4745
        %v4762 = vpack.c.b16 %v4415, %v4746
        %v4763 = vpack.c.b16 %v4417, %v4747
        %v4764 = vpack.c.b16 %v4419, %v4748
        %v4765 = vpack.c.b16 %v4421, %v4749
        %v4766 = vpack.c.b16 %v4423, %v4750
        %v4767 = vpack.c.b16 %v4425, %v4751
        %v4768 = vpack.c.b16 %v4427, %v4752
        %v4769 = vpack.c.b16 %v4429, %v4753
        %v4770 = vpack.c.b16 %v4431, %v4754
        %v4771 = vpack.c.b16 %v4433, %v4755
        %v4772 = vpack.c.b16 %v4435, %v4756
        %v4773 = vpack.c.b16 %v4437, %v4757
        %v4774 = vrot.slane %v4758, 1
        %v4775 = vrot.slane %v4518, 1
        %v4776 = vsel %vm1544, %v4774, %v4775
        %v4777 = vrot.slane %v4759, 1
        %v4778 = vrot.slane %v4519, 1
        %v4779 = vsel %vm1544, %v4777, %v4778
        %v4780 = vrot.slane %v4760, 1
        %v4781 = vrot.slane %v4520, 1
        %v4782 = vsel %vm1544, %v4780, %v4781
        %v4783 = vrot.slane %v4761, 1
        %v4784 = vrot.slane %v4521, 1
        %v4785 = vsel %vm1544, %v4783, %v4784
        %v4786 = vrot.slane %v4762, 1
        %v4787 = vrot.slane %v4522, 1
        %v4788 = vsel %vm1544, %v4786, %v4787
        %v4789 = vrot.slane %v4763, 1
        %v4790 = vrot.slane %v4523, 1
        %v4791 = vsel %vm1544, %v4789, %v4790
        %v4792 = vrot.slane %v4764, 1
        %v4793 = vrot.slane %v4524, 1
        %v4794 = vsel %vm1544, %v4792, %v4793
        %v4795 = vrot.slane %v4765, 1
        %v4796 = vrot.slane %v4525, 1
        %v4797 = vsel %vm1544, %v4795, %v4796
        %v4798 = vrot.slane %v4766, 1
        %v4799 = vrot.slane %v4526, 1
        %v4800 = vsel %vm1544, %v4798, %v4799
        %v4801 = vrot.slane %v4767, 1
        %v4802 = vrot.slane %v4527, 1
        %v4803 = vsel %vm1544, %v4801, %v4802
        %v4804 = vrot.slane %v4768, 1
        %v4805 = vrot.slane %v4528, 1
        %v4806 = vsel %vm1544, %v4804, %v4805
        %v4807 = vrot.slane %v4769, 1
        %v4808 = vrot.slane %v4529, 1
        %v4809 = vsel %vm1544, %v4807, %v4808
        %v4810 = vrot.slane %v4770, 1
        %v4811 = vrot.slane %v4530, 1
        %v4812 = vsel %vm1544, %v4810, %v4811
        %v4813 = vrot.slane %v4771, 1
        %v4814 = vrot.slane %v4531, 1
        %v4815 = vsel %vm1544, %v4813, %v4814
        %v4816 = vrot.slane %v4772, 1
        %v4817 = vrot.slane %v4532, 1
        %v4818 = vsel %vm1544, %v4816, %v4817
        %v4819 = vrot.slane %v4773, 1
        %v4820 = vrot.slane %v4533, 1
        %v4821 = vsel %vm1544, %v4819, %v4820
        %4822 = vrot.lane.b32.xlu0 %v4776, 32
        %v4823 = vpop.permute.xlu0 %4822
        %4824 = vrot.lane.b32.xlu0 %v4779, 32
        %v4825 = vpop.permute.xlu0 %4824
        %4826 = vrot.lane.b32.xlu0 %v4782, 32
        %v4827 = vpop.permute.xlu0 %4826
        %4828 = vrot.lane.b32.xlu0 %v4785, 32
        %v4829 = vpop.permute.xlu0 %4828
        %4830 = vrot.lane.b32.xlu0 %v4788, 32
        %v4831 = vpop.permute.xlu0 %4830
        %4832 = vrot.lane.b32.xlu0 %v4791, 32
        %v4833 = vpop.permute.xlu0 %4832
        %4834 = vrot.lane.b32.xlu0 %v4794, 32
        %v4835 = vpop.permute.xlu0 %4834
        %4836 = vrot.lane.b32.xlu0 %v4797, 32
        %v4837 = vpop.permute.xlu0 %4836
        %4838 = vrot.lane.b32.xlu0 %v4800, 32
        %v4839 = vpop.permute.xlu0 %4838
        %4840 = vrot.lane.b32.xlu0 %v4803, 32
        %v4841 = vpop.permute.xlu0 %4840
        %4842 = vrot.lane.b32.xlu0 %v4806, 32
        %v4843 = vpop.permute.xlu0 %4842
        %4844 = vrot.lane.b32.xlu0 %v4809, 32
        %v4845 = vpop.permute.xlu0 %4844
        %4846 = vrot.lane.b32.xlu0 %v4812, 32
        %v4847 = vpop.permute.xlu0 %4846
        %4848 = vrot.lane.b32.xlu0 %v4815, 32
        %v4849 = vpop.permute.xlu0 %4848
        %4850 = vrot.lane.b32.xlu0 %v4818, 32
        %v4851 = vpop.permute.xlu0 %4850
        %4852 = vrot.lane.b32.xlu0 %v4821, 32
        %v4853 = vpop.permute.xlu0 %4852
        %v4886 = vunpack.c.l.b16 %v3830
        %v4887 = vunpack.c.l.b16 %v3831
        %v4888 = vunpack.c.l.b16 %v3832
        %v4889 = vunpack.c.l.b16 %v3833
        %v4890 = vunpack.c.l.b16 %v3834
        %v4891 = vunpack.c.l.b16 %v3835
        %v4892 = vunpack.c.l.b16 %v3836
        %v4893 = vunpack.c.l.b16 %v3837
        %v4894 = vunpack.c.l.b16 %v3838
        %v4895 = vunpack.c.l.b16 %v3839
        %v4896 = vunpack.c.l.b16 %v3840
        %v4897 = vunpack.c.l.b16 %v3841
        %v4898 = vunpack.c.l.b16 %v3842
        %v4899 = vunpack.c.l.b16 %v3843
        %v4900 = vunpack.c.l.b16 %v3844
        %v4901 = vunpack.c.l.b16 %v3845
        %v4902 = vunpack.c.l.b16 %v3846
        %v4903 = vunpack.c.l.b16 %v3847
        %v4904 = vunpack.c.l.b16 %v3848
        %v4905 = vunpack.c.l.b16 %v3849
        %v4906 = vunpack.c.l.b16 %v3850
        %v4907 = vunpack.c.l.b16 %v3851
        %v4908 = vunpack.c.l.b16 %v3852
        %v4909 = vunpack.c.l.b16 %v3853
        %v4910 = vunpack.c.l.b16 %v3854
        %v4911 = vunpack.c.l.b16 %v3855
        %v4912 = vunpack.c.l.b16 %v3856
        %v4913 = vunpack.c.l.b16 %v3857
        %v4914 = vunpack.c.l.b16 %v3858
        %v4915 = vunpack.c.l.b16 %v3859
        %v4916 = vunpack.c.l.b16 %v3860
        %v4917 = vunpack.c.l.b16 %v3861
        %v4918 = vpack.c.b16 %v4887, %v4886
        %v4919 = vpack.c.b16 %v4889, %v4888
        %v4920 = vpack.c.b16 %v4891, %v4890
        %v4921 = vpack.c.b16 %v4893, %v4892
        %v4922 = vpack.c.b16 %v4895, %v4894
        %v4923 = vpack.c.b16 %v4897, %v4896
        %v4924 = vpack.c.b16 %v4899, %v4898
        %v4925 = vpack.c.b16 %v4901, %v4900
        %v4926 = vpack.c.b16 %v4903, %v4902
        %v4927 = vpack.c.b16 %v4905, %v4904
        %v4928 = vpack.c.b16 %v4907, %v4906
        %v4929 = vpack.c.b16 %v4909, %v4908
        %v4930 = vpack.c.b16 %v4911, %v4910
        %v4931 = vpack.c.b16 %v4913, %v4912
        %v4932 = vpack.c.b16 %v4915, %v4914
        %v4933 = vpack.c.b16 %v4917, %v4916
        %4934 = vrot.lane.b32.xlu0 %v4918, 64
        %v4935 = vpop.permute.xlu0 %4934
        %4936 = vrot.lane.b32.xlu0 %v4919, 64
        %v4937 = vpop.permute.xlu0 %4936
        %4938 = vrot.lane.b32.xlu0 %v4920, 64
        %v4939 = vpop.permute.xlu0 %4938
        %4940 = vrot.lane.b32.xlu0 %v4921, 64
        %v4941 = vpop.permute.xlu0 %4940
        %4942 = vrot.lane.b32.xlu0 %v4922, 64
        %v4943 = vpop.permute.xlu0 %4942
        %4944 = vrot.lane.b32.xlu0 %v4923, 64
        %v4945 = vpop.permute.xlu0 %4944
        %4946 = vrot.lane.b32.xlu0 %v4924, 64
        %v4947 = vpop.permute.xlu0 %4946
        %4948 = vrot.lane.b32.xlu0 %v4925, 64
        %v4949 = vpop.permute.xlu0 %4948
        %4950 = vrot.lane.b32.xlu0 %v4926, 64
        %v4951 = vpop.permute.xlu0 %4950
        %4952 = vrot.lane.b32.xlu0 %v4927, 64
        %v4953 = vpop.permute.xlu0 %4952
        %4954 = vrot.lane.b32.xlu0 %v4928, 64
        %v4955 = vpop.permute.xlu0 %4954
        %4956 = vrot.lane.b32.xlu0 %v4929, 64
        %v4957 = vpop.permute.xlu0 %4956
        %4958 = vrot.lane.b32.xlu0 %v4930, 64
        %v4959 = vpop.permute.xlu0 %4958
        %4960 = vrot.lane.b32.xlu0 %v4931, 64
        %v4961 = vpop.permute.xlu0 %4960
        %4962 = vrot.lane.b32.xlu0 %v4932, 64
        %v4963 = vpop.permute.xlu0 %4962
        %4964 = vrot.lane.b32.xlu0 %v4933, 64
        %v4965 = vpop.permute.xlu0 %4964
        %v4982 = vunpack.c.l.b16 %v3862
        %v4983 = vunpack.c.l.b16 %v3863
        %v4984 = vunpack.c.l.b16 %v3864
        %v4985 = vunpack.c.l.b16 %v3865
        %v4986 = vunpack.c.l.b16 %v3866
        %v4987 = vunpack.c.l.b16 %v3867
        %v4988 = vunpack.c.l.b16 %v3868
        %v4989 = vunpack.c.l.b16 %v3869
        %v4990 = vunpack.c.l.b16 %v3870
        %v4991 = vunpack.c.l.b16 %v3871
        %v4992 = vunpack.c.l.b16 %v3872
        %v4993 = vunpack.c.l.b16 %v3873
        %v4994 = vunpack.c.l.b16 %v3874
        %v4995 = vunpack.c.l.b16 %v3875
        %v4996 = vunpack.c.l.b16 %v3876
        %v4997 = vunpack.c.l.b16 %v3877
        %v4998 = vpack.c.b16 %v4982, %v4982
        %v4999 = vpack.c.b16 %v4983, %v4983
        %v5000 = vpack.c.b16 %v4984, %v4984
        %v5001 = vpack.c.b16 %v4985, %v4985
        %v5002 = vpack.c.b16 %v4986, %v4986
        %v5003 = vpack.c.b16 %v4987, %v4987
        %v5004 = vpack.c.b16 %v4988, %v4988
        %v5005 = vpack.c.b16 %v4989, %v4989
        %v5006 = vpack.c.b16 %v4990, %v4990
        %v5007 = vpack.c.b16 %v4991, %v4991
        %v5008 = vpack.c.b16 %v4992, %v4992
        %v5009 = vpack.c.b16 %v4993, %v4993
        %v5010 = vpack.c.b16 %v4994, %v4994
        %v5011 = vpack.c.b16 %v4995, %v4995
        %v5012 = vpack.c.b16 %v4996, %v4996
        %v5013 = vpack.c.b16 %v4997, %v4997
        %v5015 = vshrl.u32 %v4918, 16
        %v5017 = vshll.u32 %v4918, 16
        %v5019 = vrot.slane %v5017, 1
        %v5020 = vor.u32 %v5015, %v5019
        %v5022 = vshll.u32 %v4998, 16
        %v5024 = vrot.slane %v5022, 1
        %v5025 = vsel %vm1271, %v5020, %v5024
        %v5027 = vshrl.u32 %v4919, 16
        %v5029 = vshll.u32 %v4919, 16
        %v5031 = vrot.slane %v5029, 1
        %v5032 = vor.u32 %v5027, %v5031
        %v5034 = vshll.u32 %v4999, 16
        %v5036 = vrot.slane %v5034, 1
        %v5037 = vsel %vm1271, %v5032, %v5036
        %v5039 = vshrl.u32 %v4920, 16
        %v5041 = vshll.u32 %v4920, 16
        %v5043 = vrot.slane %v5041, 1
        %v5044 = vor.u32 %v5039, %v5043
        %v5046 = vshll.u32 %v5000, 16
        %v5048 = vrot.slane %v5046, 1
        %v5049 = vsel %vm1271, %v5044, %v5048
        %v5051 = vshrl.u32 %v4921, 16
        %v5053 = vshll.u32 %v4921, 16
        %v5055 = vrot.slane %v5053, 1
        %v5056 = vor.u32 %v5051, %v5055
        %v5058 = vshll.u32 %v5001, 16
        %v5060 = vrot.slane %v5058, 1
        %v5061 = vsel %vm1271, %v5056, %v5060
        %v5063 = vshrl.u32 %v4922, 16
        %v5065 = vshll.u32 %v4922, 16
        %v5067 = vrot.slane %v5065, 1
        %v5068 = vor.u32 %v5063, %v5067
        %v5070 = vshll.u32 %v5002, 16
        %v5072 = vrot.slane %v5070, 1
        %v5073 = vsel %vm1271, %v5068, %v5072
        %v5075 = vshrl.u32 %v4923, 16
        %v5077 = vshll.u32 %v4923, 16
        %v5079 = vrot.slane %v5077, 1
        %v5080 = vor.u32 %v5075, %v5079
        %v5082 = vshll.u32 %v5003, 16
        %v5084 = vrot.slane %v5082, 1
        %v5085 = vsel %vm1271, %v5080, %v5084
        %v5087 = vshrl.u32 %v4924, 16
        %v5089 = vshll.u32 %v4924, 16
        %v5091 = vrot.slane %v5089, 1
        %v5092 = vor.u32 %v5087, %v5091
        %v5094 = vshll.u32 %v5004, 16
        %v5096 = vrot.slane %v5094, 1
        %v5097 = vsel %vm1271, %v5092, %v5096
        %v5099 = vshrl.u32 %v4925, 16
        %v5101 = vshll.u32 %v4925, 16
        %v5103 = vrot.slane %v5101, 1
        %v5104 = vor.u32 %v5099, %v5103
        %v5106 = vshll.u32 %v5005, 16
        %v5108 = vrot.slane %v5106, 1
        %v5109 = vsel %vm1271, %v5104, %v5108
        %v5111 = vshrl.u32 %v4926, 16
        %v5113 = vshll.u32 %v4926, 16
        %v5115 = vrot.slane %v5113, 1
        %v5116 = vor.u32 %v5111, %v5115
        %v5118 = vshll.u32 %v5006, 16
        %v5120 = vrot.slane %v5118, 1
        %v5121 = vsel %vm1271, %v5116, %v5120
        %v5123 = vshrl.u32 %v4927, 16
        %v5125 = vshll.u32 %v4927, 16
        %v5127 = vrot.slane %v5125, 1
        %v5128 = vor.u32 %v5123, %v5127
        %v5130 = vshll.u32 %v5007, 16
        %v5132 = vrot.slane %v5130, 1
        %v5133 = vsel %vm1271, %v5128, %v5132
        %v5135 = vshrl.u32 %v4928, 16
        %v5137 = vshll.u32 %v4928, 16
        %v5139 = vrot.slane %v5137, 1
        %v5140 = vor.u32 %v5135, %v5139
        %v5142 = vshll.u32 %v5008, 16
        %v5144 = vrot.slane %v5142, 1
        %v5145 = vsel %vm1271, %v5140, %v5144
        %v5147 = vshrl.u32 %v4929, 16
        %v5149 = vshll.u32 %v4929, 16
        %v5151 = vrot.slane %v5149, 1
        %v5152 = vor.u32 %v5147, %v5151
        %v5154 = vshll.u32 %v5009, 16
        %v5156 = vrot.slane %v5154, 1
        %v5157 = vsel %vm1271, %v5152, %v5156
        %v5159 = vshrl.u32 %v4930, 16
        %v5161 = vshll.u32 %v4930, 16
        %v5163 = vrot.slane %v5161, 1
        %v5164 = vor.u32 %v5159, %v5163
        %v5166 = vshll.u32 %v5010, 16
        %v5168 = vrot.slane %v5166, 1
        %v5169 = vsel %vm1271, %v5164, %v5168
        %v5171 = vshrl.u32 %v4931, 16
        %v5173 = vshll.u32 %v4931, 16
        %v5175 = vrot.slane %v5173, 1
        %v5176 = vor.u32 %v5171, %v5175
        %v5178 = vshll.u32 %v5011, 16
        %v5180 = vrot.slane %v5178, 1
        %v5181 = vsel %vm1271, %v5176, %v5180
        %v5183 = vshrl.u32 %v4932, 16
        %v5185 = vshll.u32 %v4932, 16
        %v5187 = vrot.slane %v5185, 1
        %v5188 = vor.u32 %v5183, %v5187
        %v5190 = vshll.u32 %v5012, 16
        %v5192 = vrot.slane %v5190, 1
        %v5193 = vsel %vm1271, %v5188, %v5192
        %v5195 = vshrl.u32 %v4933, 16
        %v5197 = vshll.u32 %v4933, 16
        %v5199 = vrot.slane %v5197, 1
        %v5200 = vor.u32 %v5195, %v5199
        %v5202 = vshll.u32 %v5013, 16
        %v5204 = vrot.slane %v5202, 1
        %v5205 = vsel %vm1271, %v5200, %v5204
        %5206 = vrot.lane.b32.xlu0 %v5025, 96
        %v5207 = vpop.permute.xlu0 %5206
        %5208 = vrot.lane.b32.xlu0 %v5037, 96
        %v5209 = vpop.permute.xlu0 %5208
        %5210 = vrot.lane.b32.xlu0 %v5049, 96
        %v5211 = vpop.permute.xlu0 %5210
        %5212 = vrot.lane.b32.xlu0 %v5061, 96
        %v5213 = vpop.permute.xlu0 %5212
        %5214 = vrot.lane.b32.xlu0 %v5073, 96
        %v5215 = vpop.permute.xlu0 %5214
        %5216 = vrot.lane.b32.xlu0 %v5085, 96
        %v5217 = vpop.permute.xlu0 %5216
        %5218 = vrot.lane.b32.xlu0 %v5097, 96
        %v5219 = vpop.permute.xlu0 %5218
        %5220 = vrot.lane.b32.xlu0 %v5109, 96
        %v5221 = vpop.permute.xlu0 %5220
        %5222 = vrot.lane.b32.xlu0 %v5121, 96
        %v5223 = vpop.permute.xlu0 %5222
        %5224 = vrot.lane.b32.xlu0 %v5133, 96
        %v5225 = vpop.permute.xlu0 %5224
        %5226 = vrot.lane.b32.xlu0 %v5145, 96
        %v5227 = vpop.permute.xlu0 %5226
        %5228 = vrot.lane.b32.xlu0 %v5157, 96
        %v5229 = vpop.permute.xlu0 %5228
        %5230 = vrot.lane.b32.xlu0 %v5169, 96
        %v5231 = vpop.permute.xlu0 %5230
        %5232 = vrot.lane.b32.xlu0 %v5181, 96
        %v5233 = vpop.permute.xlu0 %5232
        %5234 = vrot.lane.b32.xlu0 %v5193, 96
        %v5235 = vpop.permute.xlu0 %5234
        %5236 = vrot.lane.b32.xlu0 %v5205, 96
        %v5237 = vpop.permute.xlu0 %5236
        %v5254 = vunpack.c.l.b16 %v3878
        %v5255 = vunpack.c.l.b16 %v3879
        %v5256 = vunpack.c.l.b16 %v3880
        %v5257 = vunpack.c.l.b16 %v3881
        %v5258 = vunpack.c.l.b16 %v3882
        %v5259 = vunpack.c.l.b16 %v3883
        %v5260 = vunpack.c.l.b16 %v3884
        %v5261 = vunpack.c.l.b16 %v3885
        %v5262 = vunpack.c.l.b16 %v3886
        %v5263 = vunpack.c.l.b16 %v3887
        %v5264 = vunpack.c.l.b16 %v3888
        %v5265 = vunpack.c.l.b16 %v3889
        %v5266 = vunpack.c.l.b16 %v3890
        %v5267 = vunpack.c.l.b16 %v3891
        %v5268 = vunpack.c.l.b16 %v3892
        %v5269 = vunpack.c.l.b16 %v3893
        %v5270 = vpack.c.b16 %v4887, %v5254
        %v5271 = vpack.c.b16 %v4889, %v5255
        %v5272 = vpack.c.b16 %v4891, %v5256
        %v5273 = vpack.c.b16 %v4893, %v5257
        %v5274 = vpack.c.b16 %v4895, %v5258
        %v5275 = vpack.c.b16 %v4897, %v5259
        %v5276 = vpack.c.b16 %v4899, %v5260
        %v5277 = vpack.c.b16 %v4901, %v5261
        %v5278 = vpack.c.b16 %v4903, %v5262
        %v5279 = vpack.c.b16 %v4905, %v5263
        %v5280 = vpack.c.b16 %v4907, %v5264
        %v5281 = vpack.c.b16 %v4909, %v5265
        %v5282 = vpack.c.b16 %v4911, %v5266
        %v5283 = vpack.c.b16 %v4913, %v5267
        %v5284 = vpack.c.b16 %v4915, %v5268
        %v5285 = vpack.c.b16 %v4917, %v5269
        %v5286 = vrot.slane %v5270, 1
        %v5287 = vrot.slane %v4998, 1
        %v5288 = vsel %vm1544, %v5286, %v5287
        %v5289 = vrot.slane %v5271, 1
        %v5290 = vrot.slane %v4999, 1
        %v5291 = vsel %vm1544, %v5289, %v5290
        %v5292 = vrot.slane %v5272, 1
        %v5293 = vrot.slane %v5000, 1
        %v5294 = vsel %vm1544, %v5292, %v5293
        %v5295 = vrot.slane %v5273, 1
        %v5296 = vrot.slane %v5001, 1
        %v5297 = vsel %vm1544, %v5295, %v5296
        %v5298 = vrot.slane %v5274, 1
        %v5299 = vrot.slane %v5002, 1
        %v5300 = vsel %vm1544, %v5298, %v5299
        %v5301 = vrot.slane %v5275, 1
        %v5302 = vrot.slane %v5003, 1
        %v5303 = vsel %vm1544, %v5301, %v5302
        %v5304 = vrot.slane %v5276, 1
        %v5305 = vrot.slane %v5004, 1
        %v5306 = vsel %vm1544, %v5304, %v5305
        %v5307 = vrot.slane %v5277, 1
        %v5308 = vrot.slane %v5005, 1
        %v5309 = vsel %vm1544, %v5307, %v5308
        %v5310 = vrot.slane %v5278, 1
        %v5311 = vrot.slane %v5006, 1
        %v5312 = vsel %vm1544, %v5310, %v5311
        %v5313 = vrot.slane %v5279, 1
        %v5314 = vrot.slane %v5007, 1
        %v5315 = vsel %vm1544, %v5313, %v5314
        %v5316 = vrot.slane %v5280, 1
        %v5317 = vrot.slane %v5008, 1
        %v5318 = vsel %vm1544, %v5316, %v5317
        %v5319 = vrot.slane %v5281, 1
        %v5320 = vrot.slane %v5009, 1
        %v5321 = vsel %vm1544, %v5319, %v5320
        %v5322 = vrot.slane %v5282, 1
        %v5323 = vrot.slane %v5010, 1
        %v5324 = vsel %vm1544, %v5322, %v5323
        %v5325 = vrot.slane %v5283, 1
        %v5326 = vrot.slane %v5011, 1
        %v5327 = vsel %vm1544, %v5325, %v5326
        %v5328 = vrot.slane %v5284, 1
        %v5329 = vrot.slane %v5012, 1
        %v5330 = vsel %vm1544, %v5328, %v5329
        %v5331 = vrot.slane %v5285, 1
        %v5332 = vrot.slane %v5013, 1
        %v5333 = vsel %vm1544, %v5331, %v5332
        %v5335 = vsel %vm2880, %v3958, %v4215
        %v5337 = vsel %vm2880, %v3959, %v4217
        %v5339 = vsel %vm2880, %v3960, %v4219
        %v5341 = vsel %vm2880, %v3961, %v4221
        %v5343 = vsel %vm2880, %v3962, %v4223
        %v5345 = vsel %vm2880, %v3963, %v4225
        %v5347 = vsel %vm2880, %v3964, %v4227
        %v5349 = vsel %vm2880, %v3965, %v4229
        %v5351 = vsel %vm2880, %v3966, %v4231
        %v5353 = vsel %vm2880, %v3967, %v4233
        %v5355 = vsel %vm2880, %v3968, %v4235
        %v5357 = vsel %vm2880, %v3969, %v4237
        %v5359 = vsel %vm2880, %v3970, %v4239
        %v5361 = vsel %vm2880, %v3971, %v4241
        %v5363 = vsel %vm2880, %v3972, %v4243
        %v5365 = vsel %vm2880, %v3973, %v4245
        %vm5366 = vcmask 523264
        %v5368 = vsel %vm5366, %v5335, %v4343
        %v5370 = vsel %vm5366, %v5337, %v4345
        %v5372 = vsel %vm5366, %v5339, %v4347
        %v5374 = vsel %vm5366, %v5341, %v4349
        %v5376 = vsel %vm5366, %v5343, %v4351
        %v5378 = vsel %vm5366, %v5345, %v4353
        %v5380 = vsel %vm5366, %v5347, %v4355
        %v5382 = vsel %vm5366, %v5349, %v4357
        %v5384 = vsel %vm5366, %v5351, %v4359
        %v5386 = vsel %vm5366, %v5353, %v4361
        %v5388 = vsel %vm5366, %v5355, %v4363
        %v5390 = vsel %vm5366, %v5357, %v4365
        %v5392 = vsel %vm5366, %v5359, %v4367
        %v5394 = vsel %vm5366, %v5361, %v4369
        %v5396 = vsel %vm5366, %v5363, %v4371
        %v5398 = vsel %vm5366, %v5365, %v4373
        %vm5399 = vcmask 785408
        %v5401 = vsel %vm5399, %v5368, %v4455
        %v5404 = vsel %vm5399, %v5370, %v4457
        %v5407 = vsel %vm5399, %v5372, %v4459
        %v5410 = vsel %vm5399, %v5374, %v4461
        %v5413 = vsel %vm5399, %v5376, %v4463
        %v5416 = vsel %vm5399, %v5378, %v4465
        %v5419 = vsel %vm5399, %v5380, %v4467
        %v5422 = vsel %vm5399, %v5382, %v4469
        %v5425 = vsel %vm5399, %v5384, %v4471
        %v5428 = vsel %vm5399, %v5386, %v4473
        %v5431 = vsel %vm5399, %v5388, %v4475
        %v5434 = vsel %vm5399, %v5390, %v4477
        %v5437 = vsel %vm5399, %v5392, %v4479
        %v5440 = vsel %vm5399, %v5394, %v4481
        %v5443 = vsel %vm5399, %v5396, %v4483
        %v5446 = vsel %vm5399, %v5398, %v4485
        %v5450 = vsel %vm2880, %v4545, %v4823
        %v5453 = vsel %vm2880, %v4557, %v4825
        %v5456 = vsel %vm2880, %v4569, %v4827
        %v5459 = vsel %vm2880, %v4581, %v4829
        %v5462 = vsel %vm2880, %v4593, %v4831
        %v5465 = vsel %vm2880, %v4605, %v4833
        %v5468 = vsel %vm2880, %v4617, %v4835
        %v5471 = vsel %vm2880, %v4629, %v4837
        %v5474 = vsel %vm2880, %v4641, %v4839
        %v5477 = vsel %vm2880, %v4653, %v4841
        %v5480 = vsel %vm2880, %v4665, %v4843
        %v5483 = vsel %vm2880, %v4677, %v4845
        %v5486 = vsel %vm2880, %v4689, %v4847
        %v5489 = vsel %vm2880, %v4701, %v4849
        %v5492 = vsel %vm2880, %v4713, %v4851
        %v5495 = vsel %vm2880, %v4725, %v4853
        %v5497 = vsel %vm5366, %v5450, %v4935
        %v5499 = vsel %vm5366, %v5453, %v4937
        %v5501 = vsel %vm5366, %v5456, %v4939
        %v5503 = vsel %vm5366, %v5459, %v4941
        %v5505 = vsel %vm5366, %v5462, %v4943
        %v5507 = vsel %vm5366, %v5465, %v4945
        %v5509 = vsel %vm5366, %v5468, %v4947
        %v5511 = vsel %vm5366, %v5471, %v4949
        %v5513 = vsel %vm5366, %v5474, %v4951
        %v5515 = vsel %vm5366, %v5477, %v4953
        %v5517 = vsel %vm5366, %v5480, %v4955
        %v5519 = vsel %vm5366, %v5483, %v4957
        %v5521 = vsel %vm5366, %v5486, %v4959
        %v5523 = vsel %vm5366, %v5489, %v4961
        %v5525 = vsel %vm5366, %v5492, %v4963
        %v5527 = vsel %vm5366, %v5495, %v4965
        %v5529 = vsel %vm5399, %v5497, %v5207
        %v5532 = vsel %vm5399, %v5499, %v5209
        %v5535 = vsel %vm5399, %v5501, %v5211
        %v5538 = vsel %vm5399, %v5503, %v5213
        %v5541 = vsel %vm5399, %v5505, %v5215
        %v5544 = vsel %vm5399, %v5507, %v5217
        %v5547 = vsel %vm5399, %v5509, %v5219
        %v5550 = vsel %vm5399, %v5511, %v5221
        %v5553 = vsel %vm5399, %v5513, %v5223
        %v5556 = vsel %vm5399, %v5515, %v5225
        %v5559 = vsel %vm5399, %v5517, %v5227
        %v5562 = vsel %vm5399, %v5519, %v5229
        %v5565 = vsel %vm5399, %v5521, %v5231
        %v5568 = vsel %vm5399, %v5523, %v5233
        %v5571 = vsel %vm5399, %v5525, %v5235
        %v5574 = vsel %vm5399, %v5527, %v5237
        %v5576 = vld [vmem:[%s3] sm:$0xf]
        %v5577 = vld [vmem:[%s3 + $0x4] sm:$0xf]
        %v5578 = vld [vmem:[%s3 + $0x8] sm:$0xf]
        %v5579 = vld [vmem:[%s3 + $0xc] sm:$0xf]
        %v5580 = vld [vmem:[%s3 + $0x10] sm:$0xf]
        %v5581 = vld [vmem:[%s3 + $0x14] sm:$0xf]
        %v5582 = vld [vmem:[%s3 + $0x18] sm:$0xf]
        %v5583 = vld [vmem:[%s3 + $0x1c] sm:$0xf]
        %v5584 = vld [vmem:[%s3 + $0x20] sm:$0xf]
        %v5585 = vld [vmem:[%s3 + $0x24] sm:$0xf]
        %v5586 = vld [vmem:[%s3 + $0x28] sm:$0xf]
        %v5587 = vld [vmem:[%s3 + $0x2c] sm:$0xf]
        %v5588 = vld [vmem:[%s3 + $0x30] sm:$0xf]
        %v5589 = vld [vmem:[%s3 + $0x34] sm:$0xf]
        %v5590 = vld [vmem:[%s3 + $0x38] sm:$0xf]
        %v5591 = vld [vmem:[%s3 + $0x3c] sm:$0xf]
        %v5592 = vld [vmem:[%s3 + $0x40] sm:$0xf]
        %v5593 = vld [vmem:[%s3 + $0x44] sm:$0xf]
        %v5594 = vld [vmem:[%s3 + $0x48] sm:$0xf]
        %v5595 = vld [vmem:[%s3 + $0x4c] sm:$0xf]
        %v5596 = vld [vmem:[%s3 + $0x50] sm:$0xf]
        %v5597 = vld [vmem:[%s3 + $0x54] sm:$0xf]
        %v5598 = vld [vmem:[%s3 + $0x58] sm:$0xf]
        %v5599 = vld [vmem:[%s3 + $0x5c] sm:$0xf]
        %v5600 = vld [vmem:[%s3 + $0x60] sm:$0xf]
        %v5601 = vld [vmem:[%s3 + $0x64] sm:$0xf]
        %v5602 = vld [vmem:[%s3 + $0x68] sm:$0xf]
        %v5603 = vld [vmem:[%s3 + $0x6c] sm:$0xf]
        %v5604 = vld [vmem:[%s3 + $0x70] sm:$0xf]
        %v5605 = vld [vmem:[%s3 + $0x74] sm:$0xf]
        %v5606 = vld [vmem:[%s3 + $0x78] sm:$0xf]
        %v5607 = vld [vmem:[%s3 + $0x7c] sm:$0xf]
        %v5608 = vld [vmem:[%s3 + $0x80] sm:$0xf]
        %v5609 = vld [vmem:[%s3 + $0x84] sm:$0xf]
        %v5610 = vld [vmem:[%s3 + $0x88] sm:$0xf]
        %v5611 = vld [vmem:[%s3 + $0x8c] sm:$0xf]
        %v5612 = vld [vmem:[%s4] sm:$0x1]
        %v5614 = vlaneseq
        %v5615 = vshrl.u32 %v5614, 7
        %v5616 = vsub.s32 0, %v5615
        %v5617 = vrot.slane %v5612, %v5616
        %v5655 = vunpack.c.l.b16 %v5576
        %v5656 = vunpack.c.l.b16 %v5577
        %v5657 = vunpack.c.l.b16 %v5578
        %v5658 = vunpack.c.l.b16 %v5579
        %v5659 = vunpack.c.l.b16 %v5580
        %v5660 = vunpack.c.l.b16 %v5581
        %v5661 = vunpack.c.l.b16 %v5582
        %v5662 = vunpack.c.l.b16 %v5583
        %v5663 = vunpack.c.l.b16 %v5584
        %v5664 = vunpack.c.l.b16 %v5585
        %v5665 = vunpack.c.l.b16 %v5586
        %v5666 = vunpack.c.l.b16 %v5587
        %v5667 = vunpack.c.l.b16 %v5588
        %v5668 = vunpack.c.l.b16 %v5589
        %v5669 = vunpack.c.l.b16 %v5590
        %v5670 = vunpack.c.l.b16 %v5591
        %v5671 = vunpack.c.l.b16 %v5592
        %v5672 = vunpack.c.l.b16 %v5593
        %v5673 = vunpack.c.l.b16 %v5594
        %v5674 = vunpack.c.l.b16 %v5595
        %v5675 = vunpack.c.l.b16 %v5596
        %v5676 = vunpack.c.l.b16 %v5597
        %v5677 = vunpack.c.l.b16 %v5598
        %v5678 = vunpack.c.l.b16 %v5599
        %v5679 = vunpack.c.l.b16 %v5600
        %v5680 = vunpack.c.l.b16 %v5601
        %v5681 = vunpack.c.l.b16 %v5602
        %v5682 = vunpack.c.l.b16 %v5603
        %v5683 = vunpack.c.l.b16 %v5604
        %v5684 = vunpack.c.l.b16 %v5605
        %v5685 = vunpack.c.l.b16 %v5606
        %v5686 = vunpack.c.l.b16 %v5607
        %v5687 = vunpack.c.l.b16 %v5608
        %v5688 = vunpack.c.l.b16 %v5609
        %v5689 = vunpack.c.l.b16 %v5610
        %v5690 = vunpack.c.l.b16 %v5611
        %v5691 = vpack.c.b16 %v5656, %v5655
        %v5692 = vpack.c.b16 %v5658, %v5657
        %v5693 = vpack.c.b16 %v5660, %v5659
        %v5694 = vpack.c.b16 %v5662, %v5661
        %v5695 = vpack.c.b16 %v5664, %v5663
        %v5696 = vpack.c.b16 %v5666, %v5665
        %v5697 = vpack.c.b16 %v5668, %v5667
        %v5698 = vpack.c.b16 %v5670, %v5669
        %v5699 = vpack.c.b16 %v5672, %v5671
        %v5700 = vpack.c.b16 %v5674, %v5673
        %v5701 = vpack.c.b16 %v5676, %v5675
        %v5702 = vpack.c.b16 %v5678, %v5677
        %v5703 = vpack.c.b16 %v5680, %v5679
        %v5704 = vpack.c.b16 %v5682, %v5681
        %v5705 = vpack.c.b16 %v5684, %v5683
        %v5706 = vpack.c.b16 %v5686, %v5685
        %v5707 = vpack.c.b16 %v5688, %v5687
        %v5708 = vpack.c.b16 %v5690, %v5689
        %v5728 = vsel %vm2880, %v5288, 0
        %v5731 = vsel %vm2880, %v5291, 0
        %v5734 = vsel %vm2880, %v5294, 0
        %v5737 = vsel %vm2880, %v5297, 0
        %v5740 = vsel %vm2880, %v5300, 0
        %v5743 = vsel %vm2880, %v5303, 0
        %v5746 = vsel %vm2880, %v5306, 0
        %v5749 = vsel %vm2880, %v5309, 0
        %v5752 = vsel %vm2880, %v5312, 0
        %v5755 = vsel %vm2880, %v5315, 0
        %v5758 = vsel %vm2880, %v5318, 0
        %v5761 = vsel %vm2880, %v5321, 0
        %v5764 = vsel %vm2880, %v5324, 0
        %v5767 = vsel %vm2880, %v5327, 0
        %v5770 = vsel %vm2880, %v5330, 0
        %v5773 = vsel %vm2880, %v5333, 0
        %5775 = vmatprep.subr.bf16.mxu0 0
        %5776 = vmatpush1.bf16.msra.mxu0 %v5691
        %5777 = vmatprep.subr.bf16.mxu0 0
        %5778 = vmatpush1.bf16.msra.mxu0 %v5692
        %5779 = vmatprep.subr.bf16.mxu0 0
        %5780 = vmatpush1.bf16.msra.mxu0 %v5693
        %5781 = vmatprep.subr.bf16.mxu0 0
        %5782 = vmatpush1.bf16.msra.mxu0 %v5694
        %5783 = vmatprep.subr.bf16.mxu0 0
        %5784 = vmatpush1.bf16.msra.mxu0 %v5695
        %5785 = vmatprep.subr.bf16.mxu0 0
        %5786 = vmatpush1.bf16.msra.mxu0 %v5696
        %5787 = vmatprep.subr.bf16.mxu0 0
        %5788 = vmatpush1.bf16.msra.mxu0 %v5697
        %5789 = vmatprep.subr.bf16.mxu0 0
        %5790 = vmatpush1.bf16.msra.mxu0 %v5698
        %5791 = vmatprep.subr.bf16.mxu0 0
        %5792 = vmatpush1.bf16.msra.mxu0 %v5699
        %5793 = vmatprep.subr.bf16.mxu0 0
        %5794 = vmatpush1.bf16.msra.mxu0 %v5700
        %5795 = vmatprep.subr.bf16.mxu0 0
        %5796 = vmatpush1.bf16.msra.mxu0 %v5701
        %5797 = vmatprep.subr.bf16.mxu0 0
        %5798 = vmatpush1.bf16.msra.mxu0 %v5702
        %5799 = vmatprep.subr.bf16.mxu0 0
        %5800 = vmatpush1.bf16.msra.mxu0 %v5703
        %5801 = vmatprep.subr.bf16.mxu0 0
        %5802 = vmatpush1.bf16.msra.mxu0 %v5704
        %5803 = vmatprep.subr.bf16.mxu0 0
        %5804 = vmatpush1.bf16.msra.mxu0 %v5705
        %5805 = vmatprep.subr.bf16.mxu0 0
        %5806 = vmatpush1.bf16.msra.mxu0 %v5706
        %5807 = vmatprep.mubr.bf16.mxu0 %v5529
        %5808 = vmatmul.mubr.bf16.gmra.mrb[0].mxu0 %v5401
        %v5809 = vpop.f32.mrb[0].mxu0
        %v5810 = vadd.f32 %v5617, %v5809
        %v5811 = vpop.f32.mrb[0].mxu0
        %v5812 = vpop.f32.mrb[0].mxu0
        %v5813 = vadd.f32 %v5617, %v5812
        %v5814 = vpop.f32.mrb[0].mxu0
        %5815 = vmatprep.mubr.bf16.mxu0 %v5532
        %5816 = vmatmul.mubr.bf16.gmra.mrb[0].mxu0 %v5404
        %v5817 = vpop.f32.mrb[0].mxu0
        %v5818 = vadd.f32 %v5617, %v5817
        %v5819 = vpop.f32.mrb[0].mxu0
        %v5820 = vpop.f32.mrb[0].mxu0
        %v5821 = vadd.f32 %v5617, %v5820
        %v5822 = vpop.f32.mrb[0].mxu0
        %5823 = vmatprep.mubr.bf16.mxu0 %v5535
        %5824 = vmatmul.mubr.bf16.gmra.mrb[0].mxu0 %v5407
        %v5825 = vpop.f32.mrb[0].mxu0
        %v5826 = vadd.f32 %v5617, %v5825
        %v5827 = vpop.f32.mrb[0].mxu0
        %v5828 = vpop.f32.mrb[0].mxu0
        %v5829 = vadd.f32 %v5617, %v5828
        %v5830 = vpop.f32.mrb[0].mxu0
        %5831 = vmatprep.mubr.bf16.mxu0 %v5538
        %5832 = vmatmul.mubr.bf16.gmra.mrb[0].mxu0 %v5410
        %v5833 = vpop.f32.mrb[0].mxu0
        %v5834 = vadd.f32 %v5617, %v5833
        %v5835 = vpop.f32.mrb[0].mxu0
        %v5836 = vpop.f32.mrb[0].mxu0
        %v5837 = vadd.f32 %v5617, %v5836
        %v5838 = vpop.f32.mrb[0].mxu0
        %5839 = vmatprep.mubr.bf16.mxu0 %v5541
        %5840 = vmatmul.mubr.bf16.gmra.mrb[0].mxu0 %v5413
        %v5841 = vpop.f32.mrb[0].mxu0
        %v5842 = vadd.f32 %v5617, %v5841
        %v5843 = vpop.f32.mrb[0].mxu0
        %v5844 = vpop.f32.mrb[0].mxu0
        %v5845 = vadd.f32 %v5617, %v5844
        %v5846 = vpop.f32.mrb[0].mxu0
        %5847 = vmatprep.mubr.bf16.mxu0 %v5544
        %5848 = vmatmul.mubr.bf16.gmra.mrb[0].mxu0 %v5416
        %v5849 = vpop.f32.mrb[0].mxu0
        %v5850 = vadd.f32 %v5617, %v5849
        %v5851 = vpop.f32.mrb[0].mxu0
        %v5852 = vpop.f32.mrb[0].mxu0
        %v5853 = vadd.f32 %v5617, %v5852
        %v5854 = vpop.f32.mrb[0].mxu0
        %5855 = vmatprep.mubr.bf16.mxu0 %v5547
        %5856 = vmatmul.mubr.bf16.gmra.mrb[0].mxu0 %v5419
        %v5857 = vpop.f32.mrb[0].mxu0
        %v5858 = vadd.f32 %v5617, %v5857
        %v5859 = vpop.f32.mrb[0].mxu0
        %v5860 = vpop.f32.mrb[0].mxu0
        %v5861 = vadd.f32 %v5617, %v5860
        %v5862 = vpop.f32.mrb[0].mxu0
        %5863 = vmatprep.mubr.bf16.mxu0 %v5550
        %5864 = vmatmul.mubr.bf16.gmra.mrb[0].mxu0 %v5422
        %v5865 = vpop.f32.mrb[0].mxu0
        %v5866 = vadd.f32 %v5617, %v5865
        %v5867 = vpop.f32.mrb[0].mxu0
        %v5868 = vpop.f32.mrb[0].mxu0
        %v5869 = vadd.f32 %v5617, %v5868
        %v5870 = vpop.f32.mrb[0].mxu0
        %5871 = vmatprep.mubr.bf16.mxu0 %v5553
        %5872 = vmatmul.mubr.bf16.gmra.mrb[0].mxu0 %v5425
        %v5873 = vpop.f32.mrb[0].mxu0
        %v5874 = vadd.f32 %v5617, %v5873
        %v5875 = vpop.f32.mrb[0].mxu0
        %v5876 = vpop.f32.mrb[0].mxu0
        %v5877 = vadd.f32 %v5617, %v5876
        %v5878 = vpop.f32.mrb[0].mxu0
        %5879 = vmatprep.mubr.bf16.mxu0 %v5556
        %5880 = vmatmul.mubr.bf16.gmra.mrb[0].mxu0 %v5428
        %v5881 = vpop.f32.mrb[0].mxu0
        %v5882 = vadd.f32 %v5617, %v5881
        %v5883 = vpop.f32.mrb[0].mxu0
        %v5884 = vpop.f32.mrb[0].mxu0
        %v5885 = vadd.f32 %v5617, %v5884
        %v5886 = vpop.f32.mrb[0].mxu0
        %5887 = vmatprep.mubr.bf16.mxu0 %v5559
        %5888 = vmatmul.mubr.bf16.gmra.mrb[0].mxu0 %v5431
        %v5889 = vpop.f32.mrb[0].mxu0
        %v5890 = vadd.f32 %v5617, %v5889
        %v5891 = vpop.f32.mrb[0].mxu0
        %v5892 = vpop.f32.mrb[0].mxu0
        %v5893 = vadd.f32 %v5617, %v5892
        %v5894 = vpop.f32.mrb[0].mxu0
        %5895 = vmatprep.mubr.bf16.mxu0 %v5562
        %5896 = vmatmul.mubr.bf16.gmra.mrb[0].mxu0 %v5434
        %v5897 = vpop.f32.mrb[0].mxu0
        %v5898 = vadd.f32 %v5617, %v5897
        %v5899 = vpop.f32.mrb[0].mxu0
        %v5900 = vpop.f32.mrb[0].mxu0
        %v5901 = vadd.f32 %v5617, %v5900
        %v5902 = vpop.f32.mrb[0].mxu0
        %5903 = vmatprep.mubr.bf16.mxu0 %v5565
        %5904 = vmatmul.mubr.bf16.gmra.mrb[0].mxu0 %v5437
        %v5905 = vpop.f32.mrb[0].mxu0
        %v5906 = vadd.f32 %v5617, %v5905
        %v5907 = vpop.f32.mrb[0].mxu0
        %v5908 = vpop.f32.mrb[0].mxu0
        %v5909 = vadd.f32 %v5617, %v5908
        %v5910 = vpop.f32.mrb[0].mxu0
        %5911 = vmatprep.mubr.bf16.mxu0 %v5568
        %5912 = vmatmul.mubr.bf16.gmra.mrb[0].mxu0 %v5440
        %v5913 = vpop.f32.mrb[0].mxu0
        %v5914 = vadd.f32 %v5617, %v5913
        %v5915 = vpop.f32.mrb[0].mxu0
        %v5916 = vpop.f32.mrb[0].mxu0
        %v5917 = vadd.f32 %v5617, %v5916
        %v5918 = vpop.f32.mrb[0].mxu0
        %5919 = vmatprep.mubr.bf16.mxu0 %v5571
        %5920 = vmatmul.mubr.bf16.gmra.mrb[0].mxu0 %v5443
        %v5921 = vpop.f32.mrb[0].mxu0
        %v5922 = vadd.f32 %v5617, %v5921
        %v5923 = vpop.f32.mrb[0].mxu0
        %v5924 = vpop.f32.mrb[0].mxu0
        %v5925 = vadd.f32 %v5617, %v5924
        %v5926 = vpop.f32.mrb[0].mxu0
        %5927 = vmatprep.mubr.bf16.mxu0 %v5574
        %5928 = vmatmul.mubr.bf16.gmra.mrb[0].mxu0 %v5446
        %v5929 = vpop.f32.mrb[0].mxu0
        %v5930 = vadd.f32 %v5617, %v5929
        %v5931 = vpop.f32.mrb[0].mxu0
        %v5932 = vpop.f32.mrb[0].mxu0
        %v5933 = vadd.f32 %v5617, %v5932
        %v5934 = vpop.f32.mrb[0].mxu0
        %5935 = vdwg.mxu0
        %5936 = vmatprep.subr.bf16.mxu0 0
        %5937 = vmatpush1.bf16.msra.mxu0 %v5707
        %5938 = vmatprep.subr.bf16.mxu0 0
        %5939 = vmatpush1.bf16.msra.mxu0 %v5708
        %5940 = vmatprep.subr.bf16.mxu0 0
        %5941 = vmatpush1.bf16.msra.mxu0 0
        %5942 = vmatprep.subr.bf16.mxu0 0
        %5943 = vmatpush1.bf16.msra.mxu0 0
        %5944 = vmatprep.subr.bf16.mxu0 0
        %5945 = vmatpush1.bf16.msra.mxu0 0
        %5946 = vmatprep.subr.bf16.mxu0 0
        %5947 = vmatpush1.bf16.msra.mxu0 0
        %5948 = vmatprep.subr.bf16.mxu0 0
        %5949 = vmatpush1.bf16.msra.mxu0 0
        %5950 = vmatprep.subr.bf16.mxu0 0
        %5951 = vmatpush1.bf16.msra.mxu0 0
        %5952 = vmatprep.subr.bf16.mxu0 0
        %5953 = vmatpush1.bf16.msra.mxu0 0
        %5954 = vmatprep.subr.bf16.mxu0 0
        %5955 = vmatpush1.bf16.msra.mxu0 0
        %5956 = vmatprep.subr.bf16.mxu0 0
        %5957 = vmatpush1.bf16.msra.mxu0 0
        %5958 = vmatprep.subr.bf16.mxu0 0
        %5959 = vmatpush1.bf16.msra.mxu0 0
        %5960 = vmatprep.subr.bf16.mxu0 0
        %5961 = vmatpush1.bf16.msra.mxu0 0
        %5962 = vmatprep.subr.bf16.mxu0 0
        %5963 = vmatpush1.bf16.msra.mxu0 0
        %5964 = vmatprep.subr.bf16.mxu0 0
        %5965 = vmatpush1.bf16.msra.mxu0 0
        %5966 = vmatprep.subr.bf16.mxu0 0
        %5967 = vmatpush1.bf16.msra.mxu0 0
        %5968 = vmatprep.mubr.bf16.mxu0 0
        %5969 = vmatmul.mubr.bf16.gmra.mrb[0].mxu0 %v5728
        %v5970 = vpop.f32.mrb[0].mxu0
        %v5971 = vadd.f32 %v5810, %v5970
        %v5972 = vpop.f32.mrb[0].mxu0
        %v5973 = vpop.f32.mrb[0].mxu0
        %v5974 = vadd.f32 %v5813, %v5973
        %v5975 = vpop.f32.mrb[0].mxu0
        %5976 = vmatprep.mubr.bf16.mxu0 0
        %5977 = vmatmul.mubr.bf16.gmra.mrb[0].mxu0 %v5731
        %v5978 = vpop.f32.mrb[0].mxu0
        %v5979 = vadd.f32 %v5818, %v5978
        %v5980 = vpop.f32.mrb[0].mxu0
        %v5981 = vpop.f32.mrb[0].mxu0
        %v5982 = vadd.f32 %v5821, %v5981
        %v5983 = vpop.f32.mrb[0].mxu0
        %5984 = vmatprep.mubr.bf16.mxu0 0
        %5985 = vmatmul.mubr.bf16.gmra.mrb[0].mxu0 %v5734
        %v5986 = vpop.f32.mrb[0].mxu0
        %v5987 = vadd.f32 %v5826, %v5986
        %v5988 = vpop.f32.mrb[0].mxu0
        %v5989 = vpop.f32.mrb[0].mxu0
        %v5990 = vadd.f32 %v5829, %v5989
        %v5991 = vpop.f32.mrb[0].mxu0
        %5992 = vmatprep.mubr.bf16.mxu0 0
        %5993 = vmatmul.mubr.bf16.gmra.mrb[0].mxu0 %v5737
        %v5994 = vpop.f32.mrb[0].mxu0
        %v5995 = vadd.f32 %v5834, %v5994
        %v5996 = vpop.f32.mrb[0].mxu0
        %v5997 = vpop.f32.mrb[0].mxu0
        %v5998 = vadd.f32 %v5837, %v5997
        %v5999 = vpop.f32.mrb[0].mxu0
        %6000 = vmatprep.mubr.bf16.mxu0 0
        %6001 = vmatmul.mubr.bf16.gmra.mrb[0].mxu0 %v5740
        %v6002 = vpop.f32.mrb[0].mxu0
        %v6003 = vadd.f32 %v5842, %v6002
        %v6004 = vpop.f32.mrb[0].mxu0
        %v6005 = vpop.f32.mrb[0].mxu0
        %v6006 = vadd.f32 %v5845, %v6005
        %v6007 = vpop.f32.mrb[0].mxu0
        %6008 = vmatprep.mubr.bf16.mxu0 0
        %6009 = vmatmul.mubr.bf16.gmra.mrb[0].mxu0 %v5743
        %v6010 = vpop.f32.mrb[0].mxu0
        %v6011 = vadd.f32 %v5850, %v6010
        %v6012 = vpop.f32.mrb[0].mxu0
        %v6013 = vpop.f32.mrb[0].mxu0
        %v6014 = vadd.f32 %v5853, %v6013
        %v6015 = vpop.f32.mrb[0].mxu0
        %6016 = vmatprep.mubr.bf16.mxu0 0
        %6017 = vmatmul.mubr.bf16.gmra.mrb[0].mxu0 %v5746
        %v6018 = vpop.f32.mrb[0].mxu0
        %v6019 = vadd.f32 %v5858, %v6018
        %v6020 = vpop.f32.mrb[0].mxu0
        %v6021 = vpop.f32.mrb[0].mxu0
        %v6022 = vadd.f32 %v5861, %v6021
        %v6023 = vpop.f32.mrb[0].mxu0
        %6024 = vmatprep.mubr.bf16.mxu0 0
        %6025 = vmatmul.mubr.bf16.gmra.mrb[0].mxu0 %v5749
        %v6026 = vpop.f32.mrb[0].mxu0
        %v6027 = vadd.f32 %v5866, %v6026
        %v6028 = vpop.f32.mrb[0].mxu0
        %v6029 = vpop.f32.mrb[0].mxu0
        %v6030 = vadd.f32 %v5869, %v6029
        %v6031 = vpop.f32.mrb[0].mxu0
        %6032 = vmatprep.mubr.bf16.mxu0 0
        %6033 = vmatmul.mubr.bf16.gmra.mrb[0].mxu0 %v5752
        %v6034 = vpop.f32.mrb[0].mxu0
        %v6035 = vadd.f32 %v5874, %v6034
        %v6036 = vpop.f32.mrb[0].mxu0
        %v6037 = vpop.f32.mrb[0].mxu0
        %v6038 = vadd.f32 %v5877, %v6037
        %v6039 = vpop.f32.mrb[0].mxu0
        %6040 = vmatprep.mubr.bf16.mxu0 0
        %6041 = vmatmul.mubr.bf16.gmra.mrb[0].mxu0 %v5755
        %v6042 = vpop.f32.mrb[0].mxu0
        %v6043 = vadd.f32 %v5882, %v6042
        %v6044 = vpop.f32.mrb[0].mxu0
        %v6045 = vpop.f32.mrb[0].mxu0
        %v6046 = vadd.f32 %v5885, %v6045
        %v6047 = vpop.f32.mrb[0].mxu0
        %6048 = vmatprep.mubr.bf16.mxu0 0
        %6049 = vmatmul.mubr.bf16.gmra.mrb[0].mxu0 %v5758
        %v6050 = vpop.f32.mrb[0].mxu0
        %v6051 = vadd.f32 %v5890, %v6050
        %v6052 = vpop.f32.mrb[0].mxu0
        %v6053 = vpop.f32.mrb[0].mxu0
        %v6054 = vadd.f32 %v5893, %v6053
        %v6055 = vpop.f32.mrb[0].mxu0
        %6056 = vmatprep.mubr.bf16.mxu0 0
        %6057 = vmatmul.mubr.bf16.gmra.mrb[0].mxu0 %v5761
        %v6058 = vpop.f32.mrb[0].mxu0
        %v6059 = vadd.f32 %v5898, %v6058
        %v6060 = vpop.f32.mrb[0].mxu0
        %v6061 = vpop.f32.mrb[0].mxu0
        %v6062 = vadd.f32 %v5901, %v6061
        %v6063 = vpop.f32.mrb[0].mxu0
        %6064 = vmatprep.mubr.bf16.mxu0 0
        %6065 = vmatmul.mubr.bf16.gmra.mrb[0].mxu0 %v5764
        %v6066 = vpop.f32.mrb[0].mxu0
        %v6067 = vadd.f32 %v5906, %v6066
        %v6068 = vpop.f32.mrb[0].mxu0
        %v6069 = vpop.f32.mrb[0].mxu0
        %v6070 = vadd.f32 %v5909, %v6069
        %v6071 = vpop.f32.mrb[0].mxu0
        %6072 = vmatprep.mubr.bf16.mxu0 0
        %6073 = vmatmul.mubr.bf16.gmra.mrb[0].mxu0 %v5767
        %v6074 = vpop.f32.mrb[0].mxu0
        %v6075 = vadd.f32 %v5914, %v6074
        %v6076 = vpop.f32.mrb[0].mxu0
        %v6077 = vpop.f32.mrb[0].mxu0
        %v6078 = vadd.f32 %v5917, %v6077
        %v6079 = vpop.f32.mrb[0].mxu0
        %6080 = vmatprep.mubr.bf16.mxu0 0
        %6081 = vmatmul.mubr.bf16.gmra.mrb[0].mxu0 %v5770
        %v6082 = vpop.f32.mrb[0].mxu0
        %v6083 = vadd.f32 %v5922, %v6082
        %v6084 = vpop.f32.mrb[0].mxu0
        %v6085 = vpop.f32.mrb[0].mxu0
        %v6086 = vadd.f32 %v5925, %v6085
        %v6087 = vpop.f32.mrb[0].mxu0
        %6088 = vmatprep.mubr.bf16.mxu0 0
        %6089 = vmatmul.mubr.bf16.gmra.mrb[0].mxu0 %v5773
        %v6090 = vpop.f32.mrb[0].mxu0
        %v6091 = vadd.f32 %v5930, %v6090
        %v6092 = vpop.f32.mrb[0].mxu0
        %v6093 = vpop.f32.mrb[0].mxu0
        %v6094 = vadd.f32 %v5933, %v6093
        %v6095 = vpop.f32.mrb[0].mxu0
        %6096 = vdwg.mxu0
        %6097 = vst [vmem:[%s237] sm:$0xff] %v5971
        %6098 = vst [vmem:[%s237 + $0x8] sm:$0xff] %v5974
        %6099 = vst [vmem:[%s237 + $0x10] sm:$0xff] %v5979
        %6100 = vst [vmem:[%s237 + $0x18] sm:$0xff] %v5982
        %6101 = vst [vmem:[%s237 + $0x20] sm:$0xff] %v5987
        %6102 = vst [vmem:[%s237 + $0x28] sm:$0xff] %v5990
        %6103 = vst [vmem:[%s237 + $0x30] sm:$0xff] %v5995
        %6104 = vst [vmem:[%s237 + $0x38] sm:$0xff] %v5998
        %6105 = vst [vmem:[%s237 + $0x40] sm:$0xff] %v6003
        %6106 = vst [vmem:[%s237 + $0x48] sm:$0xff] %v6006
        %6107 = vst [vmem:[%s237 + $0x50] sm:$0xff] %v6011
        %6108 = vst [vmem:[%s237 + $0x58] sm:$0xff] %v6014
        %6109 = vst [vmem:[%s237 + $0x60] sm:$0xff] %v6019
        %6110 = vst [vmem:[%s237 + $0x68] sm:$0xff] %v6022
        %6111 = vst [vmem:[%s237 + $0x70] sm:$0xff] %v6027
        %6112 = vst [vmem:[%s237 + $0x78] sm:$0xff] %v6030
        %6113 = vst [vmem:[%s237 + $0x80] sm:$0xff] %v6035
        %6114 = vst [vmem:[%s237 + $0x88] sm:$0xff] %v6038
        %6115 = vst [vmem:[%s237 + $0x90] sm:$0xff] %v6043
        %6116 = vst [vmem:[%s237 + $0x98] sm:$0xff] %v6046
        %6117 = vst [vmem:[%s237 + $0xa0] sm:$0xff] %v6051
        %6118 = vst [vmem:[%s237 + $0xa8] sm:$0xff] %v6054
        %6119 = vst [vmem:[%s237 + $0xb0] sm:$0xff] %v6059
        %6120 = vst [vmem:[%s237 + $0xb8] sm:$0xff] %v6062
        %6121 = vst [vmem:[%s237 + $0xc0] sm:$0xff] %v6067
        %6122 = vst [vmem:[%s237 + $0xc8] sm:$0xff] %v6070
        %6123 = vst [vmem:[%s237 + $0xd0] sm:$0xff] %v6075
        %6124 = vst [vmem:[%s237 + $0xd8] sm:$0xff] %v6078
        %6125 = vst [vmem:[%s237 + $0xe0] sm:$0xff] %v6083
        %6126 = vst [vmem:[%s237 + $0xe8] sm:$0xff] %v6086
        %6127 = vst [vmem:[%s237 + $0xf0] sm:$0xff] %v6091
        %6128 = vst [vmem:[%s237 + $0xf8] sm:$0xff] %v6094
        %p6129 = scmp.lt.s32.totalorder %s17, 1
        %s6130 = scalar_select %p6129, %s17, 1
        %s6131 = smul.addr %s6130, 32
        %s6132 = smul.addr %s6131, 8
        %s6133 = scalar_lea.vmem %s5, %s6132
        // Predicated region
        $region45: #{regression_model.1} parent=39 // pred_check
          %p6134 = pneg %p145
        $region46: #{regression_model.1} parent=39 // pred_check_branch
          %6136 = sbr.rel (%p6134) target = $region48
        $region47: #{regression_model.1} parent=39 // pred_region
          _
        $region48: #{regression_model.1} parent=39 // pred_fallthru
          _
      $region40: #{regression_model.1} parent=5 // pred_fallthru
        _
      %p6137 = scmp.le.s32.totalorder 2, %s12
      // Predicated region
      $region49: #{regression_model.1} parent=5 // pred_check
        %p6138 = pneg %p6137
      $region50: #{regression_model.1} parent=5 // pred_check_branch
        %6140 = sbr.rel (%p6138) target = $region52
      $region51: #{regression_model.1} parent=5 // pred_region
        %s6141 = ssub.s32 %s12, 2
        // Predicated region
        $region53: #{regression_model.1} parent=51 // pred_check
          %p6142 = pneg %p151
        $region54: #{regression_model.1} parent=51 // pred_check_branch
          %6144 = sbr.rel (%p6142) target = $region56
        $region55: #{regression_model.1} parent=51 // pred_region
          %p6145 = scmp.lt.s32.totalorder %s18, 1
          %s6146 = scalar_select %p6145, %s18, 1
          %s6147 = smul.addr %s6146, 32
          %s6148 = smul.addr %s6147, 8
          %s6149 = scalar_lea.vmem %s5, %s6148
        $region56: #{regression_model.1} parent=51 // pred_fallthru
          _
      $region52: #{regression_model.1} parent=5 // pred_fallthru
        _
    $region6: #{regression_model.1} parent=1 // loop_footer
      %s16 = sadd.s32 1, %s12
    $region7: #{regression_model.1} parent=1 // loop_footer_branch
      %11 = sbr.rel target = $region3
    $region8: #{regression_model.1} parent=1 // loop_exit
      _
    %6150 = vsyncpa [#allocation5], 1
    %s6151 = scalar_lea.sflag [#allocation5], 1
    %6152 = vsyncpa %s6151, 1

</llo_original>
